<compile_context>
chip_gen: v7x
topology: tpu7x:2x2x1
jax: 0.10.0
libtpu: 0.0.40
codegen_flags: <defaults>
</compile_context>

<pallas_src>
import jax
import jax.numpy as jnp
from jax import lax
from jax.experimental import pallas as pl
from jax.experimental.pallas import tpu as pltpu

# ----------------------------- synthetic config -----------------------------
B = 2            # batch
T = 8            # sequence length
E = 128          # char_embed_size
H = 32           # args.nhid
V = 128          # len(chars)  (vocab size)
D = 128          # BERT hidden size
NHEADS = 4
DH = D // NHEADS
F = 256          # BERT FFN size
THRESHOLD = 0.3  # args.cm_threshold
TB = T * B       # flat row count (== B*T)

_VMEM = pl.BlockSpec(memory_space=pltpu.MemorySpace.VMEM)


# ------------------------------ fused kernel --------------------------------
def sancd_kernel(
    ids_ref,        # (TB, 1)  int32, time-major (row = t*B + b)
    mask_ref,       # (B, T)   f32, 1 = valid token
    slab_ref,       # (32, 384) f32 : biases / LN params / positional embed
    emb_ref,        # (2V, E)  bf16 : rows [0:V]=gru embed, [V:2V]=bert tok embed
    wih_ref,        # (E, 12H) bf16 : [W_ih_fwd(zero-padded) | W_ih_bwd(zero-padded)]
    wsm_ref,        # (2H, 384) bf16: [:,0:6H]=block-diag W_hh, [:,256:384]=wc
    wd_ref,         # (D, 896) bf16 : [wqkv(384) | wo(128) | w1(256) | wlm(128)]
    w2_ref,         # (F, D)   bf16
    stat_out_ref,   # (TB, V) f32, batch-major
    bert_out_ref,   # (TB, V) f32, batch-major
    inter_out_ref,  # (TB, D) f32, batch-major
):
    # ---------------- unpack the parameter slab (one DMA) -------------------
    P = slab_ref[...]
    b_ih = P[0:1, :]                       # (1, 12H) fwd|bwd zero-padded
    b_hh = P[1:2, 0:6 * H]                 # (1, 6H) merged layout
    bc   = P[2:3, 0:V]
    bqkv = P[3:4, 0:3 * D]
    bo   = P[4:5, 0:D]
    ln1g = P[5:6, 0:D]
    ln1b = P[6:7, 0:D]
    b1   = P[7:8, 0:F]
    b2   = P[8:9, 0:D]
    ln2g = P[9:10, 0:D]
    ln2b = P[10:11, 0:D]
    blm  = P[11:12, 0:V]
    pos  = P[16:32, 0:D]                   # (TB, D) batch-major positional embed

    # ---------------- BiGRU statistic decoder (merged fwd+bwd) --------------
    ids = ids_ref[...]                                            # (TB, 1) time-major
    iota_v = lax.broadcasted_iota(jnp.int32, (TB, V), 1)
    onehot = (ids == iota_v).astype(jnp.bfloat16)                 # (TB, V)
    x_gru = jnp.dot(onehot, emb_ref[0:V, :],
                    preferred_element_type=jnp.float32)           # (TB, E)
    x_bf = x_gru.astype(jnp.bfloat16)                             # exact (bf16 table)

    # Hoisted input projection: one matmul gives fwd and bwd gate preacts.
    gi_cat = jnp.dot(x_bf, wih_ref[...],
                     preferred_element_type=jnp.float32) + b_ih   # (TB, 12H)
    gi_f = gi_cat[:, 0:6 * H]      # fwd gates live in lanes [0:H,2H:3H,4H:5H]
    gi_b = gi_cat[:, 6 * H:12 * H]  # bwd gates live in lanes [H:2H,3H:4H,5H:6H]

    w_hh = wsm_ref[:, 0:6 * H]     # (2H, 6H) bf16, block-diag merged layout
    wc = wsm_ref[:, 256:384]       # (2H, V)  bf16, [wcf; wcb]

    # Single 8-step recurrence over a (B, 2H) merged hidden state.
    # Gate layout: [r_f r_b | z_f z_b | n_f n_b].
    h = jnp.zeros((B, 2 * H), jnp.float32)
    hs = []
    for s in range(T):
        gi_s = (gi_f[s * B:(s + 1) * B, :]
                + gi_b[(T - 1 - s) * B:(T - s) * B, :])           # (B, 6H)
        gh = jnp.dot(h.astype(jnp.bfloat16), w_hh,
                     preferred_element_type=jnp.float32) + b_hh   # (B, 6H)
        r = jax.nn.sigmoid(gi_s[:, 0:2 * H] + gh[:, 0:2 * H])
        z = jax.nn.sigmoid(gi_s[:, 2 * H:4 * H] + gh[:, 2 * H:4 * H])
        n = jnp.tanh(gi_s[:, 4 * H:6 * H] + r * gh[:, 4 * H:6 * H])
        h = (1.0 - z) * n + z * h
        hs.append(h)

    # Assemble (TB, 2H) directly in BATCH-MAJOR row order (row = b*T + t):
    #   fwd hidden for time t comes from step t, bwd hidden from step T-1-t.
    rows = []
    for b in range(B):
        for t in range(T):
            fwd = hs[t][b:b + 1, 0:H]
            bwd = hs[T - 1 - t][b:b + 1, H:2 * H]
            rows.append(jnp.concatenate([fwd, bwd], axis=1))      # (1, 2H)
    hfb = jnp.concatenate(rows, axis=0)                           # (TB, 2H)

    # Classifier epilogue (single bf16 matmul with the concatenated weight).
    logits = jnp.dot(hfb.astype(jnp.bfloat16), wc,
                     preferred_element_type=jnp.float32) + bc     # (TB, V)
    stat_out_ref[...] = logits

    # ---------------- top-1 + confidence threshold (fused) ------------------
    m = jnp.max(logits, axis=-1, keepdims=True)                   # (TB, 1)
    lse = m + jnp.log(jnp.sum(jnp.exp(logits - m), axis=-1, keepdims=True))
    top1_val = jnp.exp(m - lse)                                   # softmax prob of top-1
    top1_idx = jnp.min(jnp.where(logits == m, iota_v, V),
                       axis=-1, keepdims=True)                    # first argmax
    filt = top1_idx * (top1_val > THRESHOLD).astype(jnp.int32)
    ids_bert = jnp.where(filt == 0, 1, filt)                      # (TB, 1) batch-major

    # ---------------- BERT embedding (one-hot gather, no permute) -----------
    onehot_b = (ids_bert == iota_v).astype(jnp.bfloat16)          # (TB, V)
    x = jnp.dot(onehot_b, emb_ref[V:2 * V, :],
                preferred_element_type=jnp.float32) + pos         # (TB, D)

    # ---------------- 1-layer BERT encoder + masked-LM head -----------------
    qkv = jnp.dot(x.astype(jnp.bfloat16), wd_ref[:, 0:3 * D],
                  preferred_element_type=jnp.float32) + bqkv      # (TB, 3D)
    q = qkv[:, 0:D].reshape(B, T, D)
    k = qkv[:, D:2 * D].reshape(B, T, D)
    v = qkv[:, 2 * D:3 * D].reshape(B, T, D)

    bias = ((mask_ref[...] - 1.0) * 1e9)[:, None, :]              # (B, 1, T)
    scale = 1.0 / (float(DH) ** 0.5)

    ctx_parts = []
    for hd in range(NHEADS):                                      # unrolled heads
        sl = slice(hd * DH, (hd + 1) * DH)
        qh = q[:, :, sl].astype(jnp.bfloat16)
        kh = k[:, :, sl].astype(jnp.bfloat16)
        vh = v[:, :, sl].astype(jnp.bfloat16)
        s = jnp.einsum('bqd,bkd->bqk', qh, kh,
                       preferred_element_type=jnp.float32) * scale + bias
        s = s - jnp.max(s, axis=-1, keepdims=True)
        e = jnp.exp(s)
        a = (e * pl.reciprocal(jnp.sum(e, axis=-1, keepdims=True),
                               approx=True)).astype(jnp.bfloat16)
        ctx_parts.append(jnp.einsum('bqk,bkd->bqd', a, vh,
                                    preferred_element_type=jnp.float32))
    ctx = jnp.concatenate(ctx_parts, axis=-1).reshape(TB, D)
    attn = jnp.dot(ctx.astype(jnp.bfloat16), wd_ref[:, 3 * D:4 * D],
                   preferred_element_type=jnp.float32) + bo       # single Wo matmul

    def layernorm(y, g, b):
        mu = jnp.mean(y, axis=-1, keepdims=True)
        var = jnp.mean((y - mu) ** 2, axis=-1, keepdims=True)
        return (y - mu) * lax.rsqrt(var + 1e-12) * g + b

    h1 = layernorm(x + attn, ln1g, ln1b)                          # (TB, D)
    hfc = jnp.dot(h1.astype(jnp.bfloat16), wd_ref[:, 512:768],
                  preferred_element_type=jnp.float32) + b1        # (TB, F)
    # GELU (tanh approximation)
    hfc = 0.5 * hfc * (1.0 + jnp.tanh(0.7978845608028654
                                      * (hfc + 0.044715 * hfc * hfc * hfc)))
    ff = jnp.dot(hfc.astype(jnp.bfloat16), w2_ref[...],
                 preferred_element_type=jnp.float32) + b2
    h2 = layernorm(h1 + ff, ln2g, ln2b)                           # (TB, D)

    inter_out_ref[...] = h2
    bert_out_ref[...] = jnp.dot(h2.astype(jnp.bfloat16), wd_ref[:, 768:896],
                                preferred_element_type=jnp.float32) + blm


sancd_call = pl.pallas_call(
    sancd_kernel,
    out_shape=(jax.ShapeDtypeStruct((TB, V), jnp.float32),   # statistic logits (batch-major)
               jax.ShapeDtypeStruct((TB, V), jnp.float32),   # LM logits (batch-major)
               jax.ShapeDtypeStruct((TB, D), jnp.float32)),  # intermediate hidden (batch-major)
    in_specs=[_VMEM] * 8,
    out_specs=(_VMEM, _VMEM, _VMEM),
    cost_estimate=pl.CostEstimate(flops=8_500_000,
                                  transcendentals=10_000,
                                  bytes_accessed=600_000),
)


# ------------------------------- parameters ---------------------------------
def init_params(key):
    def nrm(k, shape, scale=0.02):
        return scale * jax.random.normal(k, shape, jnp.float32)

    ks = iter(jax.random.split(key, 24))
    # ----- raw parameters (f32 "checkpoint") -----
    gru_embed = nrm(next(ks), (V, E))
    wf_ih = nrm(next(ks), (E, 3 * H)); wf_hh = nrm(next(ks), (H, 3 * H))
    bf_ih = jnp.zeros((3 * H,), jnp.float32); bf_hh = jnp.zeros((3 * H,), jnp.float32)
    wb_ih = nrm(next(ks), (E, 3 * H)); wb_hh = nrm(next(ks), (H, 3 * H))
    bb_ih = jnp.zeros((3 * H,), jnp.float32); bb_hh = jnp.zeros((3 * H,), jnp.float32)
    wc = nrm(next(ks), (2 * H, V)); bc = jnp.zeros((V,), jnp.float32)
    tok_embed = nrm(next(ks), (V, D))
    pos_tab = nrm(next(ks), (T, D))
    wqkv = nrm(next(ks), (D, 3 * D)); bqkv = jnp.zeros((3 * D,), jnp.float32)
    wo = nrm(next(ks), (D, D)); bo = jnp.zeros((D,), jnp.float32)
    ln1g = jnp.ones((D,), jnp.float32); ln1b = jnp.zeros((D,), jnp.float32)
    w1 = nrm(next(ks), (D, F)); b1 = jnp.zeros((F,), jnp.float32)
    w2 = nrm(next(ks), (F, D)); b2 = jnp.zeros((D,), jnp.float32)
    ln2g = jnp.ones((D,), jnp.float32); ln2b = jnp.zeros((D,), jnp.float32)
    wlm = nrm(next(ks), (D, V)); blm = jnp.zeros((V,), jnp.float32)

    # ----- merged GRU recurrent weight: block-diag (2H, 6H),
    #       gate layout [r_f r_b z_f z_b n_f n_b] -----
    w_hh_m = jnp.zeros((2 * H, 6 * H), jnp.float32)
    b_hh_m = jnp.zeros((6 * H,), jnp.float32)
    for g in range(3):  # r, z, n
        w_hh_m = w_hh_m.at[0:H, (2 * g) * H:(2 * g + 1) * H].set(wf_hh[:, g * H:(g + 1) * H])
        w_hh_m = w_hh_m.at[H:2 * H, (2 * g + 1) * H:(2 * g + 2) * H].set(wb_hh[:, g * H:(g + 1) * H])
        b_hh_m = b_hh_m.at[(2 * g) * H:(2 * g + 1) * H].set(bf_hh[g * H:(g + 1) * H])
        b_hh_m = b_hh_m.at[(2 * g + 1) * H:(2 * g + 2) * H].set(bb_hh[g * H:(g + 1) * H])

    # ----- zero-padded input-projection weights [W_f6 | W_b6] (E, 12H) -----
    w_f6 = jnp.zeros((E, 6 * H), jnp.float32)
    w_b6 = jnp.zeros((E, 6 * H), jnp.float32)
    b_f6 = jnp.zeros((6 * H,), jnp.float32)
    b_b6 = jnp.zeros((6 * H,), jnp.float32)
    for g in range(3):
        w_f6 = w_f6.at[:, (2 * g) * H:(2 * g + 1) * H].set(wf_ih[:, g * H:(g + 1) * H])
        w_b6 = w_b6.at[:, (2 * g + 1) * H:(2 * g + 2) * H].set(wb_ih[:, g * H:(g + 1) * H])
        b_f6 = b_f6.at[(2 * g) * H:(2 * g + 1) * H].set(bf_ih[g * H:(g + 1) * H])
        b_b6 = b_b6.at[(2 * g + 1) * H:(2 * g + 2) * H].set(bb_ih[g * H:(g + 1) * H])
    w_ih_cat = jnp.concatenate([w_f6, w_b6], axis=1).astype(jnp.bfloat16)   # (E, 12H)
    b_ih_cat = jnp.concatenate([b_f6, b_b6], axis=0)                        # (12H,)

    # ----- parameter slab (32, 384) f32: biases / LN params / pos embed -----
    slab = jnp.zeros((32, 384), jnp.float32)
    slab = slab.at[0, :].set(b_ih_cat)
    slab = slab.at[1, 0:6 * H].set(b_hh_m)
    slab = slab.at[2, 0:V].set(bc)
    slab = slab.at[3, 0:3 * D].set(bqkv)
    slab = slab.at[4, 0:D].set(bo)
    slab = slab.at[5, 0:D].set(ln1g)
    slab = slab.at[6, 0:D].set(ln1b)
    slab = slab.at[7, 0:F].set(b1)
    slab = slab.at[8, 0:D].set(b2)
    slab = slab.at[9, 0:D].set(ln2g)
    slab = slab.at[10, 0:D].set(ln2b)
    slab = slab.at[11, 0:V].set(blm)
    pos_bm = jnp.tile(pos_tab, (B, 1))          # (B*T, D), row b*T+t -> pos t
    slab = slab.at[16:32, 0:D].set(pos_bm)

    # ----- small-weight slab (2H, 384): [0:6H]=W_hh merged, [256:384]=wc ----
    # NOTE: wc and W_hh are stored bf16 per perf review (f32 accumulation);
    # near-threshold top-1 probabilities could flip vs. an f32 reference.
    w_small = jnp.zeros((2 * H, 384), jnp.float32)
    w_small = w_small.at[:, 0:6 * H].set(w_hh_m)
    w_small = w_small.at[:, 256:384].set(wc)

    # ----- D-input weight slab (D, 896): [wqkv | wo | w1 | wlm] -------------
    w_d = jnp.concatenate([wqkv, wo, w1, wlm], axis=1)

    return {
        'slab': slab,
        'emb_both': jnp.concatenate([gru_embed, tok_embed], axis=0).astype(jnp.bfloat16),
        'w_ih_cat': w_ih_cat,
        'w_small': w_small.astype(jnp.bfloat16),
        'w_d': w_d.astype(jnp.bfloat16),
        'w2': w2.astype(jnp.bfloat16),
    }


# ------------------------------ forward (glue) -------------------------------
@jax.jit
def sancd_forward(params, x_batch, input_len):
    # time-major flat ids (row t*B + b = x_batch[b, t]) for the GRU recurrence
    ids_tm = jnp.transpose(x_batch).reshape(TB, 1).astype(jnp.int32)
    # attention mask from input_len
    mask = (jnp.arange(T, dtype=jnp.int32)[None, :]
            < input_len[:, None]).astype(jnp.float32)                    # (B, T)

    stat_bm, bert_bm, inter_bm = sancd_call(
        ids_tm, mask,
        params['slab'], params['emb_both'], params['w_ih_cat'],
        params['w_small'], params['w_d'], params['w2'])

    output_statistic = jnp.transpose(stat_bm.reshape(B, T, V), (0, 2, 1))  # (B, V, T)
    output = bert_bm.reshape(B, T, V)
    intermediate_output = inter_bm.reshape(B, T, D)
    return output_statistic, output, intermediate_output


# ----------------------------------- main ------------------------------------
if __name__ == "__main__":
    key = jax.random.PRNGKey(0)
    pkey, xkey = jax.random.split(key)
    params = init_params(pkey)
    x_batch = jax.random.randint(xkey, (B, T), 0, V, dtype=jnp.int32)
    input_len = jnp.array([T, T - 3], dtype=jnp.int32)

    outs = sancd_forward(params, x_batch, input_len)
    jax.block_until_ready(outs)

    o_stat, o_bert, o_inter = outs
    assert o_stat.shape == (B, V, T)
    assert o_bert.shape == (B, T, V)
    assert o_inter.shape == (B, T, D)
    print("KERNEL_OK")
</pallas_src>

<mosaic_0001>
module attributes {stable_mosaic.version = 11 : i64} {
  func.func @sancd_kernel(%arg0: memref<16x1xi32, #tpu.memory_space<vmem>>, %arg1: memref<2x8xf32, #tpu.memory_space<vmem>>, %arg2: memref<32x384xf32, #tpu.memory_space<vmem>>, %arg3: memref<256x128xbf16, #tpu.memory_space<vmem>>, %arg4: memref<128x384xbf16, #tpu.memory_space<vmem>>, %arg5: memref<64x384xbf16, #tpu.memory_space<vmem>>, %arg6: memref<128x896xbf16, #tpu.memory_space<vmem>>, %arg7: memref<256x128xbf16, #tpu.memory_space<vmem>>, %arg8: memref<16x128xf32, #tpu.memory_space<vmem>>, %arg9: memref<16x128xf32, #tpu.memory_space<vmem>>, %arg10: memref<16x128xf32, #tpu.memory_space<vmem>>) attributes {dimension_semantics = [], scalar_prefetch = 0 : i64, scratch_operands = 0 : i64, tpu.core_type = #tpu.core_type<tc>} {
    %c0 = arith.constant 0 : index
    %c0_0 = arith.constant 0 : index
    %0 = vector.load %arg2[%c0, %c0_0] : memref<32x384xf32, #tpu.memory_space<vmem>>, vector<32x384xf32>
    %1 = vector.extract_strided_slice %0 {offsets = [0, 0], sizes = [1, 384], strides = [1, 1]} : vector<32x384xf32> to vector<1x384xf32>
    %2 = vector.extract_strided_slice %0 {offsets = [1, 0], sizes = [1, 192], strides = [1, 1]} : vector<32x384xf32> to vector<1x192xf32>
    %3 = vector.extract_strided_slice %0 {offsets = [2, 0], sizes = [1, 128], strides = [1, 1]} : vector<32x384xf32> to vector<1x128xf32>
    %4 = vector.extract_strided_slice %0 {offsets = [3, 0], sizes = [1, 384], strides = [1, 1]} : vector<32x384xf32> to vector<1x384xf32>
    %5 = vector.extract_strided_slice %0 {offsets = [4, 0], sizes = [1, 128], strides = [1, 1]} : vector<32x384xf32> to vector<1x128xf32>
    %6 = vector.extract_strided_slice %0 {offsets = [5, 0], sizes = [1, 128], strides = [1, 1]} : vector<32x384xf32> to vector<1x128xf32>
    %7 = vector.extract_strided_slice %0 {offsets = [6, 0], sizes = [1, 128], strides = [1, 1]} : vector<32x384xf32> to vector<1x128xf32>
    %8 = vector.extract_strided_slice %0 {offsets = [7, 0], sizes = [1, 256], strides = [1, 1]} : vector<32x384xf32> to vector<1x256xf32>
    %9 = vector.extract_strided_slice %0 {offsets = [8, 0], sizes = [1, 128], strides = [1, 1]} : vector<32x384xf32> to vector<1x128xf32>
    %10 = vector.extract_strided_slice %0 {offsets = [9, 0], sizes = [1, 128], strides = [1, 1]} : vector<32x384xf32> to vector<1x128xf32>
    %11 = vector.extract_strided_slice %0 {offsets = [10, 0], sizes = [1, 128], strides = [1, 1]} : vector<32x384xf32> to vector<1x128xf32>
    %12 = vector.extract_strided_slice %0 {offsets = [11, 0], sizes = [1, 128], strides = [1, 1]} : vector<32x384xf32> to vector<1x128xf32>
    %13 = vector.extract_strided_slice %0 {offsets = [16, 0], sizes = [16, 128], strides = [1, 1]} : vector<32x384xf32> to vector<16x128xf32>
    %c0_1 = arith.constant 0 : index
    %c0_2 = arith.constant 0 : index
    %14 = vector.load %arg0[%c0_1, %c0_2] : memref<16x1xi32, #tpu.memory_space<vmem>>, vector<16x1xi32>
    %15 = tpu.iota {dimensions = array<i32: 1>} : vector<16x128xi32>
    %16 = vector.broadcast %14 : vector<16x1xi32> to vector<16x128xi32>
    %17 = arith.cmpi eq, %16, %15 : vector<16x128xi32>
    %18 = arith.extui %17 : vector<16x128xi1> to vector<16x128xi32>
    %19 = arith.sitofp %18 : vector<16x128xi32> to vector<16x128xf32>
    %20 = arith.truncf %19 : vector<16x128xf32> to vector<16x128xbf16>
    %c0_3 = arith.constant 0 : index
    %c0_4 = arith.constant 0 : index
    %21 = vector.load %arg3[%c0_3, %c0_4] : memref<256x128xbf16, #tpu.memory_space<vmem>>, vector<128x128xbf16>
    %cst = arith.constant dense<0.000000e+00> : vector<16x128xf32>
    %22 = tpu.matmul %20, %21, %cst {dimension_numbers = #tpu.dot_dimension_numbers<[1], [0], [0], [1], [0, 0, 1, 1], [], []>} : vector<16x128xbf16>, vector<128x128xbf16>, vector<16x128xf32> -> vector<16x128xf32>
    %23 = arith.truncf %22 : vector<16x128xf32> to vector<16x128xbf16>
    %c0_5 = arith.constant 0 : index
    %c0_6 = arith.constant 0 : index
    %24 = vector.load %arg4[%c0_5, %c0_6] : memref<128x384xbf16, #tpu.memory_space<vmem>>, vector<128x384xbf16>
    %cst_7 = arith.constant dense<0.000000e+00> : vector<16x384xf32>
    %25 = tpu.matmul %23, %24, %cst_7 {dimension_numbers = #tpu.dot_dimension_numbers<[1], [0], [0], [1], [0, 0, 1, 1], [], []>} : vector<16x128xbf16>, vector<128x384xbf16>, vector<16x384xf32> -> vector<16x384xf32>
    %26 = vector.broadcast %1 : vector<1x384xf32> to vector<16x384xf32>
    %27 = arith.addf %25, %26 : vector<16x384xf32>
    %28 = vector.extract_strided_slice %27 {offsets = [0, 0], sizes = [16, 192], strides = [1, 1]} : vector<16x384xf32> to vector<16x192xf32>
    %29 = vector.extract_strided_slice %27 {offsets = [0, 192], sizes = [16, 192], strides = [1, 1]} : vector<16x384xf32> to vector<16x192xf32>
    %c0_8 = arith.constant 0 : index
    %c0_9 = arith.constant 0 : index
    %30 = vector.load %arg5[%c0_8, %c0_9] : memref<64x384xbf16, #tpu.memory_space<vmem>>, vector<64x192xbf16>
    %c0_10 = arith.constant 0 : index
    %c256 = arith.constant 256 : index
    %31 = vector.load %arg5[%c0_10, %c256] : memref<64x384xbf16, #tpu.memory_space<vmem>>, vector<64x128xbf16>
    %cst_11 = arith.constant 0.000000e+00 : f32
    %32 = vector.broadcast %cst_11 : f32 to vector<2x64xf32>
    %33 = vector.extract_strided_slice %28 {offsets = [0, 0], sizes = [2, 192], strides = [1, 1]} : vector<16x192xf32> to vector<2x192xf32>
    %34 = vector.extract_strided_slice %29 {offsets = [14, 0], sizes = [2, 192], strides = [1, 1]} : vector<16x192xf32> to vector<2x192xf32>
    %35 = arith.addf %33, %34 : vector<2x192xf32>
    %36 = arith.truncf %32 : vector<2x64xf32> to vector<2x64xbf16>
    %cst_12 = arith.constant dense<0.000000e+00> : vector<2x192xf32>
    %37 = tpu.matmul %36, %30, %cst_12 {dimension_numbers = #tpu.dot_dimension_numbers<[1], [0], [0], [1], [0, 0, 1, 1], [], []>} : vector<2x64xbf16>, vector<64x192xbf16>, vector<2x192xf32> -> vector<2x192xf32>
    %38 = vector.broadcast %2 : vector<1x192xf32> to vector<2x192xf32>
    %39 = arith.addf %37, %38 : vector<2x192xf32>
    %40 = vector.extract_strided_slice %35 {offsets = [0, 0], sizes = [2, 64], strides = [1, 1]} : vector<2x192xf32> to vector<2x64xf32>
    %41 = vector.extract_strided_slice %39 {offsets = [0, 0], sizes = [2, 64], strides = [1, 1]} : vector<2x192xf32> to vector<2x64xf32>
    %42 = arith.addf %40, %41 : vector<2x64xf32>
    %43 = arith.negf %42 : vector<2x64xf32>
    %44 = math.exp %43 : vector<2x64xf32>
    %cst_13 = arith.constant 1.000000e+00 : f32
    %45 = vector.broadcast %cst_13 : f32 to vector<2x64xf32>
    %46 = arith.addf %45, %44 : vector<2x64xf32>
    %47 = arith.divf %45, %46 : vector<2x64xf32>
    %48 = vector.extract_strided_slice %35 {offsets = [0, 64], sizes = [2, 64], strides = [1, 1]} : vector<2x192xf32> to vector<2x64xf32>
    %49 = vector.extract_strided_slice %39 {offsets = [0, 64], sizes = [2, 64], strides = [1, 1]} : vector<2x192xf32> to vector<2x64xf32>
    %50 = arith.addf %48, %49 : vector<2x64xf32>
    %51 = arith.negf %50 : vector<2x64xf32>
    %52 = math.exp %51 : vector<2x64xf32>
    %cst_14 = arith.constant 1.000000e+00 : f32
    %53 = vector.broadcast %cst_14 : f32 to vector<2x64xf32>
    %54 = arith.addf %53, %52 : vector<2x64xf32>
    %55 = arith.divf %53, %54 : vector<2x64xf32>
    %56 = vector.extract_strided_slice %35 {offsets = [0, 128], sizes = [2, 64], strides = [1, 1]} : vector<2x192xf32> to vector<2x64xf32>
    %57 = vector.extract_strided_slice %39 {offsets = [0, 128], sizes = [2, 64], strides = [1, 1]} : vector<2x192xf32> to vector<2x64xf32>
    %58 = arith.mulf %47, %57 : vector<2x64xf32>
    %59 = arith.addf %56, %58 : vector<2x64xf32>
    %60 = math.tanh %59 : vector<2x64xf32>
    %cst_15 = arith.constant 1.000000e+00 : f32
    %61 = vector.broadcast %cst_15 : f32 to vector<2x64xf32>
    %62 = arith.subf %61, %55 : vector<2x64xf32>
    %63 = arith.mulf %62, %60 : vector<2x64xf32>
    %64 = arith.mulf %55, %32 : vector<2x64xf32>
    %65 = arith.addf %63, %64 : vector<2x64xf32>
    %66 = vector.extract_strided_slice %28 {offsets = [2, 0], sizes = [2, 192], strides = [1, 1]} : vector<16x192xf32> to vector<2x192xf32>
    %67 = vector.extract_strided_slice %29 {offsets = [12, 0], sizes = [2, 192], strides = [1, 1]} : vector<16x192xf32> to vector<2x192xf32>
    %68 = arith.addf %66, %67 : vector<2x192xf32>
    %69 = arith.truncf %65 : vector<2x64xf32> to vector<2x64xbf16>
    %cst_16 = arith.constant dense<0.000000e+00> : vector<2x192xf32>
    %70 = tpu.matmul %69, %30, %cst_16 {dimension_numbers = #tpu.dot_dimension_numbers<[1], [0], [0], [1], [0, 0, 1, 1], [], []>} : vector<2x64xbf16>, vector<64x192xbf16>, vector<2x192xf32> -> vector<2x192xf32>
    %71 = vector.broadcast %2 : vector<1x192xf32> to vector<2x192xf32>
    %72 = arith.addf %70, %71 : vector<2x192xf32>
    %73 = vector.extract_strided_slice %68 {offsets = [0, 0], sizes = [2, 64], strides = [1, 1]} : vector<2x192xf32> to vector<2x64xf32>
    %74 = vector.extract_strided_slice %72 {offsets = [0, 0], sizes = [2, 64], strides = [1, 1]} : vector<2x192xf32> to vector<2x64xf32>
    %75 = arith.addf %73, %74 : vector<2x64xf32>
    %76 = arith.negf %75 : vector<2x64xf32>
    %77 = math.exp %76 : vector<2x64xf32>
    %cst_17 = arith.constant 1.000000e+00 : f32
    %78 = vector.broadcast %cst_17 : f32 to vector<2x64xf32>
    %79 = arith.addf %78, %77 : vector<2x64xf32>
    %80 = arith.divf %78, %79 : vector<2x64xf32>
    %81 = vector.extract_strided_slice %68 {offsets = [0, 64], sizes = [2, 64], strides = [1, 1]} : vector<2x192xf32> to vector<2x64xf32>
    %82 = vector.extract_strided_slice %72 {offsets = [0, 64], sizes = [2, 64], strides = [1, 1]} : vector<2x192xf32> to vector<2x64xf32>
    %83 = arith.addf %81, %82 : vector<2x64xf32>
    %84 = arith.negf %83 : vector<2x64xf32>
    %85 = math.exp %84 : vector<2x64xf32>
    %cst_18 = arith.constant 1.000000e+00 : f32
    %86 = vector.broadcast %cst_18 : f32 to vector<2x64xf32>
    %87 = arith.addf %86, %85 : vector<2x64xf32>
    %88 = arith.divf %86, %87 : vector<2x64xf32>
    %89 = vector.extract_strided_slice %68 {offsets = [0, 128], sizes = [2, 64], strides = [1, 1]} : vector<2x192xf32> to vector<2x64xf32>
    %90 = vector.extract_strided_slice %72 {offsets = [0, 128], sizes = [2, 64], strides = [1, 1]} : vector<2x192xf32> to vector<2x64xf32>
    %91 = arith.mulf %80, %90 : vector<2x64xf32>
    %92 = arith.addf %89, %91 : vector<2x64xf32>
    %93 = math.tanh %92 : vector<2x64xf32>
    %cst_19 = arith.constant 1.000000e+00 : f32
    %94 = vector.broadcast %cst_19 : f32 to vector<2x64xf32>
    %95 = arith.subf %94, %88 : vector<2x64xf32>
    %96 = arith.mulf %95, %93 : vector<2x64xf32>
    %97 = arith.mulf %88, %65 : vector<2x64xf32>
    %98 = arith.addf %96, %97 : vector<2x64xf32>
    %99 = vector.extract_strided_slice %28 {offsets = [4, 0], sizes = [2, 192], strides = [1, 1]} : vector<16x192xf32> to vector<2x192xf32>
    %100 = vector.extract_strided_slice %29 {offsets = [10, 0], sizes = [2, 192], strides = [1, 1]} : vector<16x192xf32> to vector<2x192xf32>
    %101 = arith.addf %99, %100 : vector<2x192xf32>
    %102 = arith.truncf %98 : vector<2x64xf32> to vector<2x64xbf16>
    %cst_20 = arith.constant dense<0.000000e+00> : vector<2x192xf32>
    %103 = tpu.matmul %102, %30, %cst_20 {dimension_numbers = #tpu.dot_dimension_numbers<[1], [0], [0], [1], [0, 0, 1, 1], [], []>} : vector<2x64xbf16>, vector<64x192xbf16>, vector<2x192xf32> -> vector<2x192xf32>
    %104 = vector.broadcast %2 : vector<1x192xf32> to vector<2x192xf32>
    %105 = arith.addf %103, %104 : vector<2x192xf32>
    %106 = vector.extract_strided_slice %101 {offsets = [0, 0], sizes = [2, 64], strides = [1, 1]} : vector<2x192xf32> to vector<2x64xf32>
    %107 = vector.extract_strided_slice %105 {offsets = [0, 0], sizes = [2, 64], strides = [1, 1]} : vector<2x192xf32> to vector<2x64xf32>
    %108 = arith.addf %106, %107 : vector<2x64xf32>
    %109 = arith.negf %108 : vector<2x64xf32>
    %110 = math.exp %109 : vector<2x64xf32>
    %cst_21 = arith.constant 1.000000e+00 : f32
    %111 = vector.broadcast %cst_21 : f32 to vector<2x64xf32>
    %112 = arith.addf %111, %110 : vector<2x64xf32>
    %113 = arith.divf %111, %112 : vector<2x64xf32>
    %114 = vector.extract_strided_slice %101 {offsets = [0, 64], sizes = [2, 64], strides = [1, 1]} : vector<2x192xf32> to vector<2x64xf32>
    %115 = vector.extract_strided_slice %105 {offsets = [0, 64], sizes = [2, 64], strides = [1, 1]} : vector<2x192xf32> to vector<2x64xf32>
    %116 = arith.addf %114, %115 : vector<2x64xf32>
    %117 = arith.negf %116 : vector<2x64xf32>
    %118 = math.exp %117 : vector<2x64xf32>
    %cst_22 = arith.constant 1.000000e+00 : f32
    %119 = vector.broadcast %cst_22 : f32 to vector<2x64xf32>
    %120 = arith.addf %119, %118 : vector<2x64xf32>
    %121 = arith.divf %119, %120 : vector<2x64xf32>
    %122 = vector.extract_strided_slice %101 {offsets = [0, 128], sizes = [2, 64], strides = [1, 1]} : vector<2x192xf32> to vector<2x64xf32>
    %123 = vector.extract_strided_slice %105 {offsets = [0, 128], sizes = [2, 64], strides = [1, 1]} : vector<2x192xf32> to vector<2x64xf32>
    %124 = arith.mulf %113, %123 : vector<2x64xf32>
    %125 = arith.addf %122, %124 : vector<2x64xf32>
    %126 = math.tanh %125 : vector<2x64xf32>
    %cst_23 = arith.constant 1.000000e+00 : f32
    %127 = vector.broadcast %cst_23 : f32 to vector<2x64xf32>
    %128 = arith.subf %127, %121 : vector<2x64xf32>
    %129 = arith.mulf %128, %126 : vector<2x64xf32>
    %130 = arith.mulf %121, %98 : vector<2x64xf32>
    %131 = arith.addf %129, %130 : vector<2x64xf32>
    %132 = vector.extract_strided_slice %28 {offsets = [6, 0], sizes = [2, 192], strides = [1, 1]} : vector<16x192xf32> to vector<2x192xf32>
    %133 = vector.extract_strided_slice %29 {offsets = [8, 0], sizes = [2, 192], strides = [1, 1]} : vector<16x192xf32> to vector<2x192xf32>
    %134 = arith.addf %132, %133 : vector<2x192xf32>
    %135 = arith.truncf %131 : vector<2x64xf32> to vector<2x64xbf16>
    %cst_24 = arith.constant dense<0.000000e+00> : vector<2x192xf32>
    %136 = tpu.matmul %135, %30, %cst_24 {dimension_numbers = #tpu.dot_dimension_numbers<[1], [0], [0], [1], [0, 0, 1, 1], [], []>} : vector<2x64xbf16>, vector<64x192xbf16>, vector<2x192xf32> -> vector<2x192xf32>
    %137 = vector.broadcast %2 : vector<1x192xf32> to vector<2x192xf32>
    %138 = arith.addf %136, %137 : vector<2x192xf32>
    %139 = vector.extract_strided_slice %134 {offsets = [0, 0], sizes = [2, 64], strides = [1, 1]} : vector<2x192xf32> to vector<2x64xf32>
    %140 = vector.extract_strided_slice %138 {offsets = [0, 0], sizes = [2, 64], strides = [1, 1]} : vector<2x192xf32> to vector<2x64xf32>
    %141 = arith.addf %139, %140 : vector<2x64xf32>
    %142 = arith.negf %141 : vector<2x64xf32>
    %143 = math.exp %142 : vector<2x64xf32>
    %cst_25 = arith.constant 1.000000e+00 : f32
    %144 = vector.broadcast %cst_25 : f32 to vector<2x64xf32>
    %145 = arith.addf %144, %143 : vector<2x64xf32>
    %146 = arith.divf %144, %145 : vector<2x64xf32>
    %147 = vector.extract_strided_slice %134 {offsets = [0, 64], sizes = [2, 64], strides = [1, 1]} : vector<2x192xf32> to vector<2x64xf32>
    %148 = vector.extract_strided_slice %138 {offsets = [0, 64], sizes = [2, 64], strides = [1, 1]} : vector<2x192xf32> to vector<2x64xf32>
    %149 = arith.addf %147, %148 : vector<2x64xf32>
    %150 = arith.negf %149 : vector<2x64xf32>
    %151 = math.exp %150 : vector<2x64xf32>
    %cst_26 = arith.constant 1.000000e+00 : f32
    %152 = vector.broadcast %cst_26 : f32 to vector<2x64xf32>
    %153 = arith.addf %152, %151 : vector<2x64xf32>
    %154 = arith.divf %152, %153 : vector<2x64xf32>
    %155 = vector.extract_strided_slice %134 {offsets = [0, 128], sizes = [2, 64], strides = [1, 1]} : vector<2x192xf32> to vector<2x64xf32>
    %156 = vector.extract_strided_slice %138 {offsets = [0, 128], sizes = [2, 64], strides = [1, 1]} : vector<2x192xf32> to vector<2x64xf32>
    %157 = arith.mulf %146, %156 : vector<2x64xf32>
    %158 = arith.addf %155, %157 : vector<2x64xf32>
    %159 = math.tanh %158 : vector<2x64xf32>
    %cst_27 = arith.constant 1.000000e+00 : f32
    %160 = vector.broadcast %cst_27 : f32 to vector<2x64xf32>
    %161 = arith.subf %160, %154 : vector<2x64xf32>
    %162 = arith.mulf %161, %159 : vector<2x64xf32>
    %163 = arith.mulf %154, %131 : vector<2x64xf32>
    %164 = arith.addf %162, %163 : vector<2x64xf32>
    %165 = vector.extract_strided_slice %28 {offsets = [8, 0], sizes = [2, 192], strides = [1, 1]} : vector<16x192xf32> to vector<2x192xf32>
    %166 = vector.extract_strided_slice %29 {offsets = [6, 0], sizes = [2, 192], strides = [1, 1]} : vector<16x192xf32> to vector<2x192xf32>
    %167 = arith.addf %165, %166 : vector<2x192xf32>
    %168 = arith.truncf %164 : vector<2x64xf32> to vector<2x64xbf16>
    %cst_28 = arith.constant dense<0.000000e+00> : vector<2x192xf32>
    %169 = tpu.matmul %168, %30, %cst_28 {dimension_numbers = #tpu.dot_dimension_numbers<[1], [0], [0], [1], [0, 0, 1, 1], [], []>} : vector<2x64xbf16>, vector<64x192xbf16>, vector<2x192xf32> -> vector<2x192xf32>
    %170 = vector.broadcast %2 : vector<1x192xf32> to vector<2x192xf32>
    %171 = arith.addf %169, %170 : vector<2x192xf32>
    %172 = vector.extract_strided_slice %167 {offsets = [0, 0], sizes = [2, 64], strides = [1, 1]} : vector<2x192xf32> to vector<2x64xf32>
    %173 = vector.extract_strided_slice %171 {offsets = [0, 0], sizes = [2, 64], strides = [1, 1]} : vector<2x192xf32> to vector<2x64xf32>
    %174 = arith.addf %172, %173 : vector<2x64xf32>
    %175 = arith.negf %174 : vector<2x64xf32>
    %176 = math.exp %175 : vector<2x64xf32>
    %cst_29 = arith.constant 1.000000e+00 : f32
    %177 = vector.broadcast %cst_29 : f32 to vector<2x64xf32>
    %178 = arith.addf %177, %176 : vector<2x64xf32>
    %179 = arith.divf %177, %178 : vector<2x64xf32>
    %180 = vector.extract_strided_slice %167 {offsets = [0, 64], sizes = [2, 64], strides = [1, 1]} : vector<2x192xf32> to vector<2x64xf32>
    %181 = vector.extract_strided_slice %171 {offsets = [0, 64], sizes = [2, 64], strides = [1, 1]} : vector<2x192xf32> to vector<2x64xf32>
    %182 = arith.addf %180, %181 : vector<2x64xf32>
    %183 = arith.negf %182 : vector<2x64xf32>
    %184 = math.exp %183 : vector<2x64xf32>
    %cst_30 = arith.constant 1.000000e+00 : f32
    %185 = vector.broadcast %cst_30 : f32 to vector<2x64xf32>
    %186 = arith.addf %185, %184 : vector<2x64xf32>
    %187 = arith.divf %185, %186 : vector<2x64xf32>
    %188 = vector.extract_strided_slice %167 {offsets = [0, 128], sizes = [2, 64], strides = [1, 1]} : vector<2x192xf32> to vector<2x64xf32>
    %189 = vector.extract_strided_slice %171 {offsets = [0, 128], sizes = [2, 64], strides = [1, 1]} : vector<2x192xf32> to vector<2x64xf32>
    %190 = arith.mulf %179, %189 : vector<2x64xf32>
    %191 = arith.addf %188, %190 : vector<2x64xf32>
    %192 = math.tanh %191 : vector<2x64xf32>
    %cst_31 = arith.constant 1.000000e+00 : f32
    %193 = vector.broadcast %cst_31 : f32 to vector<2x64xf32>
    %194 = arith.subf %193, %187 : vector<2x64xf32>
    %195 = arith.mulf %194, %192 : vector<2x64xf32>
    %196 = arith.mulf %187, %164 : vector<2x64xf32>
    %197 = arith.addf %195, %196 : vector<2x64xf32>
    %198 = vector.extract_strided_slice %28 {offsets = [10, 0], sizes = [2, 192], strides = [1, 1]} : vector<16x192xf32> to vector<2x192xf32>
    %199 = vector.extract_strided_slice %29 {offsets = [4, 0], sizes = [2, 192], strides = [1, 1]} : vector<16x192xf32> to vector<2x192xf32>
    %200 = arith.addf %198, %199 : vector<2x192xf32>
    %201 = arith.truncf %197 : vector<2x64xf32> to vector<2x64xbf16>
    %cst_32 = arith.constant dense<0.000000e+00> : vector<2x192xf32>
    %202 = tpu.matmul %201, %30, %cst_32 {dimension_numbers = #tpu.dot_dimension_numbers<[1], [0], [0], [1], [0, 0, 1, 1], [], []>} : vector<2x64xbf16>, vector<64x192xbf16>, vector<2x192xf32> -> vector<2x192xf32>
    %203 = vector.broadcast %2 : vector<1x192xf32> to vector<2x192xf32>
    %204 = arith.addf %202, %203 : vector<2x192xf32>
    %205 = vector.extract_strided_slice %200 {offsets = [0, 0], sizes = [2, 64], strides = [1, 1]} : vector<2x192xf32> to vector<2x64xf32>
    %206 = vector.extract_strided_slice %204 {offsets = [0, 0], sizes = [2, 64], strides = [1, 1]} : vector<2x192xf32> to vector<2x64xf32>
    %207 = arith.addf %205, %206 : vector<2x64xf32>
    %208 = arith.negf %207 : vector<2x64xf32>
    %209 = math.exp %208 : vector<2x64xf32>
    %cst_33 = arith.constant 1.000000e+00 : f32
    %210 = vector.broadcast %cst_33 : f32 to vector<2x64xf32>
    %211 = arith.addf %210, %209 : vector<2x64xf32>
    %212 = arith.divf %210, %211 : vector<2x64xf32>
    %213 = vector.extract_strided_slice %200 {offsets = [0, 64], sizes = [2, 64], strides = [1, 1]} : vector<2x192xf32> to vector<2x64xf32>
    %214 = vector.extract_strided_slice %204 {offsets = [0, 64], sizes = [2, 64], strides = [1, 1]} : vector<2x192xf32> to vector<2x64xf32>
    %215 = arith.addf %213, %214 : vector<2x64xf32>
    %216 = arith.negf %215 : vector<2x64xf32>
    %217 = math.exp %216 : vector<2x64xf32>
    %cst_34 = arith.constant 1.000000e+00 : f32
    %218 = vector.broadcast %cst_34 : f32 to vector<2x64xf32>
    %219 = arith.addf %218, %217 : vector<2x64xf32>
    %220 = arith.divf %218, %219 : vector<2x64xf32>
    %221 = vector.extract_strided_slice %200 {offsets = [0, 128], sizes = [2, 64], strides = [1, 1]} : vector<2x192xf32> to vector<2x64xf32>
    %222 = vector.extract_strided_slice %204 {offsets = [0, 128], sizes = [2, 64], strides = [1, 1]} : vector<2x192xf32> to vector<2x64xf32>
    %223 = arith.mulf %212, %222 : vector<2x64xf32>
    %224 = arith.addf %221, %223 : vector<2x64xf32>
    %225 = math.tanh %224 : vector<2x64xf32>
    %cst_35 = arith.constant 1.000000e+00 : f32
    %226 = vector.broadcast %cst_35 : f32 to vector<2x64xf32>
    %227 = arith.subf %226, %220 : vector<2x64xf32>
    %228 = arith.mulf %227, %225 : vector<2x64xf32>
    %229 = arith.mulf %220, %197 : vector<2x64xf32>
    %230 = arith.addf %228, %229 : vector<2x64xf32>
    %231 = vector.extract_strided_slice %28 {offsets = [12, 0], sizes = [2, 192], strides = [1, 1]} : vector<16x192xf32> to vector<2x192xf32>
    %232 = vector.extract_strided_slice %29 {offsets = [2, 0], sizes = [2, 192], strides = [1, 1]} : vector<16x192xf32> to vector<2x192xf32>
    %233 = arith.addf %231, %232 : vector<2x192xf32>
    %234 = arith.truncf %230 : vector<2x64xf32> to vector<2x64xbf16>
    %cst_36 = arith.constant dense<0.000000e+00> : vector<2x192xf32>
    %235 = tpu.matmul %234, %30, %cst_36 {dimension_numbers = #tpu.dot_dimension_numbers<[1], [0], [0], [1], [0, 0, 1, 1], [], []>} : vector<2x64xbf16>, vector<64x192xbf16>, vector<2x192xf32> -> vector<2x192xf32>
    %236 = vector.broadcast %2 : vector<1x192xf32> to vector<2x192xf32>
    %237 = arith.addf %235, %236 : vector<2x192xf32>
    %238 = vector.extract_strided_slice %233 {offsets = [0, 0], sizes = [2, 64], strides = [1, 1]} : vector<2x192xf32> to vector<2x64xf32>
    %239 = vector.extract_strided_slice %237 {offsets = [0, 0], sizes = [2, 64], strides = [1, 1]} : vector<2x192xf32> to vector<2x64xf32>
    %240 = arith.addf %238, %239 : vector<2x64xf32>
    %241 = arith.negf %240 : vector<2x64xf32>
    %242 = math.exp %241 : vector<2x64xf32>
    %cst_37 = arith.constant 1.000000e+00 : f32
    %243 = vector.broadcast %cst_37 : f32 to vector<2x64xf32>
    %244 = arith.addf %243, %242 : vector<2x64xf32>
    %245 = arith.divf %243, %244 : vector<2x64xf32>
    %246 = vector.extract_strided_slice %233 {offsets = [0, 64], sizes = [2, 64], strides = [1, 1]} : vector<2x192xf32> to vector<2x64xf32>
    %247 = vector.extract_strided_slice %237 {offsets = [0, 64], sizes = [2, 64], strides = [1, 1]} : vector<2x192xf32> to vector<2x64xf32>
    %248 = arith.addf %246, %247 : vector<2x64xf32>
    %249 = arith.negf %248 : vector<2x64xf32>
    %250 = math.exp %249 : vector<2x64xf32>
    %cst_38 = arith.constant 1.000000e+00 : f32
    %251 = vector.broadcast %cst_38 : f32 to vector<2x64xf32>
    %252 = arith.addf %251, %250 : vector<2x64xf32>
    %253 = arith.divf %251, %252 : vector<2x64xf32>
    %254 = vector.extract_strided_slice %233 {offsets = [0, 128], sizes = [2, 64], strides = [1, 1]} : vector<2x192xf32> to vector<2x64xf32>
    %255 = vector.extract_strided_slice %237 {offsets = [0, 128], sizes = [2, 64], strides = [1, 1]} : vector<2x192xf32> to vector<2x64xf32>
    %256 = arith.mulf %245, %255 : vector<2x64xf32>
    %257 = arith.addf %254, %256 : vector<2x64xf32>
    %258 = math.tanh %257 : vector<2x64xf32>
    %cst_39 = arith.constant 1.000000e+00 : f32
    %259 = vector.broadcast %cst_39 : f32 to vector<2x64xf32>
    %260 = arith.subf %259, %253 : vector<2x64xf32>
    %261 = arith.mulf %260, %258 : vector<2x64xf32>
    %262 = arith.mulf %253, %230 : vector<2x64xf32>
    %263 = arith.addf %261, %262 : vector<2x64xf32>
    %264 = vector.extract_strided_slice %28 {offsets = [14, 0], sizes = [2, 192], strides = [1, 1]} : vector<16x192xf32> to vector<2x192xf32>
    %265 = vector.extract_strided_slice %29 {offsets = [0, 0], sizes = [2, 192], strides = [1, 1]} : vector<16x192xf32> to vector<2x192xf32>
    %266 = arith.addf %264, %265 : vector<2x192xf32>
    %267 = arith.truncf %263 : vector<2x64xf32> to vector<2x64xbf16>
    %cst_40 = arith.constant dense<0.000000e+00> : vector<2x192xf32>
    %268 = tpu.matmul %267, %30, %cst_40 {dimension_numbers = #tpu.dot_dimension_numbers<[1], [0], [0], [1], [0, 0, 1, 1], [], []>} : vector<2x64xbf16>, vector<64x192xbf16>, vector<2x192xf32> -> vector<2x192xf32>
    %269 = vector.broadcast %2 : vector<1x192xf32> to vector<2x192xf32>
    %270 = arith.addf %268, %269 : vector<2x192xf32>
    %271 = vector.extract_strided_slice %266 {offsets = [0, 0], sizes = [2, 64], strides = [1, 1]} : vector<2x192xf32> to vector<2x64xf32>
    %272 = vector.extract_strided_slice %270 {offsets = [0, 0], sizes = [2, 64], strides = [1, 1]} : vector<2x192xf32> to vector<2x64xf32>
    %273 = arith.addf %271, %272 : vector<2x64xf32>
    %274 = arith.negf %273 : vector<2x64xf32>
    %275 = math.exp %274 : vector<2x64xf32>
    %cst_41 = arith.constant 1.000000e+00 : f32
    %276 = vector.broadcast %cst_41 : f32 to vector<2x64xf32>
    %277 = arith.addf %276, %275 : vector<2x64xf32>
    %278 = arith.divf %276, %277 : vector<2x64xf32>
    %279 = vector.extract_strided_slice %266 {offsets = [0, 64], sizes = [2, 64], strides = [1, 1]} : vector<2x192xf32> to vector<2x64xf32>
    %280 = vector.extract_strided_slice %270 {offsets = [0, 64], sizes = [2, 64], strides = [1, 1]} : vector<2x192xf32> to vector<2x64xf32>
    %281 = arith.addf %279, %280 : vector<2x64xf32>
    %282 = arith.negf %281 : vector<2x64xf32>
    %283 = math.exp %282 : vector<2x64xf32>
    %cst_42 = arith.constant 1.000000e+00 : f32
    %284 = vector.broadcast %cst_42 : f32 to vector<2x64xf32>
    %285 = arith.addf %284, %283 : vector<2x64xf32>
    %286 = arith.divf %284, %285 : vector<2x64xf32>
    %287 = vector.extract_strided_slice %266 {offsets = [0, 128], sizes = [2, 64], strides = [1, 1]} : vector<2x192xf32> to vector<2x64xf32>
    %288 = vector.extract_strided_slice %270 {offsets = [0, 128], sizes = [2, 64], strides = [1, 1]} : vector<2x192xf32> to vector<2x64xf32>
    %289 = arith.mulf %278, %288 : vector<2x64xf32>
    %290 = arith.addf %287, %289 : vector<2x64xf32>
    %291 = math.tanh %290 : vector<2x64xf32>
    %cst_43 = arith.constant 1.000000e+00 : f32
    %292 = vector.broadcast %cst_43 : f32 to vector<2x64xf32>
    %293 = arith.subf %292, %286 : vector<2x64xf32>
    %294 = arith.mulf %293, %291 : vector<2x64xf32>
    %295 = arith.mulf %286, %263 : vector<2x64xf32>
    %296 = arith.addf %294, %295 : vector<2x64xf32>
    %297 = vector.extract_strided_slice %65 {offsets = [0, 0], sizes = [1, 32], strides = [1, 1]} : vector<2x64xf32> to vector<1x32xf32>
    %298 = vector.extract_strided_slice %296 {offsets = [0, 32], sizes = [1, 32], strides = [1, 1]} : vector<2x64xf32> to vector<1x32xf32>
    %299 = tpu.concatenate %297, %298 in 1 : vector<1x32xf32>, vector<1x32xf32> -> vector<1x64xf32>
    %300 = vector.extract_strided_slice %98 {offsets = [0, 0], sizes = [1, 32], strides = [1, 1]} : vector<2x64xf32> to vector<1x32xf32>
    %301 = vector.extract_strided_slice %263 {offsets = [0, 32], sizes = [1, 32], strides = [1, 1]} : vector<2x64xf32> to vector<1x32xf32>
    %302 = tpu.concatenate %300, %301 in 1 : vector<1x32xf32>, vector<1x32xf32> -> vector<1x64xf32>
    %303 = vector.extract_strided_slice %131 {offsets = [0, 0], sizes = [1, 32], strides = [1, 1]} : vector<2x64xf32> to vector<1x32xf32>
    %304 = vector.extract_strided_slice %230 {offsets = [0, 32], sizes = [1, 32], strides = [1, 1]} : vector<2x64xf32> to vector<1x32xf32>
    %305 = tpu.concatenate %303, %304 in 1 : vector<1x32xf32>, vector<1x32xf32> -> vector<1x64xf32>
    %306 = vector.extract_strided_slice %164 {offsets = [0, 0], sizes = [1, 32], strides = [1, 1]} : vector<2x64xf32> to vector<1x32xf32>
    %307 = vector.extract_strided_slice %197 {offsets = [0, 32], sizes = [1, 32], strides = [1, 1]} : vector<2x64xf32> to vector<1x32xf32>
    %308 = tpu.concatenate %306, %307 in 1 : vector<1x32xf32>, vector<1x32xf32> -> vector<1x64xf32>
    %309 = vector.extract_strided_slice %197 {offsets = [0, 0], sizes = [1, 32], strides = [1, 1]} : vector<2x64xf32> to vector<1x32xf32>
    %310 = vector.extract_strided_slice %164 {offsets = [0, 32], sizes = [1, 32], strides = [1, 1]} : vector<2x64xf32> to vector<1x32xf32>
    %311 = tpu.concatenate %309, %310 in 1 : vector<1x32xf32>, vector<1x32xf32> -> vector<1x64xf32>
    %312 = vector.extract_strided_slice %230 {offsets = [0, 0], sizes = [1, 32], strides = [1, 1]} : vector<2x64xf32> to vector<1x32xf32>
    %313 = vector.extract_strided_slice %131 {offsets = [0, 32], sizes = [1, 32], strides = [1, 1]} : vector<2x64xf32> to vector<1x32xf32>
    %314 = tpu.concatenate %312, %313 in 1 : vector<1x32xf32>, vector<1x32xf32> -> vector<1x64xf32>
    %315 = vector.extract_strided_slice %263 {offsets = [0, 0], sizes = [1, 32], strides = [1, 1]} : vector<2x64xf32> to vector<1x32xf32>
    %316 = vector.extract_strided_slice %98 {offsets = [0, 32], sizes = [1, 32], strides = [1, 1]} : vector<2x64xf32> to vector<1x32xf32>
    %317 = tpu.concatenate %315, %316 in 1 : vector<1x32xf32>, vector<1x32xf32> -> vector<1x64xf32>
    %318 = vector.extract_strided_slice %296 {offsets = [0, 0], sizes = [1, 32], strides = [1, 1]} : vector<2x64xf32> to vector<1x32xf32>
    %319 = vector.extract_strided_slice %65 {offsets = [0, 32], sizes = [1, 32], strides = [1, 1]} : vector<2x64xf32> to vector<1x32xf32>
    %320 = tpu.concatenate %318, %319 in 1 : vector<1x32xf32>, vector<1x32xf32> -> vector<1x64xf32>
    %321 = vector.extract_strided_slice %65 {offsets = [1, 0], sizes = [1, 32], strides = [1, 1]} : vector<2x64xf32> to vector<1x32xf32>
    %322 = vector.extract_strided_slice %296 {offsets = [1, 32], sizes = [1, 32], strides = [1, 1]} : vector<2x64xf32> to vector<1x32xf32>
    %323 = tpu.concatenate %321, %322 in 1 : vector<1x32xf32>, vector<1x32xf32> -> vector<1x64xf32>
    %324 = vector.extract_strided_slice %98 {offsets = [1, 0], sizes = [1, 32], strides = [1, 1]} : vector<2x64xf32> to vector<1x32xf32>
    %325 = vector.extract_strided_slice %263 {offsets = [1, 32], sizes = [1, 32], strides = [1, 1]} : vector<2x64xf32> to vector<1x32xf32>
    %326 = tpu.concatenate %324, %325 in 1 : vector<1x32xf32>, vector<1x32xf32> -> vector<1x64xf32>
    %327 = vector.extract_strided_slice %131 {offsets = [1, 0], sizes = [1, 32], strides = [1, 1]} : vector<2x64xf32> to vector<1x32xf32>
    %328 = vector.extract_strided_slice %230 {offsets = [1, 32], sizes = [1, 32], strides = [1, 1]} : vector<2x64xf32> to vector<1x32xf32>
    %329 = tpu.concatenate %327, %328 in 1 : vector<1x32xf32>, vector<1x32xf32> -> vector<1x64xf32>
    %330 = vector.extract_strided_slice %164 {offsets = [1, 0], sizes = [1, 32], strides = [1, 1]} : vector<2x64xf32> to vector<1x32xf32>
    %331 = vector.extract_strided_slice %197 {offsets = [1, 32], sizes = [1, 32], strides = [1, 1]} : vector<2x64xf32> to vector<1x32xf32>
    %332 = tpu.concatenate %330, %331 in 1 : vector<1x32xf32>, vector<1x32xf32> -> vector<1x64xf32>
    %333 = vector.extract_strided_slice %197 {offsets = [1, 0], sizes = [1, 32], strides = [1, 1]} : vector<2x64xf32> to vector<1x32xf32>
    %334 = vector.extract_strided_slice %164 {offsets = [1, 32], sizes = [1, 32], strides = [1, 1]} : vector<2x64xf32> to vector<1x32xf32>
    %335 = tpu.concatenate %333, %334 in 1 : vector<1x32xf32>, vector<1x32xf32> -> vector<1x64xf32>
    %336 = vector.extract_strided_slice %230 {offsets = [1, 0], sizes = [1, 32], strides = [1, 1]} : vector<2x64xf32> to vector<1x32xf32>
    %337 = vector.extract_strided_slice %131 {offsets = [1, 32], sizes = [1, 32], strides = [1, 1]} : vector<2x64xf32> to vector<1x32xf32>
    %338 = tpu.concatenate %336, %337 in 1 : vector<1x32xf32>, vector<1x32xf32> -> vector<1x64xf32>
    %339 = vector.extract_strided_slice %263 {offsets = [1, 0], sizes = [1, 32], strides = [1, 1]} : vector<2x64xf32> to vector<1x32xf32>
    %340 = vector.extract_strided_slice %98 {offsets = [1, 32], sizes = [1, 32], strides = [1, 1]} : vector<2x64xf32> to vector<1x32xf32>
    %341 = tpu.concatenate %339, %340 in 1 : vector<1x32xf32>, vector<1x32xf32> -> vector<1x64xf32>
    %342 = vector.extract_strided_slice %296 {offsets = [1, 0], sizes = [1, 32], strides = [1, 1]} : vector<2x64xf32> to vector<1x32xf32>
    %343 = vector.extract_strided_slice %65 {offsets = [1, 32], sizes = [1, 32], strides = [1, 1]} : vector<2x64xf32> to vector<1x32xf32>
    %344 = tpu.concatenate %342, %343 in 1 : vector<1x32xf32>, vector<1x32xf32> -> vector<1x64xf32>
    %345 = tpu.concatenate %299, %302, %305, %308, %311, %314, %317, %320, %323, %326, %329, %332, %335, %338, %341, %344 in 0 : vector<1x64xf32>, vector<1x64xf32>, vector<1x64xf32>, vector<1x64xf32>, vector<1x64xf32>, vector<1x64xf32>, vector<1x64xf32>, vector<1x64xf32>, vector<1x64xf32>, vector<1x64xf32>, vector<1x64xf32>, vector<1x64xf32>, vector<1x64xf32>, vector<1x64xf32>, vector<1x64xf32>, vector<1x64xf32> -> vector<16x64xf32>
    %346 = arith.truncf %345 : vector<16x64xf32> to vector<16x64xbf16>
    %cst_44 = arith.constant dense<0.000000e+00> : vector<16x128xf32>
    %347 = tpu.matmul %346, %31, %cst_44 {dimension_numbers = #tpu.dot_dimension_numbers<[1], [0], [0], [1], [0, 0, 1, 1], [], []>} : vector<16x64xbf16>, vector<64x128xbf16>, vector<16x128xf32> -> vector<16x128xf32>
    %348 = vector.broadcast %3 : vector<1x128xf32> to vector<16x128xf32>
    %349 = arith.addf %347, %348 : vector<16x128xf32>
    %c0_45 = arith.constant 0 : index
    %c0_46 = arith.constant 0 : index
    %350 = vector.load %arg8[%c0_45, %c0_46] : memref<16x128xf32, #tpu.memory_space<vmem>>, vector<16x128xf32>
    tpu.vector_store %arg8[%c0_45, %c0_46], %349 {strides = array<i32>} : memref<16x128xf32, #tpu.memory_space<vmem>>, vector<16x128xf32>,
    %cst_47 = arith.constant dense<0xFF800000> : vector<16xf32>
    %351 = vector.multi_reduction <maximumf>, %349, %cst_47 [1] : vector<16x128xf32> to vector<16xf32>
    %352 = vector.shape_cast %351 : vector<16xf32> to vector<16x1xf32>
    %353 = vector.broadcast %352 : vector<16x1xf32> to vector<16x128xf32>
    %354 = arith.subf %349, %353 : vector<16x128xf32>
    %355 = math.exp %354 : vector<16x128xf32>
    %cst_48 = arith.constant dense<0.000000e+00> : vector<16xf32>
    %356 = vector.multi_reduction <add>, %355, %cst_48 [1] : vector<16x128xf32> to vector<16xf32>
    %357 = vector.shape_cast %356 : vector<16xf32> to vector<16x1xf32>
    %358 = math.log %357 : vector<16x1xf32>
    %359 = arith.addf %352, %358 : vector<16x1xf32>
    %360 = arith.subf %352, %359 : vector<16x1xf32>
    %361 = math.exp %360 : vector<16x1xf32>
    %362 = vector.broadcast %352 : vector<16x1xf32> to vector<16x128xf32>
    %363 = arith.cmpf oeq, %349, %362 : vector<16x128xf32>
    %c128_i32 = arith.constant 128 : i32
    %364 = vector.broadcast %c128_i32 : i32 to vector<16x128xi32>
    %365 = arith.select %363, %15, %364 : vector<16x128xi1>, vector<16x128xi32>
    %cst_49 = arith.constant dense<2147483647> : vector<16xi32>
    %366 = vector.multi_reduction <minsi>, %365, %cst_49 [1] : vector<16x128xi32> to vector<16xi32>
    %367 = vector.shape_cast %366 : vector<16xi32> to vector<16x1xi32>
    %cst_50 = arith.constant 3.000000e-01 : f32
    %368 = vector.broadcast %cst_50 : f32 to vector<16x1xf32>
    %369 = arith.cmpf ogt, %361, %368 : vector<16x1xf32>
    %370 = arith.extui %369 : vector<16x1xi1> to vector<16x1xi32>
    %371 = arith.muli %367, %370 : vector<16x1xi32>
    %c0_i32 = arith.constant 0 : i32
    %372 = vector.broadcast %c0_i32 : i32 to vector<16x1xi32>
    %373 = arith.cmpi eq, %371, %372 : vector<16x1xi32>
    %c1_i32 = arith.constant 1 : i32
    %374 = vector.broadcast %c1_i32 : i32 to vector<16x1xi32>
    %375 = arith.select %373, %374, %371 : vector<16x1xi1>, vector<16x1xi32>
    %376 = vector.broadcast %375 : vector<16x1xi32> to vector<16x128xi32>
    %377 = arith.cmpi eq, %376, %15 : vector<16x128xi32>
    %378 = arith.extui %377 : vector<16x128xi1> to vector<16x128xi32>
    %379 = arith.sitofp %378 : vector<16x128xi32> to vector<16x128xf32>
    %380 = arith.truncf %379 : vector<16x128xf32> to vector<16x128xbf16>
    %c128 = arith.constant 128 : index
    %c0_51 = arith.constant 0 : index
    %381 = vector.load %arg3[%c128, %c0_51] : memref<256x128xbf16, #tpu.memory_space<vmem>>, vector<128x128xbf16>
    %cst_52 = arith.constant dense<0.000000e+00> : vector<16x128xf32>
    %382 = tpu.matmul %380, %381, %cst_52 {dimension_numbers = #tpu.dot_dimension_numbers<[1], [0], [0], [1], [0, 0, 1, 1], [], []>} : vector<16x128xbf16>, vector<128x128xbf16>, vector<16x128xf32> -> vector<16x128xf32>
    %383 = arith.addf %382, %13 : vector<16x128xf32>
    %384 = arith.truncf %383 : vector<16x128xf32> to vector<16x128xbf16>
    %c0_53 = arith.constant 0 : index
    %c0_54 = arith.constant 0 : index
    %385 = vector.load %arg6[%c0_53, %c0_54] : memref<128x896xbf16, #tpu.memory_space<vmem>>, vector<128x384xbf16>
    %cst_55 = arith.constant dense<0.000000e+00> : vector<16x384xf32>
    %386 = tpu.matmul %384, %385, %cst_55 {dimension_numbers = #tpu.dot_dimension_numbers<[1], [0], [0], [1], [0, 0, 1, 1], [], []>} : vector<16x128xbf16>, vector<128x384xbf16>, vector<16x384xf32> -> vector<16x384xf32>
    %387 = vector.broadcast %4 : vector<1x384xf32> to vector<16x384xf32>
    %388 = arith.addf %386, %387 : vector<16x384xf32>
    %389 = vector.extract_strided_slice %388 {offsets = [0, 0], sizes = [16, 128], strides = [1, 1]} : vector<16x384xf32> to vector<16x128xf32>
    %390 = vector.shape_cast %389 : vector<16x128xf32> to vector<2x8x128xf32>
    %391 = vector.extract_strided_slice %388 {offsets = [0, 128], sizes = [16, 128], strides = [1, 1]} : vector<16x384xf32> to vector<16x128xf32>
    %392 = vector.shape_cast %391 : vector<16x128xf32> to vector<2x8x128xf32>
    %393 = vector.extract_strided_slice %388 {offsets = [0, 256], sizes = [16, 128], strides = [1, 1]} : vector<16x384xf32> to vector<16x128xf32>
    %394 = vector.shape_cast %393 : vector<16x128xf32> to vector<2x8x128xf32>
    %c0_56 = arith.constant 0 : index
    %c0_57 = arith.constant 0 : index
    %395 = vector.load %arg1[%c0_56, %c0_57] : memref<2x8xf32, #tpu.memory_space<vmem>>, vector<2x8xf32>
    %cst_58 = arith.constant 1.000000e+00 : f32
    %396 = vector.broadcast %cst_58 : f32 to vector<2x8xf32>
    %397 = arith.subf %395, %396 : vector<2x8xf32>
    %cst_59 = arith.constant 1.000000e+09 : f32
    %398 = vector.broadcast %cst_59 : f32 to vector<2x8xf32>
    %399 = arith.mulf %397, %398 : vector<2x8xf32>
    %400 = vector.shape_cast %399 : vector<2x8xf32> to vector<2x1x8xf32>
    %401 = vector.extract_strided_slice %390 {offsets = [0, 0, 0], sizes = [2, 8, 32], strides = [1, 1, 1]} : vector<2x8x128xf32> to vector<2x8x32xf32>
    %402 = arith.truncf %401 : vector<2x8x32xf32> to vector<2x8x32xbf16>
    %403 = vector.extract_strided_slice %392 {offsets = [0, 0, 0], sizes = [2, 8, 32], strides = [1, 1, 1]} : vector<2x8x128xf32> to vector<2x8x32xf32>
    %404 = arith.truncf %403 : vector<2x8x32xf32> to vector<2x8x32xbf16>
    %405 = vector.extract_strided_slice %394 {offsets = [0, 0, 0], sizes = [2, 8, 32], strides = [1, 1, 1]} : vector<2x8x128xf32> to vector<2x8x32xf32>
    %406 = arith.truncf %405 : vector<2x8x32xf32> to vector<2x8x32xbf16>
    "tpu.trace_start"() <{level = 10 : i32, message = "bqd,bkd->bqk"}> : () -> ()
    %cst_60 = arith.constant dense<0.000000e+00> : vector<2x8x8xf32>
    %407 = tpu.matmul %402, %404, %cst_60 {dimension_numbers = #tpu.dot_dimension_numbers<[2], [2], [1], [1], [0, 0, 0, 1, 1, 1], [0], [0]>} : vector<2x8x32xbf16>, vector<2x8x32xbf16>, vector<2x8x8xf32> -> vector<2x8x8xf32>
    "tpu.trace_stop"() : () -> ()
    %cst_61 = arith.constant 0.176776692 : f32
    %408 = vector.broadcast %cst_61 : f32 to vector<2x8x8xf32>
    %409 = arith.mulf %407, %408 : vector<2x8x8xf32>
    %410 = vector.broadcast %400 : vector<2x1x8xf32> to vector<2x8x8xf32>
    %411 = arith.addf %409, %410 : vector<2x8x8xf32>
    %cst_62 = arith.constant dense<0xFF800000> : vector<2x8xf32>
    %412 = vector.multi_reduction <maximumf>, %411, %cst_62 [2] : vector<2x8x8xf32> to vector<2x8xf32>
    %413 = vector.shape_cast %412 : vector<2x8xf32> to vector<2x8x1xf32>
    %414 = vector.broadcast %413 : vector<2x8x1xf32> to vector<2x8x8xf32>
    %415 = arith.subf %411, %414 : vector<2x8x8xf32>
    %416 = math.exp %415 : vector<2x8x8xf32>
    %cst_63 = arith.constant dense<0.000000e+00> : vector<2x8xf32>
    %417 = vector.multi_reduction <add>, %416, %cst_63 [2] : vector<2x8x8xf32> to vector<2x8xf32>
    %418 = vector.shape_cast %417 : vector<2x8xf32> to vector<2x8x1xf32>
    %419 = tpu.reciprocal %418 {approx = true} : vector<2x8x1xf32> -> vector<2x8x1xf32>
    %420 = vector.broadcast %419 : vector<2x8x1xf32> to vector<2x8x8xf32>
    %421 = arith.mulf %416, %420 : vector<2x8x8xf32>
    %422 = arith.truncf %421 : vector<2x8x8xf32> to vector<2x8x8xbf16>
    "tpu.trace_start"() <{level = 10 : i32, message = "bqk,bkd->bqd"}> : () -> ()
    %cst_64 = arith.constant dense<0.000000e+00> : vector<2x8x32xf32>
    %423 = tpu.matmul %422, %406, %cst_64 {dimension_numbers = #tpu.dot_dimension_numbers<[2], [1], [1], [2], [0, 0, 0, 1, 1, 2], [0], [0]>} : vector<2x8x8xbf16>, vector<2x8x32xbf16>, vector<2x8x32xf32> -> vector<2x8x32xf32>
    "tpu.trace_stop"() : () -> ()
    %424 = vector.extract_strided_slice %390 {offsets = [0, 0, 32], sizes = [2, 8, 32], strides = [1, 1, 1]} : vector<2x8x128xf32> to vector<2x8x32xf32>
    %425 = arith.truncf %424 : vector<2x8x32xf32> to vector<2x8x32xbf16>
    %426 = vector.extract_strided_slice %392 {offsets = [0, 0, 32], sizes = [2, 8, 32], strides = [1, 1, 1]} : vector<2x8x128xf32> to vector<2x8x32xf32>
    %427 = arith.truncf %426 : vector<2x8x32xf32> to vector<2x8x32xbf16>
    %428 = vector.extract_strided_slice %394 {offsets = [0, 0, 32], sizes = [2, 8, 32], strides = [1, 1, 1]} : vector<2x8x128xf32> to vector<2x8x32xf32>
    %429 = arith.truncf %428 : vector<2x8x32xf32> to vector<2x8x32xbf16>
    "tpu.trace_start"() <{level = 10 : i32, message = "bqd,bkd->bqk"}> : () -> ()
    %cst_65 = arith.constant dense<0.000000e+00> : vector<2x8x8xf32>
    %430 = tpu.matmul %425, %427, %cst_65 {dimension_numbers = #tpu.dot_dimension_numbers<[2], [2], [1], [1], [0, 0, 0, 1, 1, 1], [0], [0]>} : vector<2x8x32xbf16>, vector<2x8x32xbf16>, vector<2x8x8xf32> -> vector<2x8x8xf32>
    "tpu.trace_stop"() : () -> ()
    %cst_66 = arith.constant 0.176776692 : f32
    %431 = vector.broadcast %cst_66 : f32 to vector<2x8x8xf32>
    %432 = arith.mulf %430, %431 : vector<2x8x8xf32>
    %433 = vector.broadcast %400 : vector<2x1x8xf32> to vector<2x8x8xf32>
    %434 = arith.addf %432, %433 : vector<2x8x8xf32>
    %cst_67 = arith.constant dense<0xFF800000> : vector<2x8xf32>
    %435 = vector.multi_reduction <maximumf>, %434, %cst_67 [2] : vector<2x8x8xf32> to vector<2x8xf32>
    %436 = vector.shape_cast %435 : vector<2x8xf32> to vector<2x8x1xf32>
    %437 = vector.broadcast %436 : vector<2x8x1xf32> to vector<2x8x8xf32>
    %438 = arith.subf %434, %437 : vector<2x8x8xf32>
    %439 = math.exp %438 : vector<2x8x8xf32>
    %cst_68 = arith.constant dense<0.000000e+00> : vector<2x8xf32>
    %440 = vector.multi_reduction <add>, %439, %cst_68 [2] : vector<2x8x8xf32> to vector<2x8xf32>
    %441 = vector.shape_cast %440 : vector<2x8xf32> to vector<2x8x1xf32>
    %442 = tpu.reciprocal %441 {approx = true} : vector<2x8x1xf32> -> vector<2x8x1xf32>
    %443 = vector.broadcast %442 : vector<2x8x1xf32> to vector<2x8x8xf32>
    %444 = arith.mulf %439, %443 : vector<2x8x8xf32>
    %445 = arith.truncf %444 : vector<2x8x8xf32> to vector<2x8x8xbf16>
    "tpu.trace_start"() <{level = 10 : i32, message = "bqk,bkd->bqd"}> : () -> ()
    %cst_69 = arith.constant dense<0.000000e+00> : vector<2x8x32xf32>
    %446 = tpu.matmul %445, %429, %cst_69 {dimension_numbers = #tpu.dot_dimension_numbers<[2], [1], [1], [2], [0, 0, 0, 1, 1, 2], [0], [0]>} : vector<2x8x8xbf16>, vector<2x8x32xbf16>, vector<2x8x32xf32> -> vector<2x8x32xf32>
    "tpu.trace_stop"() : () -> ()
    %447 = vector.extract_strided_slice %390 {offsets = [0, 0, 64], sizes = [2, 8, 32], strides = [1, 1, 1]} : vector<2x8x128xf32> to vector<2x8x32xf32>
    %448 = arith.truncf %447 : vector<2x8x32xf32> to vector<2x8x32xbf16>
    %449 = vector.extract_strided_slice %392 {offsets = [0, 0, 64], sizes = [2, 8, 32], strides = [1, 1, 1]} : vector<2x8x128xf32> to vector<2x8x32xf32>
    %450 = arith.truncf %449 : vector<2x8x32xf32> to vector<2x8x32xbf16>
    %451 = vector.extract_strided_slice %394 {offsets = [0, 0, 64], sizes = [2, 8, 32], strides = [1, 1, 1]} : vector<2x8x128xf32> to vector<2x8x32xf32>
    %452 = arith.truncf %451 : vector<2x8x32xf32> to vector<2x8x32xbf16>
    "tpu.trace_start"() <{level = 10 : i32, message = "bqd,bkd->bqk"}> : () -> ()
    %cst_70 = arith.constant dense<0.000000e+00> : vector<2x8x8xf32>
    %453 = tpu.matmul %448, %450, %cst_70 {dimension_numbers = #tpu.dot_dimension_numbers<[2], [2], [1], [1], [0, 0, 0, 1, 1, 1], [0], [0]>} : vector<2x8x32xbf16>, vector<2x8x32xbf16>, vector<2x8x8xf32> -> vector<2x8x8xf32>
    "tpu.trace_stop"() : () -> ()
    %cst_71 = arith.constant 0.176776692 : f32
    %454 = vector.broadcast %cst_71 : f32 to vector<2x8x8xf32>
    %455 = arith.mulf %453, %454 : vector<2x8x8xf32>
    %456 = vector.broadcast %400 : vector<2x1x8xf32> to vector<2x8x8xf32>
    %457 = arith.addf %455, %456 : vector<2x8x8xf32>
    %cst_72 = arith.constant dense<0xFF800000> : vector<2x8xf32>
    %458 = vector.multi_reduction <maximumf>, %457, %cst_72 [2] : vector<2x8x8xf32> to vector<2x8xf32>
    %459 = vector.shape_cast %458 : vector<2x8xf32> to vector<2x8x1xf32>
    %460 = vector.broadcast %459 : vector<2x8x1xf32> to vector<2x8x8xf32>
    %461 = arith.subf %457, %460 : vector<2x8x8xf32>
    %462 = math.exp %461 : vector<2x8x8xf32>
    %cst_73 = arith.constant dense<0.000000e+00> : vector<2x8xf32>
    %463 = vector.multi_reduction <add>, %462, %cst_73 [2] : vector<2x8x8xf32> to vector<2x8xf32>
    %464 = vector.shape_cast %463 : vector<2x8xf32> to vector<2x8x1xf32>
    %465 = tpu.reciprocal %464 {approx = true} : vector<2x8x1xf32> -> vector<2x8x1xf32>
    %466 = vector.broadcast %465 : vector<2x8x1xf32> to vector<2x8x8xf32>
    %467 = arith.mulf %462, %466 : vector<2x8x8xf32>
    %468 = arith.truncf %467 : vector<2x8x8xf32> to vector<2x8x8xbf16>
    "tpu.trace_start"() <{level = 10 : i32, message = "bqk,bkd->bqd"}> : () -> ()
    %cst_74 = arith.constant dense<0.000000e+00> : vector<2x8x32xf32>
    %469 = tpu.matmul %468, %452, %cst_74 {dimension_numbers = #tpu.dot_dimension_numbers<[2], [1], [1], [2], [0, 0, 0, 1, 1, 2], [0], [0]>} : vector<2x8x8xbf16>, vector<2x8x32xbf16>, vector<2x8x32xf32> -> vector<2x8x32xf32>
    "tpu.trace_stop"() : () -> ()
    %470 = vector.extract_strided_slice %390 {offsets = [0, 0, 96], sizes = [2, 8, 32], strides = [1, 1, 1]} : vector<2x8x128xf32> to vector<2x8x32xf32>
    %471 = arith.truncf %470 : vector<2x8x32xf32> to vector<2x8x32xbf16>
    %472 = vector.extract_strided_slice %392 {offsets = [0, 0, 96], sizes = [2, 8, 32], strides = [1, 1, 1]} : vector<2x8x128xf32> to vector<2x8x32xf32>
    %473 = arith.truncf %472 : vector<2x8x32xf32> to vector<2x8x32xbf16>
    %474 = vector.extract_strided_slice %394 {offsets = [0, 0, 96], sizes = [2, 8, 32], strides = [1, 1, 1]} : vector<2x8x128xf32> to vector<2x8x32xf32>
    %475 = arith.truncf %474 : vector<2x8x32xf32> to vector<2x8x32xbf16>
    "tpu.trace_start"() <{level = 10 : i32, message = "bqd,bkd->bqk"}> : () -> ()
    %cst_75 = arith.constant dense<0.000000e+00> : vector<2x8x8xf32>
    %476 = tpu.matmul %471, %473, %cst_75 {dimension_numbers = #tpu.dot_dimension_numbers<[2], [2], [1], [1], [0, 0, 0, 1, 1, 1], [0], [0]>} : vector<2x8x32xbf16>, vector<2x8x32xbf16>, vector<2x8x8xf32> -> vector<2x8x8xf32>
    "tpu.trace_stop"() : () -> ()
    %cst_76 = arith.constant 0.176776692 : f32
    %477 = vector.broadcast %cst_76 : f32 to vector<2x8x8xf32>
    %478 = arith.mulf %476, %477 : vector<2x8x8xf32>
    %479 = vector.broadcast %400 : vector<2x1x8xf32> to vector<2x8x8xf32>
    %480 = arith.addf %478, %479 : vector<2x8x8xf32>
    %cst_77 = arith.constant dense<0xFF800000> : vector<2x8xf32>
    %481 = vector.multi_reduction <maximumf>, %480, %cst_77 [2] : vector<2x8x8xf32> to vector<2x8xf32>
    %482 = vector.shape_cast %481 : vector<2x8xf32> to vector<2x8x1xf32>
    %483 = vector.broadcast %482 : vector<2x8x1xf32> to vector<2x8x8xf32>
    %484 = arith.subf %480, %483 : vector<2x8x8xf32>
    %485 = math.exp %484 : vector<2x8x8xf32>
    %cst_78 = arith.constant dense<0.000000e+00> : vector<2x8xf32>
    %486 = vector.multi_reduction <add>, %485, %cst_78 [2] : vector<2x8x8xf32> to vector<2x8xf32>
    %487 = vector.shape_cast %486 : vector<2x8xf32> to vector<2x8x1xf32>
    %488 = tpu.reciprocal %487 {approx = true} : vector<2x8x1xf32> -> vector<2x8x1xf32>
    %489 = vector.broadcast %488 : vector<2x8x1xf32> to vector<2x8x8xf32>
    %490 = arith.mulf %485, %489 : vector<2x8x8xf32>
    %491 = arith.truncf %490 : vector<2x8x8xf32> to vector<2x8x8xbf16>
    "tpu.trace_start"() <{level = 10 : i32, message = "bqk,bkd->bqd"}> : () -> ()
    %cst_79 = arith.constant dense<0.000000e+00> : vector<2x8x32xf32>
    %492 = tpu.matmul %491, %475, %cst_79 {dimension_numbers = #tpu.dot_dimension_numbers<[2], [1], [1], [2], [0, 0, 0, 1, 1, 2], [0], [0]>} : vector<2x8x8xbf16>, vector<2x8x32xbf16>, vector<2x8x32xf32> -> vector<2x8x32xf32>
    "tpu.trace_stop"() : () -> ()
    %493 = tpu.concatenate %423, %446, %469, %492 in 2 : vector<2x8x32xf32>, vector<2x8x32xf32>, vector<2x8x32xf32>, vector<2x8x32xf32> -> vector<2x8x128xf32>
    %494 = vector.shape_cast %493 : vector<2x8x128xf32> to vector<16x128xf32>
    %495 = arith.truncf %494 : vector<16x128xf32> to vector<16x128xbf16>
    %c0_80 = arith.constant 0 : index
    %c384 = arith.constant 384 : index
    %496 = vector.load %arg6[%c0_80, %c384] : memref<128x896xbf16, #tpu.memory_space<vmem>>, vector<128x128xbf16>
    %cst_81 = arith.constant dense<0.000000e+00> : vector<16x128xf32>
    %497 = tpu.matmul %495, %496, %cst_81 {dimension_numbers = #tpu.dot_dimension_numbers<[1], [0], [0], [1], [0, 0, 1, 1], [], []>} : vector<16x128xbf16>, vector<128x128xbf16>, vector<16x128xf32> -> vector<16x128xf32>
    %498 = vector.broadcast %5 : vector<1x128xf32> to vector<16x128xf32>
    %499 = arith.addf %497, %498 : vector<16x128xf32>
    %500 = arith.addf %383, %499 : vector<16x128xf32>
    %cst_82 = arith.constant dense<0.000000e+00> : vector<16xf32>
    %501 = vector.multi_reduction <add>, %500, %cst_82 [1] : vector<16x128xf32> to vector<16xf32>
    %502 = vector.shape_cast %501 : vector<16xf32> to vector<16x1xf32>
    %cst_83 = arith.constant 1.280000e+02 : f32
    %503 = vector.broadcast %cst_83 : f32 to vector<16x1xf32>
    %504 = arith.divf %502, %503 : vector<16x1xf32>
    %505 = vector.broadcast %504 : vector<16x1xf32> to vector<16x128xf32>
    %506 = arith.subf %500, %505 : vector<16x128xf32>
    %507 = arith.mulf %506, %506 : vector<16x128xf32>
    %cst_84 = arith.constant dense<0.000000e+00> : vector<16xf32>
    %508 = vector.multi_reduction <add>, %507, %cst_84 [1] : vector<16x128xf32> to vector<16xf32>
    %509 = vector.shape_cast %508 : vector<16xf32> to vector<16x1xf32>
    %cst_85 = arith.constant 1.280000e+02 : f32
    %510 = vector.broadcast %cst_85 : f32 to vector<16x1xf32>
    %511 = arith.divf %509, %510 : vector<16x1xf32>
    %512 = vector.broadcast %504 : vector<16x1xf32> to vector<16x128xf32>
    %513 = arith.subf %500, %512 : vector<16x128xf32>
    %cst_86 = arith.constant 9.99999996E-13 : f32
    %514 = vector.broadcast %cst_86 : f32 to vector<16x1xf32>
    %515 = arith.addf %511, %514 : vector<16x1xf32>
    %516 = math.rsqrt %515 : vector<16x1xf32>
    %517 = vector.broadcast %516 : vector<16x1xf32> to vector<16x128xf32>
    %518 = arith.mulf %513, %517 : vector<16x128xf32>
    %519 = vector.broadcast %6 : vector<1x128xf32> to vector<16x128xf32>
    %520 = arith.mulf %518, %519 : vector<16x128xf32>
    %521 = vector.broadcast %7 : vector<1x128xf32> to vector<16x128xf32>
    %522 = arith.addf %520, %521 : vector<16x128xf32>
    %523 = arith.truncf %522 : vector<16x128xf32> to vector<16x128xbf16>
    %c0_87 = arith.constant 0 : index
    %c512 = arith.constant 512 : index
    %524 = vector.load %arg6[%c0_87, %c512] : memref<128x896xbf16, #tpu.memory_space<vmem>>, vector<128x256xbf16>
    %cst_88 = arith.constant dense<0.000000e+00> : vector<16x256xf32>
    %525 = tpu.matmul %523, %524, %cst_88 {dimension_numbers = #tpu.dot_dimension_numbers<[1], [0], [0], [1], [0, 0, 1, 1], [], []>} : vector<16x128xbf16>, vector<128x256xbf16>, vector<16x256xf32> -> vector<16x256xf32>
    %526 = vector.broadcast %8 : vector<1x256xf32> to vector<16x256xf32>
    %527 = arith.addf %525, %526 : vector<16x256xf32>
    %cst_89 = arith.constant 5.000000e-01 : f32
    %528 = vector.broadcast %cst_89 : f32 to vector<16x256xf32>
    %529 = arith.mulf %528, %527 : vector<16x256xf32>
    %cst_90 = arith.constant 4.471500e-02 : f32
    %530 = vector.broadcast %cst_90 : f32 to vector<16x256xf32>
    %531 = arith.mulf %530, %527 : vector<16x256xf32>
    %532 = arith.mulf %531, %527 : vector<16x256xf32>
    %533 = arith.mulf %532, %527 : vector<16x256xf32>
    %534 = arith.addf %527, %533 : vector<16x256xf32>
    %cst_91 = arith.constant 0.797884583 : f32
    %535 = vector.broadcast %cst_91 : f32 to vector<16x256xf32>
    %536 = arith.mulf %535, %534 : vector<16x256xf32>
    %537 = math.tanh %536 : vector<16x256xf32>
    %cst_92 = arith.constant 1.000000e+00 : f32
    %538 = vector.broadcast %cst_92 : f32 to vector<16x256xf32>
    %539 = arith.addf %538, %537 : vector<16x256xf32>
    %540 = arith.mulf %529, %539 : vector<16x256xf32>
    %541 = arith.truncf %540 : vector<16x256xf32> to vector<16x256xbf16>
    %c0_93 = arith.constant 0 : index
    %c0_94 = arith.constant 0 : index
    %542 = vector.load %arg7[%c0_93, %c0_94] : memref<256x128xbf16, #tpu.memory_space<vmem>>, vector<256x128xbf16>
    %cst_95 = arith.constant dense<0.000000e+00> : vector<16x128xf32>
    %543 = tpu.matmul %541, %542, %cst_95 {dimension_numbers = #tpu.dot_dimension_numbers<[1], [0], [0], [1], [0, 0, 1, 1], [], []>} : vector<16x256xbf16>, vector<256x128xbf16>, vector<16x128xf32> -> vector<16x128xf32>
    %544 = vector.broadcast %9 : vector<1x128xf32> to vector<16x128xf32>
    %545 = arith.addf %543, %544 : vector<16x128xf32>
    %546 = arith.addf %522, %545 : vector<16x128xf32>
    %cst_96 = arith.constant dense<0.000000e+00> : vector<16xf32>
    %547 = vector.multi_reduction <add>, %546, %cst_96 [1] : vector<16x128xf32> to vector<16xf32>
    %548 = vector.shape_cast %547 : vector<16xf32> to vector<16x1xf32>
    %cst_97 = arith.constant 1.280000e+02 : f32
    %549 = vector.broadcast %cst_97 : f32 to vector<16x1xf32>
    %550 = arith.divf %548, %549 : vector<16x1xf32>
    %551 = vector.broadcast %550 : vector<16x1xf32> to vector<16x128xf32>
    %552 = arith.subf %546, %551 : vector<16x128xf32>
    %553 = arith.mulf %552, %552 : vector<16x128xf32>
    %cst_98 = arith.constant dense<0.000000e+00> : vector<16xf32>
    %554 = vector.multi_reduction <add>, %553, %cst_98 [1] : vector<16x128xf32> to vector<16xf32>
    %555 = vector.shape_cast %554 : vector<16xf32> to vector<16x1xf32>
    %cst_99 = arith.constant 1.280000e+02 : f32
    %556 = vector.broadcast %cst_99 : f32 to vector<16x1xf32>
    %557 = arith.divf %555, %556 : vector<16x1xf32>
    %558 = vector.broadcast %550 : vector<16x1xf32> to vector<16x128xf32>
    %559 = arith.subf %546, %558 : vector<16x128xf32>
    %cst_100 = arith.constant 9.99999996E-13 : f32
    %560 = vector.broadcast %cst_100 : f32 to vector<16x1xf32>
    %561 = arith.addf %557, %560 : vector<16x1xf32>
    %562 = math.rsqrt %561 : vector<16x1xf32>
    %563 = vector.broadcast %562 : vector<16x1xf32> to vector<16x128xf32>
    %564 = arith.mulf %559, %563 : vector<16x128xf32>
    %565 = vector.broadcast %10 : vector<1x128xf32> to vector<16x128xf32>
    %566 = arith.mulf %564, %565 : vector<16x128xf32>
    %567 = vector.broadcast %11 : vector<1x128xf32> to vector<16x128xf32>
    %568 = arith.addf %566, %567 : vector<16x128xf32>
    %c0_101 = arith.constant 0 : index
    %c0_102 = arith.constant 0 : index
    %569 = vector.load %arg10[%c0_101, %c0_102] : memref<16x128xf32, #tpu.memory_space<vmem>>, vector<16x128xf32>
    tpu.vector_store %arg10[%c0_101, %c0_102], %568 {strides = array<i32>} : memref<16x128xf32, #tpu.memory_space<vmem>>, vector<16x128xf32>,
    %570 = arith.truncf %568 : vector<16x128xf32> to vector<16x128xbf16>
    %c0_103 = arith.constant 0 : index
    %c768 = arith.constant 768 : index
    %571 = vector.load %arg6[%c0_103, %c768] : memref<128x896xbf16, #tpu.memory_space<vmem>>, vector<128x128xbf16>
    %cst_104 = arith.constant dense<0.000000e+00> : vector<16x128xf32>
    %572 = tpu.matmul %570, %571, %cst_104 {dimension_numbers = #tpu.dot_dimension_numbers<[1], [0], [0], [1], [0, 0, 1, 1], [], []>} : vector<16x128xbf16>, vector<128x128xbf16>, vector<16x128xf32> -> vector<16x128xf32>
    %573 = vector.broadcast %12 : vector<1x128xf32> to vector<16x128xf32>
    %574 = arith.addf %572, %573 : vector<16x128xf32>
    %c0_105 = arith.constant 0 : index
    %c0_106 = arith.constant 0 : index
    %575 = vector.load %arg9[%c0_105, %c0_106] : memref<16x128xf32, #tpu.memory_space<vmem>>, vector<16x128xf32>
    tpu.vector_store %arg9[%c0_105, %c0_106], %574 {strides = array<i32>} : memref<16x128xf32, #tpu.memory_space<vmem>>, vector<16x128xf32>,
    return
  }
}

</mosaic_0001>

<llo_original>
// kernel: sancd_forward.1
$region0: #{sancd_forward.1}
  #allocation0 [shape = 'u32[]', space=smem, size = 0x4, offset = 0x4, fixed_abs, tag = 'smem constant byte address 0x4 - core index']
  #allocation1 [shape = 'u32[144,128]{1,0:T(1,128)}', space=vmem, size = 0x12000, scoped, tag = 'internal scratch']
  %s0 = inlined_call_operand.vmem [shape: s32[16,1], index: 0, kind: input, shape index: {}]
  %s1 = inlined_call_operand.vmem [shape: f32[2,8], index: 1, kind: input, shape index: {}]
  %s2 = inlined_call_operand.hbm [shape: f32[32,384], index: 2, kind: input, shape index: {}]
  %s3 = inlined_call_operand.hbm [shape: bf16[256,128], index: 3, kind: input, shape index: {}]
  %s4 = inlined_call_operand.hbm [shape: bf16[128,384], index: 4, kind: input, shape index: {}]
  %s5 = inlined_call_operand.hbm [shape: bf16[64,384], index: 5, kind: input, shape index: {}]
  %s6 = inlined_call_operand.hbm [shape: bf16[128,896], index: 6, kind: input, shape index: {}]
  %s7 = inlined_call_operand.hbm [shape: bf16[256,128], index: 7, kind: input, shape index: {}]
  %s8 = inlined_call_operand.hbm [shape: f32[16,128], index: 8, kind: output, shape index: {0}]
  %s9 = inlined_call_operand.hbm [shape: f32[16,128], index: 9, kind: output, shape index: {1}]
  %s10 = inlined_call_operand.hbm [shape: f32[16,128], index: 10, kind: output, shape index: {2}]
  %11 = xla_tuple %s8, %s9, %s10
  %s12 = sld [smem:[#allocation0]]
  $region82: #{sancd_forward.1} parent=0
    _
  %s14 = ssub.s32 1, %s12
  %s15 = scalar_select 0, %s14, %s12
  $region1: #{sancd_forward.1} parent=0
    #allocation2 [shape = 'u8[49152]{0}', space=vmem, size = 0xc000, scoped, tag = 'input window, operand 2, single buffered']
    #allocation3 [shape = 's32[1]{0}', space=sflag, size = 0x4, scoped, tag = 'scoped memory for sancd_forward.1']
    #allocation4 [shape = 's32[1]{0}', space=sflag, size = 0x4, scoped, tag = 'scoped memory for sancd_forward.1']
    #allocation5 [shape = 'u8[65536]{0}', space=vmem, size = 0x10000, scoped, tag = 'input window, operand 3, single buffered']
    #allocation6 [shape = 's32[1]{0}', space=sflag, size = 0x4, scoped, tag = 'scoped memory for sancd_forward.1']
    #allocation7 [shape = 'u8[98304]{0}', space=vmem, size = 0x18000, scoped, tag = 'input window, operand 4, single buffered']
    #allocation8 [shape = 'u8[49152]{0}', space=vmem, size = 0xc000, scoped, tag = 'input window, operand 5, single buffered']
    #allocation9 [shape = 's32[1]{0}', space=sflag, size = 0x4, scoped, tag = 'scoped memory for sancd_forward.1']
    #allocation10 [shape = 'u8[229376]{0}', space=vmem, size = 0x38000, scoped, tag = 'input window, operand 6, single buffered']
    #allocation11 [shape = 'u8[65536]{0}', space=vmem, size = 0x10000, scoped, tag = 'input window, operand 7, single buffered']
    #allocation12 [shape = 's32[1]{0}', space=sflag, size = 0x4, scoped, tag = 'scoped memory for sancd_forward.1']
    #allocation13 [shape = 'u8[8192]{0}', space=vmem, size = 0x2000, scoped, tag = 'output window, operand 0, single buffered']
    #allocation14 [shape = 'u8[8192]{0}', space=vmem, size = 0x2000, scoped, tag = 'output window, operand 1, single buffered']
    #allocation15 [shape = 's32[1]{0}', space=sflag, size = 0x4, scoped, tag = 'scoped memory for sancd_forward.1']
    #allocation16 [shape = 'u8[8192]{0}', space=vmem, size = 0x2000, scoped, tag = 'output window, operand 2, single buffered']
    %16 = vsyncpa [#allocation3], 0
    %17 = vsyncpa [#allocation6], 0
    %18 = vsyncpa [#allocation9], 0
    %19 = vsyncpa [#allocation12], 0
    %20 = vsyncpa [#allocation4], 0
    %21 = vsyncpa [#allocation15], 0
    // Predicated region
    $region2: #{sancd_forward.1} parent=1 // pred_check
      _
    $region3: #{sancd_forward.1} parent=1 // pred_check_branch
      %23 = sbr.rel (0) target = $region5
    $region4: #{sancd_forward.1} parent=1 // pred_region
      _
    $region5: #{sancd_forward.1} parent=1 // pred_fallthru
      _
    // Predicated region
    $region6: #{sancd_forward.1} parent=1 // pred_check
      _
    $region7: #{sancd_forward.1} parent=1 // pred_check_branch
      %25 = sbr.rel (0) target = $region9
    $region8: #{sancd_forward.1} parent=1 // pred_region
      _
    $region9: #{sancd_forward.1} parent=1 // pred_fallthru
      _
    // Predicated region
    $region10: #{sancd_forward.1} parent=1 // pred_check
      _
    $region11: #{sancd_forward.1} parent=1 // pred_check_branch
      %27 = sbr.rel (0) target = $region13
    $region12: #{sancd_forward.1} parent=1 // pred_region
      %s29 = ssub.s32 1536, 1536
      %30 = vsyncadd [#allocation3], %s29
      %s31 = sshll.u32 [#allocation2], 4
      %s32 = int_to_ptr.vmem [resolvable:$true] %s31
      %37 = dma.hbm_to_vmem [thread:$0]  %s2, 1536, %s32, [#allocation3], 384, 384, 24
    $region13: #{sancd_forward.1} parent=1 // pred_fallthru
      _
    // Predicated region
    $region14: #{sancd_forward.1} parent=1 // pred_check
      _
    $region15: #{sancd_forward.1} parent=1 // pred_check_branch
      %39 = sbr.rel (0) target = $region17
    $region16: #{sancd_forward.1} parent=1 // pred_region
      %s41 = ssub.s32 2048, 2048
      %42 = vsyncadd [#allocation6], %s41
      %s43 = sshll.u32 [#allocation5], 4
      %s44 = int_to_ptr.vmem [resolvable:$true] %s43
      %49 = dma.hbm_to_vmem [thread:$0]  %s3, 2048, %s44, [#allocation6], 64, 64, 4
    $region17: #{sancd_forward.1} parent=1 // pred_fallthru
      _
    // Predicated region
    $region18: #{sancd_forward.1} parent=1 // pred_check
      _
    $region19: #{sancd_forward.1} parent=1 // pred_check_branch
      %51 = sbr.rel (0) target = $region21
    $region20: #{sancd_forward.1} parent=1 // pred_region
      %s53 = ssub.s32 3072, 3072
      %54 = vsyncadd [#allocation6], %s53
      %s55 = sshll.u32 [#allocation7], 4
      %s56 = int_to_ptr.vmem [resolvable:$true] %s55
      %61 = dma.hbm_to_vmem [thread:$0]  %s4, 3072, %s56, [#allocation6], 192, 192, 12
    $region21: #{sancd_forward.1} parent=1 // pred_fallthru
      _
    // Predicated region
    $region22: #{sancd_forward.1} parent=1 // pred_check
      _
    $region23: #{sancd_forward.1} parent=1 // pred_check_branch
      %63 = sbr.rel (0) target = $region25
    $region24: #{sancd_forward.1} parent=1 // pred_region
      %s65 = ssub.s32 1536, 1536
      %66 = vsyncadd [#allocation9], %s65
      %s67 = sshll.u32 [#allocation8], 4
      %s68 = int_to_ptr.vmem [resolvable:$true] %s67
      %73 = dma.hbm_to_vmem [thread:$0]  %s5, 1536, %s68, [#allocation9], 192, 192, 12
    $region25: #{sancd_forward.1} parent=1 // pred_fallthru
      _
    // Predicated region
    $region26: #{sancd_forward.1} parent=1 // pred_check
      _
    $region27: #{sancd_forward.1} parent=1 // pred_check_branch
      %75 = sbr.rel (0) target = $region29
    $region28: #{sancd_forward.1} parent=1 // pred_region
      %s77 = ssub.s32 7168, 7168
      %78 = vsyncadd [#allocation9], %s77
      %s79 = sshll.u32 [#allocation10], 4
      %s80 = int_to_ptr.vmem [resolvable:$true] %s79
      %85 = dma.hbm_to_vmem [thread:$0]  %s6, 7168, %s80, [#allocation9], 448, 448, 28
    $region29: #{sancd_forward.1} parent=1 // pred_fallthru
      _
    // Predicated region
    $region30: #{sancd_forward.1} parent=1 // pred_check
      _
    $region31: #{sancd_forward.1} parent=1 // pred_check_branch
      %87 = sbr.rel (0) target = $region33
    $region32: #{sancd_forward.1} parent=1 // pred_region
      %s89 = ssub.s32 2048, 2048
      %90 = vsyncadd [#allocation12], %s89
      %s91 = sshll.u32 [#allocation11], 4
      %s92 = int_to_ptr.vmem [resolvable:$true] %s91
      %97 = dma.hbm_to_vmem [thread:$0]  %s7, 2048, %s92, [#allocation12], 64, 64, 4
    $region33: #{sancd_forward.1} parent=1 // pred_fallthru
      _
    // Predicated region
    $region34: #{sancd_forward.1} parent=1 // pred_check
      _
    $region35: #{sancd_forward.1} parent=1 // pred_check_branch
      %99 = sbr.rel (0) target = $region37
    $region36: #{sancd_forward.1} parent=1 // pred_region
      %100 = dma.done [#allocation3], 1536
    $region37: #{sancd_forward.1} parent=1 // pred_fallthru
      _
    // Predicated region
    $region38: #{sancd_forward.1} parent=1 // pred_check
      _
    $region39: #{sancd_forward.1} parent=1 // pred_check_branch
      %102 = sbr.rel (0) target = $region41
    $region40: #{sancd_forward.1} parent=1 // pred_region
      %103 = dma.done [#allocation6], 2048
    $region41: #{sancd_forward.1} parent=1 // pred_fallthru
      _
    // Predicated region
    $region42: #{sancd_forward.1} parent=1 // pred_check
      _
    $region43: #{sancd_forward.1} parent=1 // pred_check_branch
      %105 = sbr.rel (0) target = $region45
    $region44: #{sancd_forward.1} parent=1 // pred_region
      %106 = dma.done [#allocation6], 3072
    $region45: #{sancd_forward.1} parent=1 // pred_fallthru
      _
    // Predicated region
    $region46: #{sancd_forward.1} parent=1 // pred_check
      _
    $region47: #{sancd_forward.1} parent=1 // pred_check_branch
      %108 = sbr.rel (0) target = $region49
    $region48: #{sancd_forward.1} parent=1 // pred_region
      %109 = dma.done [#allocation9], 1536
    $region49: #{sancd_forward.1} parent=1 // pred_fallthru
      _
    // Predicated region
    $region50: #{sancd_forward.1} parent=1 // pred_check
      _
    $region51: #{sancd_forward.1} parent=1 // pred_check_branch
      %111 = sbr.rel (0) target = $region53
    $region52: #{sancd_forward.1} parent=1 // pred_region
      %112 = dma.done [#allocation9], 7168
    $region53: #{sancd_forward.1} parent=1 // pred_fallthru
      _
    // Predicated region
    $region54: #{sancd_forward.1} parent=1 // pred_check
      _
    $region55: #{sancd_forward.1} parent=1 // pred_check_branch
      %114 = sbr.rel (0) target = $region57
    $region56: #{sancd_forward.1} parent=1 // pred_region
      %115 = dma.done [#allocation12], 2048
    $region57: #{sancd_forward.1} parent=1 // pred_fallthru
      _
    %v117 = vld [vmem:[#allocation2] sm:$0xff]
    %v118 = vld [vmem:[#allocation2 + $0x8] sm:$0xff]
    %v119 = vld [vmem:[#allocation2 + $0x10] sm:$0xff]
    %v120 = vld [vmem:[#allocation2 + $0x18] sm:$0xff]
    %v121 = vld [vmem:[#allocation2 + $0x30] sm:$0xff]
    %v122 = vld [vmem:[#allocation2 + $0x48] sm:$0xff]
    %v123 = vld [vmem:[%s0] sm:$0xff]
    %v124 = vld [vmem:[%s0 + $0x8] sm:$0xff]
    %v125 = vlaneseq
    %v126 = vand.u32 %v125, 127
    %127 = vset.pattern.permute.xlu0 0
    %128 = vperm.xlu0 %127, %v123
    %v129 = vpop.permute.xlu0 %128
    %130 = vset.pattern.permute.xlu0 0
    %131 = vperm.xlu0 %130, %v124
    %v132 = vpop.permute.xlu0 %131
    %vm133 = vcmp.eq.s32.totalorder %v129, %v126
    %vm134 = vcmp.eq.s32.totalorder %v132, %v126
    %v135 = vsel %vm133, 1, 0
    %v136 = vsel %vm134, 1, 0
    %v137 = vcvt.s32.f32 %v135
    %v138 = vcvt.s32.f32 %v136
    %v139 = vpack.c.bf16 %v138, %v137
    %v140 = vld [vmem:[#allocation5] sm:$0xf]
    %v141 = vld [vmem:[#allocation5 + $0x4] sm:$0xf]
    %v142 = vld [vmem:[#allocation5 + $0x8] sm:$0xf]
    %v143 = vld [vmem:[#allocation5 + $0xc] sm:$0xf]
    %v144 = vld [vmem:[#allocation5 + $0x10] sm:$0xf]
    %v145 = vld [vmem:[#allocation5 + $0x14] sm:$0xf]
    %v146 = vld [vmem:[#allocation5 + $0x18] sm:$0xf]
    %v147 = vld [vmem:[#allocation5 + $0x1c] sm:$0xf]
    %v148 = vld [vmem:[#allocation5 + $0x20] sm:$0xf]
    %v149 = vld [vmem:[#allocation5 + $0x24] sm:$0xf]
    %v150 = vld [vmem:[#allocation5 + $0x28] sm:$0xf]
    %v151 = vld [vmem:[#allocation5 + $0x2c] sm:$0xf]
    %v152 = vld [vmem:[#allocation5 + $0x30] sm:$0xf]
    %v153 = vld [vmem:[#allocation5 + $0x34] sm:$0xf]
    %v154 = vld [vmem:[#allocation5 + $0x38] sm:$0xf]
    %v155 = vld [vmem:[#allocation5 + $0x3c] sm:$0xf]
    %v172 = vunpack.c.l.b16 %v140
    %v173 = vunpack.c.l.b16 %v141
    %v174 = vunpack.c.l.b16 %v142
    %v175 = vunpack.c.l.b16 %v143
    %v176 = vunpack.c.l.b16 %v144
    %v177 = vunpack.c.l.b16 %v145
    %v178 = vunpack.c.l.b16 %v146
    %v179 = vunpack.c.l.b16 %v147
    %v180 = vunpack.c.l.b16 %v148
    %v181 = vunpack.c.l.b16 %v149
    %v182 = vunpack.c.l.b16 %v150
    %v183 = vunpack.c.l.b16 %v151
    %v184 = vunpack.c.l.b16 %v152
    %v185 = vunpack.c.l.b16 %v153
    %v186 = vunpack.c.l.b16 %v154
    %v187 = vunpack.c.l.b16 %v155
    %v188 = vpack.c.b16 %v173, %v172
    %v189 = vpack.c.b16 %v175, %v174
    %v190 = vpack.c.b16 %v177, %v176
    %v191 = vpack.c.b16 %v179, %v178
    %v192 = vpack.c.b16 %v181, %v180
    %v193 = vpack.c.b16 %v183, %v182
    %v194 = vpack.c.b16 %v185, %v184
    %v195 = vpack.c.b16 %v187, %v186
    %204 = vmatprep.subr.bf16.mxu0 0
    %205 = vmatpush1.bf16.msra.mxu0 %v188
    %206 = vmatprep.subr.bf16.mxu0 0
    %207 = vmatpush1.bf16.msra.mxu0 %v189
    %208 = vmatprep.subr.bf16.mxu0 0
    %209 = vmatpush1.bf16.msra.mxu0 %v190
    %210 = vmatprep.subr.bf16.mxu0 0
    %211 = vmatpush1.bf16.msra.mxu0 %v191
    %212 = vmatprep.subr.bf16.mxu0 0
    %213 = vmatpush1.bf16.msra.mxu0 %v192
    %214 = vmatprep.subr.bf16.mxu0 0
    %215 = vmatpush1.bf16.msra.mxu0 %v193
    %216 = vmatprep.subr.bf16.mxu0 0
    %217 = vmatpush1.bf16.msra.mxu0 %v194
    %218 = vmatprep.subr.bf16.mxu0 0
    %219 = vmatpush1.bf16.msra.mxu0 %v195
    %220 = vmatprep.subr.bf16.mxu0 0
    %221 = vmatpush1.bf16.msra.mxu0 0
    %222 = vmatprep.subr.bf16.mxu0 0
    %223 = vmatpush1.bf16.msra.mxu0 0
    %224 = vmatprep.subr.bf16.mxu0 0
    %225 = vmatpush1.bf16.msra.mxu0 0
    %226 = vmatprep.subr.bf16.mxu0 0
    %227 = vmatpush1.bf16.msra.mxu0 0
    %228 = vmatprep.subr.bf16.mxu0 0
    %229 = vmatpush1.bf16.msra.mxu0 0
    %230 = vmatprep.subr.bf16.mxu0 0
    %231 = vmatpush1.bf16.msra.mxu0 0
    %232 = vmatprep.subr.bf16.mxu0 0
    %233 = vmatpush1.bf16.msra.mxu0 0
    %234 = vmatprep.subr.bf16.mxu0 0
    %235 = vmatpush1.bf16.msra.mxu0 0
    %236 = vmatprep.mubr.bf16.mxu0 0
    %237 = vmatmul.mubr.bf16.gmra.mrb[0].mxu0 %v139
    %v238 = vpop.f32.mrb[0].mxu0
    %v239 = vadd.f32 0.0, %v238
    %v240 = vpop.f32.mrb[0].mxu0
    %v241 = vpop.f32.mrb[0].mxu0
    %v242 = vadd.f32 0.0, %v241
    %v243 = vpop.f32.mrb[0].mxu0
    %244 = vdwg.mxu0
    %v245 = vpack.c.bf16 %v242, %v239
    %v246 = vld [vmem:[#allocation7] sm:$0xff]
    %v247 = vld [vmem:[#allocation7 + $0x8] sm:$0xf]
    %v248 = vld [vmem:[#allocation7 + $0xc] sm:$0xff]
    %v249 = vld [vmem:[#allocation7 + $0x14] sm:$0xf]
    %v250 = vld [vmem:[#allocation7 + $0x18] sm:$0xff]
    %v251 = vld [vmem:[#allocation7 + $0x20] sm:$0xf]
    %v252 = vld [vmem:[#allocation7 + $0x24] sm:$0xff]
    %v253 = vld [vmem:[#allocation7 + $0x2c] sm:$0xf]
    %v254 = vld [vmem:[#allocation7 + $0x30] sm:$0xff]
    %v255 = vld [vmem:[#allocation7 + $0x38] sm:$0xf]
    %v256 = vld [vmem:[#allocation7 + $0x3c] sm:$0xff]
    %v257 = vld [vmem:[#allocation7 + $0x44] sm:$0xf]
    %v258 = vld [vmem:[#allocation7 + $0x48] sm:$0xff]
    %v259 = vld [vmem:[#allocation7 + $0x50] sm:$0xf]
    %v260 = vld [vmem:[#allocation7 + $0x54] sm:$0xff]
    %v261 = vld [vmem:[#allocation7 + $0x5c] sm:$0xf]
    %v262 = vld [vmem:[#allocation7 + $0x60] sm:$0xff]
    %v263 = vld [vmem:[#allocation7 + $0x68] sm:$0xf]
    %v264 = vld [vmem:[#allocation7 + $0x6c] sm:$0xff]
    %v265 = vld [vmem:[#allocation7 + $0x74] sm:$0xf]
    %v266 = vld [vmem:[#allocation7 + $0x78] sm:$0xff]
    %v267 = vld [vmem:[#allocation7 + $0x80] sm:$0xf]
    %v268 = vld [vmem:[#allocation7 + $0x84] sm:$0xff]
    %v269 = vld [vmem:[#allocation7 + $0x8c] sm:$0xf]
    %v270 = vld [vmem:[#allocation7 + $0x90] sm:$0xff]
    %v271 = vld [vmem:[#allocation7 + $0x98] sm:$0xf]
    %v272 = vld [vmem:[#allocation7 + $0x9c] sm:$0xff]
    %v273 = vld [vmem:[#allocation7 + $0xa4] sm:$0xf]
    %v274 = vld [vmem:[#allocation7 + $0xa8] sm:$0xff]
    %v275 = vld [vmem:[#allocation7 + $0xb0] sm:$0xf]
    %v276 = vld [vmem:[#allocation7 + $0xb4] sm:$0xff]
    %v277 = vld [vmem:[#allocation7 + $0xbc] sm:$0xf]
    %v278 = vlaneseq
    %v279 = vshrl.u32 %v278, 7
    %v280 = vsub.s32 0, %v279
    %v281 = vrot.slane %v117, %v280
    %v282 = vlaneseq
    %v283 = vshrl.u32 %v282, 7
    %v284 = vsub.s32 0, %v283
    %v285 = vrot.slane %v118, %v284
    %v286 = vlaneseq
    %v287 = vshrl.u32 %v286, 7
    %v288 = vsub.s32 0, %v287
    %v289 = vrot.slane %v119, %v288
    %v322 = vunpack.c.l.b16 %v246
    %v323 = vunpack.c.h.b16 %v246
    %v324 = vunpack.c.l.b16 %v247
    %v325 = vunpack.c.l.b16 %v248
    %v326 = vunpack.c.h.b16 %v248
    %v327 = vunpack.c.l.b16 %v249
    %v328 = vunpack.c.l.b16 %v250
    %v329 = vunpack.c.h.b16 %v250
    %v330 = vunpack.c.l.b16 %v251
    %v331 = vunpack.c.l.b16 %v252
    %v332 = vunpack.c.h.b16 %v252
    %v333 = vunpack.c.l.b16 %v253
    %v334 = vunpack.c.l.b16 %v254
    %v335 = vunpack.c.h.b16 %v254
    %v336 = vunpack.c.l.b16 %v255
    %v337 = vunpack.c.l.b16 %v256
    %v338 = vunpack.c.h.b16 %v256
    %v339 = vunpack.c.l.b16 %v257
    %v340 = vunpack.c.l.b16 %v258
    %v341 = vunpack.c.h.b16 %v258
    %v342 = vunpack.c.l.b16 %v259
    %v343 = vunpack.c.l.b16 %v260
    %v344 = vunpack.c.h.b16 %v260
    %v345 = vunpack.c.l.b16 %v261
    %v346 = vunpack.c.l.b16 %v262
    %v347 = vunpack.c.h.b16 %v262
    %v348 = vunpack.c.l.b16 %v263
    %v349 = vunpack.c.l.b16 %v264
    %v350 = vunpack.c.h.b16 %v264
    %v351 = vunpack.c.l.b16 %v265
    %v352 = vunpack.c.l.b16 %v266
    %v353 = vunpack.c.h.b16 %v266
    %v354 = vunpack.c.l.b16 %v267
    %v355 = vunpack.c.l.b16 %v268
    %v356 = vunpack.c.h.b16 %v268
    %v357 = vunpack.c.l.b16 %v269
    %v358 = vunpack.c.l.b16 %v270
    %v359 = vunpack.c.h.b16 %v270
    %v360 = vunpack.c.l.b16 %v271
    %v361 = vunpack.c.l.b16 %v272
    %v362 = vunpack.c.h.b16 %v272
    %v363 = vunpack.c.l.b16 %v273
    %v364 = vunpack.c.l.b16 %v274
    %v365 = vunpack.c.h.b16 %v274
    %v366 = vunpack.c.l.b16 %v275
    %v367 = vunpack.c.l.b16 %v276
    %v368 = vunpack.c.h.b16 %v276
    %v369 = vunpack.c.l.b16 %v277
    %v370 = vpack.c.b16 %v325, %v322
    %v371 = vpack.c.b16 %v326, %v323
    %v372 = vpack.c.b16 %v327, %v324
    %v373 = vpack.c.b16 %v331, %v328
    %v374 = vpack.c.b16 %v332, %v329
    %v375 = vpack.c.b16 %v333, %v330
    %v376 = vpack.c.b16 %v337, %v334
    %v377 = vpack.c.b16 %v338, %v335
    %v378 = vpack.c.b16 %v339, %v336
    %v379 = vpack.c.b16 %v343, %v340
    %v380 = vpack.c.b16 %v344, %v341
    %v381 = vpack.c.b16 %v345, %v342
    %v382 = vpack.c.b16 %v349, %v346
    %v383 = vpack.c.b16 %v350, %v347
    %v384 = vpack.c.b16 %v351, %v348
    %v385 = vpack.c.b16 %v355, %v352
    %v386 = vpack.c.b16 %v356, %v353
    %v387 = vpack.c.b16 %v357, %v354
    %v388 = vpack.c.b16 %v361, %v358
    %v389 = vpack.c.b16 %v362, %v359
    %v390 = vpack.c.b16 %v363, %v360
    %v391 = vpack.c.b16 %v367, %v364
    %v392 = vpack.c.b16 %v368, %v365
    %v393 = vpack.c.b16 %v369, %v366
    %418 = vmatprep.subr.bf16.mxu0 %v371
    %419 = vmatpush1.bf16.msra.mxu0 %v370
    %420 = vmatprep.subr.bf16.mxu0 %v374
    %421 = vmatpush1.bf16.msra.mxu0 %v373
    %422 = vmatprep.subr.bf16.mxu0 %v377
    %423 = vmatpush1.bf16.msra.mxu0 %v376
    %424 = vmatprep.subr.bf16.mxu0 %v380
    %425 = vmatpush1.bf16.msra.mxu0 %v379
    %426 = vmatprep.subr.bf16.mxu0 %v383
    %427 = vmatpush1.bf16.msra.mxu0 %v382
    %428 = vmatprep.subr.bf16.mxu0 %v386
    %429 = vmatpush1.bf16.msra.mxu0 %v385
    %430 = vmatprep.subr.bf16.mxu0 %v389
    %431 = vmatpush1.bf16.msra.mxu0 %v388
    %432 = vmatprep.subr.bf16.mxu0 %v392
    %433 = vmatpush1.bf16.msra.mxu0 %v391
    %434 = vmatprep.subr.bf16.mxu0 0
    %435 = vmatpush1.bf16.msra.mxu0 0
    %436 = vmatprep.subr.bf16.mxu0 0
    %437 = vmatpush1.bf16.msra.mxu0 0
    %438 = vmatprep.subr.bf16.mxu0 0
    %439 = vmatpush1.bf16.msra.mxu0 0
    %440 = vmatprep.subr.bf16.mxu0 0
    %441 = vmatpush1.bf16.msra.mxu0 0
    %442 = vmatprep.subr.bf16.mxu0 0
    %443 = vmatpush1.bf16.msra.mxu0 0
    %444 = vmatprep.subr.bf16.mxu0 0
    %445 = vmatpush1.bf16.msra.mxu0 0
    %446 = vmatprep.subr.bf16.mxu0 0
    %447 = vmatpush1.bf16.msra.mxu0 0
    %448 = vmatprep.subr.bf16.mxu0 0
    %449 = vmatpush1.bf16.msra.mxu0 0
    %450 = vmatprep.mubr.bf16.mxu0 0
    %451 = vmatmul.mubr.bf16.gmra.mrb[0].mxu0 %v245
    %v452 = vpop.f32.mrb[0].mxu0
    %v453 = vadd.f32 %v281, %v452
    %v454 = vpop.f32.mrb[0].mxu0
    %v455 = vadd.f32 %v285, %v454
    %v456 = vpop.f32.mrb[0].mxu0
    %v457 = vadd.f32 %v281, %v456
    %v458 = vpop.f32.mrb[0].mxu0
    %v459 = vadd.f32 %v285, %v458
    %460 = vdwg.mxu0
    %461 = vmatprep.subr.bf16.mxu0 0
    %462 = vmatpush1.bf16.msra.mxu0 %v372
    %463 = vmatprep.subr.bf16.mxu0 0
    %464 = vmatpush1.bf16.msra.mxu0 %v375
    %465 = vmatprep.subr.bf16.mxu0 0
    %466 = vmatpush1.bf16.msra.mxu0 %v378
    %467 = vmatprep.subr.bf16.mxu0 0
    %468 = vmatpush1.bf16.msra.mxu0 %v381
    %469 = vmatprep.subr.bf16.mxu0 0
    %470 = vmatpush1.bf16.msra.mxu0 %v384
    %471 = vmatprep.subr.bf16.mxu0 0
    %472 = vmatpush1.bf16.msra.mxu0 %v387
    %473 = vmatprep.subr.bf16.mxu0 0
    %474 = vmatpush1.bf16.msra.mxu0 %v390
    %475 = vmatprep.subr.bf16.mxu0 0
    %476 = vmatpush1.bf16.msra.mxu0 %v393
    %477 = vmatprep.subr.bf16.mxu0 0
    %478 = vmatpush1.bf16.msra.mxu0 0
    %479 = vmatprep.subr.bf16.mxu0 0
    %480 = vmatpush1.bf16.msra.mxu0 0
    %481 = vmatprep.subr.bf16.mxu0 0
    %482 = vmatpush1.bf16.msra.mxu0 0
    %483 = vmatprep.subr.bf16.mxu0 0
    %484 = vmatpush1.bf16.msra.mxu0 0
    %485 = vmatprep.subr.bf16.mxu0 0
    %486 = vmatpush1.bf16.msra.mxu0 0
    %487 = vmatprep.subr.bf16.mxu0 0
    %488 = vmatpush1.bf16.msra.mxu0 0
    %489 = vmatprep.subr.bf16.mxu0 0
    %490 = vmatpush1.bf16.msra.mxu0 0
    %491 = vmatprep.subr.bf16.mxu0 0
    %492 = vmatpush1.bf16.msra.mxu0 0
    %493 = vmatprep.mubr.bf16.mxu0 0
    %494 = vmatmul.mubr.bf16.gmra.mrb[0].mxu0 %v245
    %v495 = vpop.f32.mrb[0].mxu0
    %v496 = vadd.f32 %v289, %v495
    %v497 = vpop.f32.mrb[0].mxu0
    %v498 = vpop.f32.mrb[0].mxu0
    %v499 = vadd.f32 %v289, %v498
    %v500 = vpop.f32.mrb[0].mxu0
    %501 = vdwg.mxu0
    %v502 = vld [vmem:[#allocation8] sm:$0xff]
    %v503 = vld [vmem:[#allocation8 + $0xc] sm:$0xff]
    %v504 = vld [vmem:[#allocation8 + $0x18] sm:$0xff]
    %v505 = vld [vmem:[#allocation8 + $0x24] sm:$0xff]
    %v506 = vld [vmem:[#allocation8 + $0x30] sm:$0xff]
    %v507 = vld [vmem:[#allocation8 + $0x3c] sm:$0xff]
    %v508 = vld [vmem:[#allocation8 + $0x48] sm:$0xff]
    %v509 = vld [vmem:[#allocation8 + $0x54] sm:$0xff]
    %v510 = vld [vmem:[#allocation8 + $0x8] sm:$0xf]
    %v511 = vld [vmem:[#allocation8 + $0x14] sm:$0xf]
    %v512 = vld [vmem:[#allocation8 + $0x20] sm:$0xf]
    %v513 = vld [vmem:[#allocation8 + $0x2c] sm:$0xf]
    %v514 = vld [vmem:[#allocation8 + $0x38] sm:$0xf]
    %v515 = vld [vmem:[#allocation8 + $0x44] sm:$0xf]
    %v516 = vld [vmem:[#allocation8 + $0x50] sm:$0xf]
    %v517 = vld [vmem:[#allocation8 + $0x5c] sm:$0xf]
    %v520 = vrot.slane %v459, 6
    %v521 = vrot.slane %v499, 6
    %522 = vrot.lane.b32.xlu0 %v520, 64
    %v523 = vpop.permute.xlu0 %522
    %524 = vrot.lane.b32.xlu0 %v521, 64
    %v525 = vpop.permute.xlu0 %524
    %vm526 = vcmask 523264
    %v527 = vsel %vm526, %v523, %v525
    %v530 = vadd.f32 %v453, %v527
    %v531 = vadd.f32 %v455, %v525
    %v532 = vlaneseq
    %v533 = vshrl.u32 %v532, 7
    %v534 = vsub.s32 1, %v533
    %v535 = vrot.slane %v117, %v534
    %v536 = vlaneseq
    %v537 = vshrl.u32 %v536, 7
    %v538 = vsub.s32 1, %v537
    %v539 = vrot.slane %v118, %v538
    %v548 = vunpack.c.l.b16 %v502
    %v549 = vunpack.c.h.b16 %v502
    %v550 = vunpack.c.l.b16 %v503
    %v551 = vunpack.c.h.b16 %v503
    %v552 = vunpack.c.l.b16 %v504
    %v553 = vunpack.c.h.b16 %v504
    %v554 = vunpack.c.l.b16 %v505
    %v555 = vunpack.c.h.b16 %v505
    %v556 = vunpack.c.l.b16 %v506
    %v557 = vunpack.c.h.b16 %v506
    %v558 = vunpack.c.l.b16 %v507
    %v559 = vunpack.c.h.b16 %v507
    %v560 = vunpack.c.l.b16 %v508
    %v561 = vunpack.c.h.b16 %v508
    %v562 = vunpack.c.l.b16 %v509
    %v563 = vunpack.c.h.b16 %v509
    %v564 = vpack.c.b16 %v550, %v548
    %v565 = vpack.c.b16 %v551, %v549
    %v566 = vpack.c.b16 %v554, %v552
    %v567 = vpack.c.b16 %v555, %v553
    %v568 = vpack.c.b16 %v558, %v556
    %v569 = vpack.c.b16 %v559, %v557
    %v570 = vpack.c.b16 %v562, %v560
    %v571 = vpack.c.b16 %v563, %v561
    %v581 = vsel %vm526, 0, 0
    %583 = vmatprep.subr.bf16.mxu0 %v565
    %584 = vmatpush1.bf16.msra.mxu0 %v564
    %585 = vmatprep.subr.bf16.mxu0 %v567
    %586 = vmatpush1.bf16.msra.mxu0 %v566
    %587 = vmatprep.subr.bf16.mxu0 %v569
    %588 = vmatpush1.bf16.msra.mxu0 %v568
    %589 = vmatprep.subr.bf16.mxu0 %v571
    %590 = vmatpush1.bf16.msra.mxu0 %v570
    %591 = vmatprep.subr.bf16.mxu0 0
    %592 = vmatpush1.bf16.msra.mxu0 0
    %593 = vmatprep.subr.bf16.mxu0 0
    %594 = vmatpush1.bf16.msra.mxu0 0
    %595 = vmatprep.subr.bf16.mxu0 0
    %596 = vmatpush1.bf16.msra.mxu0 0
    %597 = vmatprep.subr.bf16.mxu0 0
    %598 = vmatpush1.bf16.msra.mxu0 0
    %599 = vmatprep.subr.bf16.mxu0 0
    %600 = vmatpush1.bf16.msra.mxu0 0
    %601 = vmatprep.subr.bf16.mxu0 0
    %602 = vmatpush1.bf16.msra.mxu0 0
    %603 = vmatprep.subr.bf16.mxu0 0
    %604 = vmatpush1.bf16.msra.mxu0 0
    %605 = vmatprep.subr.bf16.mxu0 0
    %606 = vmatpush1.bf16.msra.mxu0 0
    %607 = vmatprep.subr.bf16.mxu0 0
    %608 = vmatpush1.bf16.msra.mxu0 0
    %609 = vmatprep.subr.bf16.mxu0 0
    %610 = vmatpush1.bf16.msra.mxu0 0
    %611 = vmatprep.subr.bf16.mxu0 0
    %612 = vmatpush1.bf16.msra.mxu0 0
    %613 = vmatprep.subr.bf16.mxu0 0
    %614 = vmatpush1.bf16.msra.mxu0 0
    %615 = vmatprep.mubr.bf16.mxu0 0
    %616 = vmatmul.mubr.bf16.gmra.mrb[0].mxu0 %v581
    %v617 = vpop.f32.mrb[0].mxu0
    %v618 = vadd.f32 %v535, %v617
    %v619 = vpop.f32.mrb[0].mxu0
    %v620 = vadd.f32 %v539, %v619
    %v621 = vpop.f32.mrb[0].mxu0
    %v622 = vpop.f32.mrb[0].mxu0
    %623 = vdwg.mxu0
    %v624 = vadd.f32 %v530, %v618
    %v625 = vxor.u32 %v624, 2147483648
    %v626 = vmul.f32 %v625, 1.442695
    %v627 = vpow.pop %v626
    %v628 = vadd.f32 %v627, 1.0
    %v629 = vrcp.pop %v628
    %v630 = vmul.f32 1.0, %v629
    %v631 = vmul.f32 %v630, %v620
    %v632 = vadd.f32 %v531, %v631
    %v633 = vtanh.pop %v632
    %v634 = vsub.f32 1.0, %v630
    %636 = vrot.lane.b32.xlu0 %v633, 64
    %v637 = vpop.permute.xlu0 %636
    %v639 = vmul.f32 %v634, %v637
    %v640 = vmul.f32 %v630, 0.0
    %v641 = vadd.f32 %v639, %v640
    %v642 = vrot.slane %v459, 2
    %v643 = vrot.slane %v499, 2
    %644 = vrot.lane.b32.xlu0 %v642, 64
    %v645 = vpop.permute.xlu0 %644
    %646 = vrot.lane.b32.xlu0 %v643, 64
    %v647 = vpop.permute.xlu0 %646
    %v648 = vsel %vm526, %v645, %v647
    %v651 = vadd.f32 %v453, %v648
    %v652 = vadd.f32 %v455, %v647
    %v653 = vpack.c.bf16 %v641, %v641
    %655 = vrot.lane.b32.xlu0 %v653, 64
    %v656 = vpop.permute.xlu0 %655
    %v658 = vsel %vm526, %v656, 0
    %660 = vmatprep.subr.bf16.mxu0 %v565
    %661 = vmatpush1.bf16.msra.mxu0 %v564
    %662 = vmatprep.subr.bf16.mxu0 %v567
    %663 = vmatpush1.bf16.msra.mxu0 %v566
    %664 = vmatprep.subr.bf16.mxu0 %v569
    %665 = vmatpush1.bf16.msra.mxu0 %v568
    %666 = vmatprep.subr.bf16.mxu0 %v571
    %667 = vmatpush1.bf16.msra.mxu0 %v570
    %668 = vmatprep.subr.bf16.mxu0 0
    %669 = vmatpush1.bf16.msra.mxu0 0
    %670 = vmatprep.subr.bf16.mxu0 0
    %671 = vmatpush1.bf16.msra.mxu0 0
    %672 = vmatprep.subr.bf16.mxu0 0
    %673 = vmatpush1.bf16.msra.mxu0 0
    %674 = vmatprep.subr.bf16.mxu0 0
    %675 = vmatpush1.bf16.msra.mxu0 0
    %676 = vmatprep.subr.bf16.mxu0 0
    %677 = vmatpush1.bf16.msra.mxu0 0
    %678 = vmatprep.subr.bf16.mxu0 0
    %679 = vmatpush1.bf16.msra.mxu0 0
    %680 = vmatprep.subr.bf16.mxu0 0
    %681 = vmatpush1.bf16.msra.mxu0 0
    %682 = vmatprep.subr.bf16.mxu0 0
    %683 = vmatpush1.bf16.msra.mxu0 0
    %684 = vmatprep.subr.bf16.mxu0 0
    %685 = vmatpush1.bf16.msra.mxu0 0
    %686 = vmatprep.subr.bf16.mxu0 0
    %687 = vmatpush1.bf16.msra.mxu0 0
    %688 = vmatprep.subr.bf16.mxu0 0
    %689 = vmatpush1.bf16.msra.mxu0 0
    %690 = vmatprep.subr.bf16.mxu0 0
    %691 = vmatpush1.bf16.msra.mxu0 0
    %692 = vmatprep.mubr.bf16.mxu0 0
    %693 = vmatmul.mubr.bf16.gmra.mrb[0].mxu0 %v658
    %v694 = vpop.f32.mrb[0].mxu0
    %v695 = vadd.f32 %v535, %v694
    %v696 = vpop.f32.mrb[0].mxu0
    %v697 = vadd.f32 %v539, %v696
    %v698 = vpop.f32.mrb[0].mxu0
    %v699 = vpop.f32.mrb[0].mxu0
    %700 = vdwg.mxu0
    %v702 = vrot.slane %v695, 6
    %v704 = vadd.f32 %v651, %v702
    %v705 = vxor.u32 %v704, 2147483648
    %v706 = vmul.f32 %v705, 1.442695
    %v707 = vpow.pop %v706
    %v708 = vadd.f32 %v707, 1.0
    %v709 = vrcp.pop %v708
    %v710 = vmul.f32 1.0, %v709
    %v712 = vrot.slane %v697, 6
    %v714 = vmul.f32 %v710, %v712
    %v715 = vadd.f32 %v652, %v714
    %v716 = vtanh.pop %v715
    %v717 = vsub.f32 1.0, %v710
    %719 = vrot.lane.b32.xlu0 %v716, 64
    %v720 = vpop.permute.xlu0 %719
    %v722 = vmul.f32 %v717, %v720
    %v724 = vrot.slane %v641, 6
    %v726 = vmul.f32 %v710, %v724
    %v727 = vadd.f32 %v722, %v726
    %v728 = vpack.c.bf16 %v727, %v727
    %v730 = vrot.slane %v728, 1
    %731 = vrot.lane.b32.xlu0 %v730, 64
    %v732 = vpop.permute.xlu0 %731
    %v734 = vsel %vm526, %v732, 0
    %736 = vmatprep.subr.bf16.mxu0 %v565
    %737 = vmatpush1.bf16.msra.mxu0 %v564
    %738 = vmatprep.subr.bf16.mxu0 %v567
    %739 = vmatpush1.bf16.msra.mxu0 %v566
    %740 = vmatprep.subr.bf16.mxu0 %v569
    %741 = vmatpush1.bf16.msra.mxu0 %v568
    %742 = vmatprep.subr.bf16.mxu0 %v571
    %743 = vmatpush1.bf16.msra.mxu0 %v570
    %744 = vmatprep.subr.bf16.mxu0 0
    %745 = vmatpush1.bf16.msra.mxu0 0
    %746 = vmatprep.subr.bf16.mxu0 0
    %747 = vmatpush1.bf16.msra.mxu0 0
    %748 = vmatprep.subr.bf16.mxu0 0
    %749 = vmatpush1.bf16.msra.mxu0 0
    %750 = vmatprep.subr.bf16.mxu0 0
    %751 = vmatpush1.bf16.msra.mxu0 0
    %752 = vmatprep.subr.bf16.mxu0 0
    %753 = vmatpush1.bf16.msra.mxu0 0
    %754 = vmatprep.subr.bf16.mxu0 0
    %755 = vmatpush1.bf16.msra.mxu0 0
    %756 = vmatprep.subr.bf16.mxu0 0
    %757 = vmatpush1.bf16.msra.mxu0 0
    %758 = vmatprep.subr.bf16.mxu0 0
    %759 = vmatpush1.bf16.msra.mxu0 0
    %760 = vmatprep.subr.bf16.mxu0 0
    %761 = vmatpush1.bf16.msra.mxu0 0
    %762 = vmatprep.subr.bf16.mxu0 0
    %763 = vmatpush1.bf16.msra.mxu0 0
    %764 = vmatprep.subr.bf16.mxu0 0
    %765 = vmatpush1.bf16.msra.mxu0 0
    %766 = vmatprep.subr.bf16.mxu0 0
    %767 = vmatpush1.bf16.msra.mxu0 0
    %768 = vmatprep.mubr.bf16.mxu0 0
    %769 = vmatmul.mubr.bf16.gmra.mrb[0].mxu0 %v734
    %v770 = vpop.f32.mrb[0].mxu0
    %v771 = vadd.f32 %v535, %v770
    %v772 = vpop.f32.mrb[0].mxu0
    %v773 = vadd.f32 %v539, %v772
    %v774 = vpop.f32.mrb[0].mxu0
    %v775 = vpop.f32.mrb[0].mxu0
    %776 = vdwg.mxu0
    %v778 = vrot.slane %v771, 4
    %v780 = vadd.f32 %v530, %v778
    %v781 = vxor.u32 %v780, 2147483648
    %v782 = vmul.f32 %v781, 1.442695
    %v783 = vpow.pop %v782
    %v784 = vadd.f32 %v783, 1.0
    %v785 = vrcp.pop %v784
    %v786 = vmul.f32 1.0, %v785
    %v788 = vrot.slane %v773, 4
    %v790 = vmul.f32 %v786, %v788
    %v791 = vadd.f32 %v531, %v790
    %v792 = vtanh.pop %v791
    %v793 = vsub.f32 1.0, %v786
    %795 = vrot.lane.b32.xlu0 %v792, 64
    %v796 = vpop.permute.xlu0 %795
    %v798 = vmul.f32 %v793, %v796
    %v800 = vrot.slane %v727, 6
    %v802 = vmul.f32 %v786, %v800
    %v803 = vadd.f32 %v798, %v802
    %v804 = vpack.c.bf16 %v803, %v803
    %v806 = vrot.slane %v804, 2
    %807 = vrot.lane.b32.xlu0 %v806, 64
    %v808 = vpop.permute.xlu0 %807
    %v810 = vsel %vm526, %v808, 0
    %812 = vmatprep.subr.bf16.mxu0 %v565
    %813 = vmatpush1.bf16.msra.mxu0 %v564
    %814 = vmatprep.subr.bf16.mxu0 %v567
    %815 = vmatpush1.bf16.msra.mxu0 %v566
    %816 = vmatprep.subr.bf16.mxu0 %v569
    %817 = vmatpush1.bf16.msra.mxu0 %v568
    %818 = vmatprep.subr.bf16.mxu0 %v571
    %819 = vmatpush1.bf16.msra.mxu0 %v570
    %820 = vmatprep.subr.bf16.mxu0 0
    %821 = vmatpush1.bf16.msra.mxu0 0
    %822 = vmatprep.subr.bf16.mxu0 0
    %823 = vmatpush1.bf16.msra.mxu0 0
    %824 = vmatprep.subr.bf16.mxu0 0
    %825 = vmatpush1.bf16.msra.mxu0 0
    %826 = vmatprep.subr.bf16.mxu0 0
    %827 = vmatpush1.bf16.msra.mxu0 0
    %828 = vmatprep.subr.bf16.mxu0 0
    %829 = vmatpush1.bf16.msra.mxu0 0
    %830 = vmatprep.subr.bf16.mxu0 0
    %831 = vmatpush1.bf16.msra.mxu0 0
    %832 = vmatprep.subr.bf16.mxu0 0
    %833 = vmatpush1.bf16.msra.mxu0 0
    %834 = vmatprep.subr.bf16.mxu0 0
    %835 = vmatpush1.bf16.msra.mxu0 0
    %836 = vmatprep.subr.bf16.mxu0 0
    %837 = vmatpush1.bf16.msra.mxu0 0
    %838 = vmatprep.subr.bf16.mxu0 0
    %839 = vmatpush1.bf16.msra.mxu0 0
    %840 = vmatprep.subr.bf16.mxu0 0
    %841 = vmatpush1.bf16.msra.mxu0 0
    %842 = vmatprep.subr.bf16.mxu0 0
    %843 = vmatpush1.bf16.msra.mxu0 0
    %844 = vmatprep.mubr.bf16.mxu0 0
    %845 = vmatmul.mubr.bf16.gmra.mrb[0].mxu0 %v810
    %v846 = vpop.f32.mrb[0].mxu0
    %v847 = vadd.f32 %v535, %v846
    %v848 = vpop.f32.mrb[0].mxu0
    %v849 = vadd.f32 %v539, %v848
    %v850 = vpop.f32.mrb[0].mxu0
    %v851 = vpop.f32.mrb[0].mxu0
    %852 = vdwg.mxu0
    %v854 = vrot.slane %v847, 2
    %v856 = vadd.f32 %v651, %v854
    %v857 = vxor.u32 %v856, 2147483648
    %v858 = vmul.f32 %v857, 1.442695
    %v859 = vpow.pop %v858
    %v860 = vadd.f32 %v859, 1.0
    %v861 = vrcp.pop %v860
    %v862 = vmul.f32 1.0, %v861
    %v864 = vrot.slane %v849, 2
    %v866 = vmul.f32 %v862, %v864
    %v867 = vadd.f32 %v652, %v866
    %v868 = vtanh.pop %v867
    %v869 = vsub.f32 1.0, %v862
    %871 = vrot.lane.b32.xlu0 %v868, 64
    %v872 = vpop.permute.xlu0 %871
    %v874 = vmul.f32 %v869, %v872
    %v876 = vrot.slane %v803, 6
    %v878 = vmul.f32 %v862, %v876
    %v879 = vadd.f32 %v874, %v878
    %v882 = vrot.slane %v455, 6
    %v883 = vrot.slane %v496, 6
    %884 = vrot.lane.b32.xlu0 %v882, 64
    %v885 = vpop.permute.xlu0 %884
    %886 = vrot.lane.b32.xlu0 %v883, 64
    %v887 = vpop.permute.xlu0 %886
    %v888 = vsel %vm526, %v885, %v887
    %v891 = vadd.f32 %v457, %v888
    %v892 = vadd.f32 %v459, %v887
    %v893 = vpack.c.bf16 %v879, %v879
    %v895 = vrot.slane %v893, 3
    %896 = vrot.lane.b32.xlu0 %v895, 64
    %v897 = vpop.permute.xlu0 %896
    %v899 = vsel %vm526, %v897, 0
    %901 = vmatprep.subr.bf16.mxu0 %v565
    %902 = vmatpush1.bf16.msra.mxu0 %v564
    %903 = vmatprep.subr.bf16.mxu0 %v567
    %904 = vmatpush1.bf16.msra.mxu0 %v566
    %905 = vmatprep.subr.bf16.mxu0 %v569
    %906 = vmatpush1.bf16.msra.mxu0 %v568
    %907 = vmatprep.subr.bf16.mxu0 %v571
    %908 = vmatpush1.bf16.msra.mxu0 %v570
    %909 = vmatprep.subr.bf16.mxu0 0
    %910 = vmatpush1.bf16.msra.mxu0 0
    %911 = vmatprep.subr.bf16.mxu0 0
    %912 = vmatpush1.bf16.msra.mxu0 0
    %913 = vmatprep.subr.bf16.mxu0 0
    %914 = vmatpush1.bf16.msra.mxu0 0
    %915 = vmatprep.subr.bf16.mxu0 0
    %916 = vmatpush1.bf16.msra.mxu0 0
    %917 = vmatprep.subr.bf16.mxu0 0
    %918 = vmatpush1.bf16.msra.mxu0 0
    %919 = vmatprep.subr.bf16.mxu0 0
    %920 = vmatpush1.bf16.msra.mxu0 0
    %921 = vmatprep.subr.bf16.mxu0 0
    %922 = vmatpush1.bf16.msra.mxu0 0
    %923 = vmatprep.subr.bf16.mxu0 0
    %924 = vmatpush1.bf16.msra.mxu0 0
    %925 = vmatprep.subr.bf16.mxu0 0
    %926 = vmatpush1.bf16.msra.mxu0 0
    %927 = vmatprep.subr.bf16.mxu0 0
    %928 = vmatpush1.bf16.msra.mxu0 0
    %929 = vmatprep.subr.bf16.mxu0 0
    %930 = vmatpush1.bf16.msra.mxu0 0
    %931 = vmatprep.subr.bf16.mxu0 0
    %932 = vmatpush1.bf16.msra.mxu0 0
    %933 = vmatprep.mubr.bf16.mxu0 0
    %934 = vmatmul.mubr.bf16.gmra.mrb[0].mxu0 %v899
    %v935 = vpop.f32.mrb[0].mxu0
    %v936 = vadd.f32 %v535, %v935
    %v937 = vpop.f32.mrb[0].mxu0
    %v938 = vadd.f32 %v539, %v937
    %v939 = vpop.f32.mrb[0].mxu0
    %v940 = vpop.f32.mrb[0].mxu0
    %941 = vdwg.mxu0
    %v942 = vadd.f32 %v891, %v936
    %v943 = vxor.u32 %v942, 2147483648
    %v944 = vmul.f32 %v943, 1.442695
    %v945 = vpow.pop %v944
    %v946 = vadd.f32 %v945, 1.0
    %v947 = vrcp.pop %v946
    %v948 = vmul.f32 1.0, %v947
    %v949 = vmul.f32 %v948, %v938
    %v950 = vadd.f32 %v892, %v949
    %v951 = vtanh.pop %v950
    %v952 = vsub.f32 1.0, %v948
    %954 = vrot.lane.b32.xlu0 %v951, 64
    %v955 = vpop.permute.xlu0 %954
    %v957 = vmul.f32 %v952, %v955
    %v959 = vrot.slane %v879, 6
    %v961 = vmul.f32 %v948, %v959
    %v962 = vadd.f32 %v957, %v961
    %v963 = vrot.slane %v455, 2
    %v964 = vrot.slane %v496, 2
    %965 = vrot.lane.b32.xlu0 %v963, 64
    %v966 = vpop.permute.xlu0 %965
    %967 = vrot.lane.b32.xlu0 %v964, 64
    %v968 = vpop.permute.xlu0 %967
    %v969 = vsel %vm526, %v966, %v968
    %v972 = vadd.f32 %v457, %v969
    %v973 = vadd.f32 %v459, %v968
    %v974 = vpack.c.bf16 %v962, %v962
    %976 = vrot.lane.b32.xlu0 %v974, 64
    %v977 = vpop.permute.xlu0 %976
    %v979 = vsel %vm526, %v977, 0
    %981 = vmatprep.subr.bf16.mxu0 %v565
    %982 = vmatpush1.bf16.msra.mxu0 %v564
    %983 = vmatprep.subr.bf16.mxu0 %v567
    %984 = vmatpush1.bf16.msra.mxu0 %v566
    %985 = vmatprep.subr.bf16.mxu0 %v569
    %986 = vmatpush1.bf16.msra.mxu0 %v568
    %987 = vmatprep.subr.bf16.mxu0 %v571
    %988 = vmatpush1.bf16.msra.mxu0 %v570
    %989 = vmatprep.subr.bf16.mxu0 0
    %990 = vmatpush1.bf16.msra.mxu0 0
    %991 = vmatprep.subr.bf16.mxu0 0
    %992 = vmatpush1.bf16.msra.mxu0 0
    %993 = vmatprep.subr.bf16.mxu0 0
    %994 = vmatpush1.bf16.msra.mxu0 0
    %995 = vmatprep.subr.bf16.mxu0 0
    %996 = vmatpush1.bf16.msra.mxu0 0
    %997 = vmatprep.subr.bf16.mxu0 0
    %998 = vmatpush1.bf16.msra.mxu0 0
    %999 = vmatprep.subr.bf16.mxu0 0
    %1000 = vmatpush1.bf16.msra.mxu0 0
    %1001 = vmatprep.subr.bf16.mxu0 0
    %1002 = vmatpush1.bf16.msra.mxu0 0
    %1003 = vmatprep.subr.bf16.mxu0 0
    %1004 = vmatpush1.bf16.msra.mxu0 0
    %1005 = vmatprep.subr.bf16.mxu0 0
    %1006 = vmatpush1.bf16.msra.mxu0 0
    %1007 = vmatprep.subr.bf16.mxu0 0
    %1008 = vmatpush1.bf16.msra.mxu0 0
    %1009 = vmatprep.subr.bf16.mxu0 0
    %1010 = vmatpush1.bf16.msra.mxu0 0
    %1011 = vmatprep.subr.bf16.mxu0 0
    %1012 = vmatpush1.bf16.msra.mxu0 0
    %1013 = vmatprep.mubr.bf16.mxu0 0
    %1014 = vmatmul.mubr.bf16.gmra.mrb[0].mxu0 %v979
    %v1015 = vpop.f32.mrb[0].mxu0
    %v1016 = vadd.f32 %v535, %v1015
    %v1017 = vpop.f32.mrb[0].mxu0
    %v1018 = vadd.f32 %v539, %v1017
    %v1019 = vpop.f32.mrb[0].mxu0
    %v1020 = vpop.f32.mrb[0].mxu0
    %1021 = vdwg.mxu0
    %v1023 = vrot.slane %v1016, 6
    %v1025 = vadd.f32 %v972, %v1023
    %v1026 = vxor.u32 %v1025, 2147483648
    %v1027 = vmul.f32 %v1026, 1.442695
    %v1028 = vpow.pop %v1027
    %v1029 = vadd.f32 %v1028, 1.0
    %v1030 = vrcp.pop %v1029
    %v1031 = vmul.f32 1.0, %v1030
    %v1033 = vrot.slane %v1018, 6
    %v1035 = vmul.f32 %v1031, %v1033
    %v1036 = vadd.f32 %v973, %v1035
    %v1037 = vtanh.pop %v1036
    %v1038 = vsub.f32 1.0, %v1031
    %1040 = vrot.lane.b32.xlu0 %v1037, 64
    %v1041 = vpop.permute.xlu0 %1040
    %v1043 = vmul.f32 %v1038, %v1041
    %v1045 = vrot.slane %v962, 6
    %v1047 = vmul.f32 %v1031, %v1045
    %v1048 = vadd.f32 %v1043, %v1047
    %v1049 = vpack.c.bf16 %v1048, %v1048
    %v1051 = vrot.slane %v1049, 1
    %1052 = vrot.lane.b32.xlu0 %v1051, 64
    %v1053 = vpop.permute.xlu0 %1052
    %v1055 = vsel %vm526, %v1053, 0
    %1057 = vmatprep.subr.bf16.mxu0 %v565
    %1058 = vmatpush1.bf16.msra.mxu0 %v564
    %1059 = vmatprep.subr.bf16.mxu0 %v567
    %1060 = vmatpush1.bf16.msra.mxu0 %v566
    %1061 = vmatprep.subr.bf16.mxu0 %v569
    %1062 = vmatpush1.bf16.msra.mxu0 %v568
    %1063 = vmatprep.subr.bf16.mxu0 %v571
    %1064 = vmatpush1.bf16.msra.mxu0 %v570
    %1065 = vmatprep.subr.bf16.mxu0 0
    %1066 = vmatpush1.bf16.msra.mxu0 0
    %1067 = vmatprep.subr.bf16.mxu0 0
    %1068 = vmatpush1.bf16.msra.mxu0 0
    %1069 = vmatprep.subr.bf16.mxu0 0
    %1070 = vmatpush1.bf16.msra.mxu0 0
    %1071 = vmatprep.subr.bf16.mxu0 0
    %1072 = vmatpush1.bf16.msra.mxu0 0
    %1073 = vmatprep.subr.bf16.mxu0 0
    %1074 = vmatpush1.bf16.msra.mxu0 0
    %1075 = vmatprep.subr.bf16.mxu0 0
    %1076 = vmatpush1.bf16.msra.mxu0 0
    %1077 = vmatprep.subr.bf16.mxu0 0
    %1078 = vmatpush1.bf16.msra.mxu0 0
    %1079 = vmatprep.subr.bf16.mxu0 0
    %1080 = vmatpush1.bf16.msra.mxu0 0
    %1081 = vmatprep.subr.bf16.mxu0 0
    %1082 = vmatpush1.bf16.msra.mxu0 0
    %1083 = vmatprep.subr.bf16.mxu0 0
    %1084 = vmatpush1.bf16.msra.mxu0 0
    %1085 = vmatprep.subr.bf16.mxu0 0
    %1086 = vmatpush1.bf16.msra.mxu0 0
    %1087 = vmatprep.subr.bf16.mxu0 0
    %1088 = vmatpush1.bf16.msra.mxu0 0
    %1089 = vmatprep.mubr.bf16.mxu0 0
    %1090 = vmatmul.mubr.bf16.gmra.mrb[0].mxu0 %v1055
    %v1091 = vpop.f32.mrb[0].mxu0
    %v1092 = vadd.f32 %v535, %v1091
    %v1093 = vpop.f32.mrb[0].mxu0
    %v1094 = vadd.f32 %v539, %v1093
    %v1095 = vpop.f32.mrb[0].mxu0
    %v1096 = vpop.f32.mrb[0].mxu0
    %1097 = vdwg.mxu0
    %v1099 = vrot.slane %v1092, 4
    %v1101 = vadd.f32 %v891, %v1099
    %v1102 = vxor.u32 %v1101, 2147483648
    %v1103 = vmul.f32 %v1102, 1.442695
    %v1104 = vpow.pop %v1103
    %v1105 = vadd.f32 %v1104, 1.0
    %v1106 = vrcp.pop %v1105
    %v1107 = vmul.f32 1.0, %v1106
    %v1109 = vrot.slane %v1094, 4
    %v1111 = vmul.f32 %v1107, %v1109
    %v1112 = vadd.f32 %v892, %v1111
    %v1113 = vtanh.pop %v1112
    %v1114 = vsub.f32 1.0, %v1107
    %1116 = vrot.lane.b32.xlu0 %v1113, 64
    %v1117 = vpop.permute.xlu0 %1116
    %v1119 = vmul.f32 %v1114, %v1117
    %v1121 = vrot.slane %v1048, 6
    %v1123 = vmul.f32 %v1107, %v1121
    %v1124 = vadd.f32 %v1119, %v1123
    %v1125 = vpack.c.bf16 %v1124, %v1124
    %v1127 = vrot.slane %v1125, 2
    %1128 = vrot.lane.b32.xlu0 %v1127, 64
    %v1129 = vpop.permute.xlu0 %1128
    %v1131 = vsel %vm526, %v1129, 0
    %1133 = vmatprep.subr.bf16.mxu0 %v565
    %1134 = vmatpush1.bf16.msra.mxu0 %v564
    %1135 = vmatprep.subr.bf16.mxu0 %v567
    %1136 = vmatpush1.bf16.msra.mxu0 %v566
    %1137 = vmatprep.subr.bf16.mxu0 %v569
    %1138 = vmatpush1.bf16.msra.mxu0 %v568
    %1139 = vmatprep.subr.bf16.mxu0 %v571
    %1140 = vmatpush1.bf16.msra.mxu0 %v570
    %1141 = vmatprep.subr.bf16.mxu0 0
    %1142 = vmatpush1.bf16.msra.mxu0 0
    %1143 = vmatprep.subr.bf16.mxu0 0
    %1144 = vmatpush1.bf16.msra.mxu0 0
    %1145 = vmatprep.subr.bf16.mxu0 0
    %1146 = vmatpush1.bf16.msra.mxu0 0
    %1147 = vmatprep.subr.bf16.mxu0 0
    %1148 = vmatpush1.bf16.msra.mxu0 0
    %1149 = vmatprep.subr.bf16.mxu0 0
    %1150 = vmatpush1.bf16.msra.mxu0 0
    %1151 = vmatprep.subr.bf16.mxu0 0
    %1152 = vmatpush1.bf16.msra.mxu0 0
    %1153 = vmatprep.subr.bf16.mxu0 0
    %1154 = vmatpush1.bf16.msra.mxu0 0
    %1155 = vmatprep.subr.bf16.mxu0 0
    %1156 = vmatpush1.bf16.msra.mxu0 0
    %1157 = vmatprep.subr.bf16.mxu0 0
    %1158 = vmatpush1.bf16.msra.mxu0 0
    %1159 = vmatprep.subr.bf16.mxu0 0
    %1160 = vmatpush1.bf16.msra.mxu0 0
    %1161 = vmatprep.subr.bf16.mxu0 0
    %1162 = vmatpush1.bf16.msra.mxu0 0
    %1163 = vmatprep.subr.bf16.mxu0 0
    %1164 = vmatpush1.bf16.msra.mxu0 0
    %1165 = vmatprep.mubr.bf16.mxu0 0
    %1166 = vmatmul.mubr.bf16.gmra.mrb[0].mxu0 %v1131
    %v1167 = vpop.f32.mrb[0].mxu0
    %v1168 = vadd.f32 %v535, %v1167
    %v1169 = vpop.f32.mrb[0].mxu0
    %v1170 = vadd.f32 %v539, %v1169
    %v1171 = vpop.f32.mrb[0].mxu0
    %v1172 = vpop.f32.mrb[0].mxu0
    %1173 = vdwg.mxu0
    %v1175 = vrot.slane %v1168, 2
    %v1177 = vadd.f32 %v972, %v1175
    %v1178 = vxor.u32 %v1177, 2147483648
    %v1179 = vmul.f32 %v1178, 1.442695
    %v1180 = vpow.pop %v1179
    %v1181 = vadd.f32 %v1180, 1.0
    %v1182 = vrcp.pop %v1181
    %v1183 = vmul.f32 1.0, %v1182
    %v1185 = vrot.slane %v1170, 2
    %v1187 = vmul.f32 %v1183, %v1185
    %v1188 = vadd.f32 %v973, %v1187
    %v1189 = vtanh.pop %v1188
    %v1190 = vsub.f32 1.0, %v1183
    %1192 = vrot.lane.b32.xlu0 %v1189, 64
    %v1193 = vpop.permute.xlu0 %1192
    %v1195 = vmul.f32 %v1190, %v1193
    %v1197 = vrot.slane %v1124, 6
    %v1199 = vmul.f32 %v1183, %v1197
    %v1200 = vadd.f32 %v1195, %v1199
    %1201 = vrot.lane.b32.xlu0 %v641, 64
    %v1202 = vpop.permute.xlu0 %1201
    %v1205 = vrot.slane %v1200, 6
    %1206 = vrot.lane.b32.xlu0 %v1205, 64
    %v1207 = vpop.permute.xlu0 %1206
    %vm1209 = vcmask 261120
    %v1210 = vsel %vm1209, %v1202, %v1207
    %1211 = vrot.lane.b32.xlu0 %v727, 64
    %v1212 = vpop.permute.xlu0 %1211
    %v1214 = vrot.slane %v1124, 2
    %1215 = vrot.lane.b32.xlu0 %v1214, 64
    %v1216 = vpop.permute.xlu0 %1215
    %v1218 = vsel %vm1209, %v1212, %v1216
    %1219 = vrot.lane.b32.xlu0 %v803, 64
    %v1220 = vpop.permute.xlu0 %1219
    %1222 = vrot.lane.b32.xlu0 %v1121, 64
    %v1223 = vpop.permute.xlu0 %1222
    %v1225 = vsel %vm1209, %v1220, %v1223
    %1226 = vrot.lane.b32.xlu0 %v879, 64
    %v1227 = vpop.permute.xlu0 %1226
    %v1229 = vrot.slane %v962, 2
    %1230 = vrot.lane.b32.xlu0 %v1229, 64
    %v1231 = vpop.permute.xlu0 %1230
    %v1233 = vsel %vm1209, %v1227, %v1231
    %1234 = vrot.lane.b32.xlu0 %v962, 64
    %v1235 = vpop.permute.xlu0 %1234
    %1237 = vrot.lane.b32.xlu0 %v959, 64
    %v1238 = vpop.permute.xlu0 %1237
    %v1240 = vsel %vm1209, %v1235, %v1238
    %1241 = vrot.lane.b32.xlu0 %v1048, 64
    %v1242 = vpop.permute.xlu0 %1241
    %v1244 = vrot.slane %v803, 2
    %1245 = vrot.lane.b32.xlu0 %v1244, 64
    %v1246 = vpop.permute.xlu0 %1245
    %v1248 = vsel %vm1209, %v1242, %v1246
    %1249 = vrot.lane.b32.xlu0 %v1124, 64
    %v1250 = vpop.permute.xlu0 %1249
    %1252 = vrot.lane.b32.xlu0 %v800, 64
    %v1253 = vpop.permute.xlu0 %1252
    %v1255 = vsel %vm1209, %v1250, %v1253
    %1256 = vrot.lane.b32.xlu0 %v1200, 64
    %v1257 = vpop.permute.xlu0 %1256
    %v1259 = vrot.slane %v641, 2
    %1260 = vrot.lane.b32.xlu0 %v1259, 64
    %v1261 = vpop.permute.xlu0 %1260
    %v1263 = vsel %vm1209, %v1257, %v1261
    %v1265 = vrot.slane %v1218, 1
    %v1268 = vrot.slane %v1225, 2
    %v1271 = vrot.slane %v1233, 3
    %v1274 = vrot.slane %v1240, 4
    %v1277 = vrot.slane %v1248, 5
    %v1280 = vrot.slane %v1255, 6
    %v1283 = vrot.slane %v1263, 7
    %v1286 = vrot.slane %v1210, 1
    %v1288 = vrot.slane %v1218, 2
    %v1290 = vrot.slane %v1225, 3
    %v1292 = vrot.slane %v1233, 4
    %v1294 = vrot.slane %v1240, 5
    %v1296 = vrot.slane %v1248, 6
    %v1298 = vrot.slane %v1255, 7
    %vm1300 = vcmask 1040384
    %v1301 = vsel %vm1300, %v1210, %v1265
    %vm1302 = vcmask 1041408
    %v1303 = vsel %vm1302, %v1301, %v1268
    %vm1304 = vcmask 1042432
    %v1305 = vsel %vm1304, %v1303, %v1271
    %vm1306 = vcmask 1043456
    %v1307 = vsel %vm1306, %v1305, %v1274
    %vm1308 = vcmask 1044480
    %v1309 = vsel %vm1308, %v1307, %v1277
    %vm1310 = vcmask 1045504
    %v1311 = vsel %vm1310, %v1309, %v1280
    %vm1312 = vcmask 1046528
    %v1313 = vsel %vm1312, %v1311, %v1283
    %v1314 = vsel %vm1300, %v1286, %v1288
    %v1315 = vsel %vm1302, %v1314, %v1290
    %v1316 = vsel %vm1304, %v1315, %v1292
    %v1317 = vsel %vm1306, %v1316, %v1294
    %v1318 = vsel %vm1308, %v1317, %v1296
    %v1319 = vsel %vm1310, %v1318, %v1298
    %v1320 = vsel %vm1312, %v1319, %v1263
    %v1321 = vpack.c.bf16 %v1320, %v1313
    %v1322 = vlaneseq
    %v1323 = vshrl.u32 %v1322, 7
    %v1324 = vsub.s32 2, %v1323
    %v1325 = vrot.slane %v117, %v1324
    %v1334 = vunpack.c.l.b16 %v510
    %v1335 = vunpack.c.l.b16 %v511
    %v1336 = vunpack.c.l.b16 %v512
    %v1337 = vunpack.c.l.b16 %v513
    %v1338 = vunpack.c.l.b16 %v514
    %v1339 = vunpack.c.l.b16 %v515
    %v1340 = vunpack.c.l.b16 %v516
    %v1341 = vunpack.c.l.b16 %v517
    %v1342 = vpack.c.b16 %v1335, %v1334
    %v1343 = vpack.c.b16 %v1337, %v1336
    %v1344 = vpack.c.b16 %v1339, %v1338
    %v1345 = vpack.c.b16 %v1341, %v1340
    %v1351 = vsel %vm526, %v1321, 0
    %1353 = vmatprep.subr.bf16.mxu0 0
    %1354 = vmatpush1.bf16.msra.mxu0 %v1342
    %1355 = vmatprep.subr.bf16.mxu0 0
    %1356 = vmatpush1.bf16.msra.mxu0 %v1343
    %1357 = vmatprep.subr.bf16.mxu0 0
    %1358 = vmatpush1.bf16.msra.mxu0 %v1344
    %1359 = vmatprep.subr.bf16.mxu0 0
    %1360 = vmatpush1.bf16.msra.mxu0 %v1345
    %1361 = vmatprep.subr.bf16.mxu0 0
    %1362 = vmatpush1.bf16.msra.mxu0 0
    %1363 = vmatprep.subr.bf16.mxu0 0
    %1364 = vmatpush1.bf16.msra.mxu0 0
    %1365 = vmatprep.subr.bf16.mxu0 0
    %1366 = vmatpush1.bf16.msra.mxu0 0
    %1367 = vmatprep.subr.bf16.mxu0 0
    %1368 = vmatpush1.bf16.msra.mxu0 0
    %1369 = vmatprep.subr.bf16.mxu0 0
    %1370 = vmatpush1.bf16.msra.mxu0 0
    %1371 = vmatprep.subr.bf16.mxu0 0
    %1372 = vmatpush1.bf16.msra.mxu0 0
    %1373 = vmatprep.subr.bf16.mxu0 0
    %1374 = vmatpush1.bf16.msra.mxu0 0
    %1375 = vmatprep.subr.bf16.mxu0 0
    %1376 = vmatpush1.bf16.msra.mxu0 0
    %1377 = vmatprep.subr.bf16.mxu0 0
    %1378 = vmatpush1.bf16.msra.mxu0 0
    %1379 = vmatprep.subr.bf16.mxu0 0
    %1380 = vmatpush1.bf16.msra.mxu0 0
    %1381 = vmatprep.subr.bf16.mxu0 0
    %1382 = vmatpush1.bf16.msra.mxu0 0
    %1383 = vmatprep.subr.bf16.mxu0 0
    %1384 = vmatpush1.bf16.msra.mxu0 0
    %1385 = vmatprep.mubr.bf16.mxu0 0
    %1386 = vmatmul.mubr.bf16.gmra.mrb[0].mxu0 %v1351
    %v1387 = vpop.f32.mrb[0].mxu0
    %v1388 = vadd.f32 %v1325, %v1387
    %v1389 = vpop.f32.mrb[0].mxu0
    %v1390 = vpop.f32.mrb[0].mxu0
    %v1391 = vadd.f32 %v1325, %v1390
    %v1392 = vpop.f32.mrb[0].mxu0
    %1393 = vdwg.mxu0
    %1394 = vst [vmem:[#allocation13] sm:$0xff] %v1388
    %1395 = vst [vmem:[#allocation13 + $0x8] sm:$0xff] %v1391
    %1396 = vmax.xlane.f32.xlu0 %v1388
    %v1397 = vpop.xlane.xlu0 %1396
    %1398 = vmax.xlane.f32.xlu0 %v1391
    %v1399 = vpop.xlane.xlu0 %1398
    %v1400 = vsub.f32 %v1388, %v1397
    %v1401 = vsub.f32 %v1391, %v1399
    %v1402 = vmul.f32 %v1400, 1.442695
    %v1403 = vpow.pop %v1402
    %v1404 = vmul.f32 %v1401, 1.442695
    %v1405 = vpow.pop %v1404
    %1406 = vadd.xlane.f32.xlu0 %v1403
    %v1407 = vpop.xlane.xlu0 %1406
    %1408 = vadd.xlane.f32.xlu0 %v1405
    %v1409 = vpop.xlane.xlu0 %1408
    %v1410 = vlog2.pop %v1407
    %v1411 = vmul.f32 %v1410, 0.6931472
    %v1412 = vlog2.pop %v1409
    %v1413 = vmul.f32 %v1412, 0.6931472
    %v1414 = vadd.f32 %v1397, %v1411
    %v1415 = vadd.f32 %v1399, %v1413
    %v1416 = vsub.f32 %v1397, %v1414
    %v1417 = vsub.f32 %v1399, %v1415
    %v1418 = vmul.f32 %v1416, 1.442695
    %v1419 = vpow.pop %v1418
    %v1420 = vmul.f32 %v1417, 1.442695
    %v1421 = vpow.pop %v1420
    %vm1422 = vcmp.eq.f32.partialorder %v1388, %v1397
    %vm1423 = vcmp.eq.f32.partialorder %v1391, %v1399
    %v1424 = vsel %vm1422, %v126, 128
    %v1425 = vsel %vm1423, %v126, 128
    %v1426 = vand.u32 %v1424, 65535
    %v1427 = vshra.s32 %v1424, 16
    %v1428 = vcvt.s32.f32 %v1426
    %v1429 = vcvt.s32.f32 %v1427
    %1430 = vmin.xlane.f32.xlu0 %v1429
    %v1431 = vpop.xlane.xlu0 %1430
    %vm1432 = vcmp.eq.f32.partialorder %v1429, %v1431
    %v1433 = vsel %vm1432, %v1428, inf
    %1434 = vmin.xlane.f32.xlu0 %v1433
    %v1435 = vpop.xlane.xlu0 %1434
    %v1436 = vcvt.f32.s32 %v1435
    %v1437 = vcvt.f32.s32 %v1431
    %v1438 = vshll.u32 %v1437, 16
    %v1439 = vadd.s32 %v1438, %v1436
    %v1440 = vand.u32 %v1425, 65535
    %v1441 = vshra.s32 %v1425, 16
    %v1442 = vcvt.s32.f32 %v1440
    %v1443 = vcvt.s32.f32 %v1441
    %1444 = vmin.xlane.f32.xlu0 %v1443
    %v1445 = vpop.xlane.xlu0 %1444
    %vm1446 = vcmp.eq.f32.partialorder %v1443, %v1445
    %v1447 = vsel %vm1446, %v1442, inf
    %1448 = vmin.xlane.f32.xlu0 %v1447
    %v1449 = vpop.xlane.xlu0 %1448
    %v1450 = vcvt.f32.s32 %v1449
    %v1451 = vcvt.f32.s32 %v1445
    %v1452 = vshll.u32 %v1451, 16
    %v1453 = vadd.s32 %v1452, %v1450
    %vm1454 = vcmp.gt.f32.partialorder %v1419, 0.3
    %vm1455 = vcmp.gt.f32.partialorder %v1421, 0.3
    %v1456 = vsel %vm1454, 1, 0
    %v1457 = vsel %vm1455, 1, 0
    %v1458 = vmul.u32 %v1439, %v1456
    %v1459 = vmul.u32 %v1453, %v1457
    %vm1460 = vcmp.eq.s32.totalorder %v1458, 0
    %vm1461 = vcmp.eq.s32.totalorder %v1459, 0
    %v1462 = vsel %vm1460, 1, %v1458
    %v1463 = vsel %vm1461, 1, %v1459
    %vm1464 = vcmp.eq.s32.totalorder %v1462, %v126
    %vm1465 = vcmp.eq.s32.totalorder %v1463, %v126
    %v1466 = vsel %vm1464, 1, 0
    %v1467 = vsel %vm1465, 1, 0
    %v1468 = vcvt.s32.f32 %v1466
    %v1469 = vcvt.s32.f32 %v1467
    %v1470 = vpack.c.bf16 %v1469, %v1468
    %v1471 = vld [vmem:[#allocation5 + $0x40] sm:$0xf]
    %v1472 = vld [vmem:[#allocation5 + $0x44] sm:$0xf]
    %v1473 = vld [vmem:[#allocation5 + $0x48] sm:$0xf]
    %v1474 = vld [vmem:[#allocation5 + $0x4c] sm:$0xf]
    %v1475 = vld [vmem:[#allocation5 + $0x50] sm:$0xf]
    %v1476 = vld [vmem:[#allocation5 + $0x54] sm:$0xf]
    %v1477 = vld [vmem:[#allocation5 + $0x58] sm:$0xf]
    %v1478 = vld [vmem:[#allocation5 + $0x5c] sm:$0xf]
    %v1479 = vld [vmem:[#allocation5 + $0x60] sm:$0xf]
    %v1480 = vld [vmem:[#allocation5 + $0x64] sm:$0xf]
    %v1481 = vld [vmem:[#allocation5 + $0x68] sm:$0xf]
    %v1482 = vld [vmem:[#allocation5 + $0x6c] sm:$0xf]
    %v1483 = vld [vmem:[#allocation5 + $0x70] sm:$0xf]
    %v1484 = vld [vmem:[#allocation5 + $0x74] sm:$0xf]
    %v1485 = vld [vmem:[#allocation5 + $0x78] sm:$0xf]
    %v1486 = vld [vmem:[#allocation5 + $0x7c] sm:$0xf]
    %v1503 = vunpack.c.l.b16 %v1471
    %v1504 = vunpack.c.l.b16 %v1472
    %v1505 = vunpack.c.l.b16 %v1473
    %v1506 = vunpack.c.l.b16 %v1474
    %v1507 = vunpack.c.l.b16 %v1475
    %v1508 = vunpack.c.l.b16 %v1476
    %v1509 = vunpack.c.l.b16 %v1477
    %v1510 = vunpack.c.l.b16 %v1478
    %v1511 = vunpack.c.l.b16 %v1479
    %v1512 = vunpack.c.l.b16 %v1480
    %v1513 = vunpack.c.l.b16 %v1481
    %v1514 = vunpack.c.l.b16 %v1482
    %v1515 = vunpack.c.l.b16 %v1483
    %v1516 = vunpack.c.l.b16 %v1484
    %v1517 = vunpack.c.l.b16 %v1485
    %v1518 = vunpack.c.l.b16 %v1486
    %v1519 = vpack.c.b16 %v1504, %v1503
    %v1520 = vpack.c.b16 %v1506, %v1505
    %v1521 = vpack.c.b16 %v1508, %v1507
    %v1522 = vpack.c.b16 %v1510, %v1509
    %v1523 = vpack.c.b16 %v1512, %v1511
    %v1524 = vpack.c.b16 %v1514, %v1513
    %v1525 = vpack.c.b16 %v1516, %v1515
    %v1526 = vpack.c.b16 %v1518, %v1517
    %1535 = vmatprep.subr.bf16.mxu0 0
    %1536 = vmatpush1.bf16.msra.mxu0 %v1519
    %1537 = vmatprep.subr.bf16.mxu0 0
    %1538 = vmatpush1.bf16.msra.mxu0 %v1520
    %1539 = vmatprep.subr.bf16.mxu0 0
    %1540 = vmatpush1.bf16.msra.mxu0 %v1521
    %1541 = vmatprep.subr.bf16.mxu0 0
    %1542 = vmatpush1.bf16.msra.mxu0 %v1522
    %1543 = vmatprep.subr.bf16.mxu0 0
    %1544 = vmatpush1.bf16.msra.mxu0 %v1523
    %1545 = vmatprep.subr.bf16.mxu0 0
    %1546 = vmatpush1.bf16.msra.mxu0 %v1524
    %1547 = vmatprep.subr.bf16.mxu0 0
    %1548 = vmatpush1.bf16.msra.mxu0 %v1525
    %1549 = vmatprep.subr.bf16.mxu0 0
    %1550 = vmatpush1.bf16.msra.mxu0 %v1526
    %1551 = vmatprep.subr.bf16.mxu0 0
    %1552 = vmatpush1.bf16.msra.mxu0 0
    %1553 = vmatprep.subr.bf16.mxu0 0
    %1554 = vmatpush1.bf16.msra.mxu0 0
    %1555 = vmatprep.subr.bf16.mxu0 0
    %1556 = vmatpush1.bf16.msra.mxu0 0
    %1557 = vmatprep.subr.bf16.mxu0 0
    %1558 = vmatpush1.bf16.msra.mxu0 0
    %1559 = vmatprep.subr.bf16.mxu0 0
    %1560 = vmatpush1.bf16.msra.mxu0 0
    %1561 = vmatprep.subr.bf16.mxu0 0
    %1562 = vmatpush1.bf16.msra.mxu0 0
    %1563 = vmatprep.subr.bf16.mxu0 0
    %1564 = vmatpush1.bf16.msra.mxu0 0
    %1565 = vmatprep.subr.bf16.mxu0 0
    %1566 = vmatpush1.bf16.msra.mxu0 0
    %1567 = vmatprep.mubr.bf16.mxu0 0
    %1568 = vmatmul.mubr.bf16.gmra.mrb[0].mxu0 %v1470
    %v1569 = vpop.f32.mrb[0].mxu0
    %v1570 = vadd.f32 %v121, %v1569
    %v1571 = vpop.f32.mrb[0].mxu0
    %v1572 = vpop.f32.mrb[0].mxu0
    %v1573 = vadd.f32 %v122, %v1572
    %v1574 = vpop.f32.mrb[0].mxu0
    %1575 = vdwg.mxu0
    %v1576 = vpack.c.bf16 %v1573, %v1570
    %v1577 = vld [vmem:[#allocation10] sm:$0xff]
    %v1578 = vld [vmem:[#allocation10 + $0x8] sm:$0xf]
    %v1579 = vld [vmem:[#allocation10 + $0x1c] sm:$0xff]
    %v1580 = vld [vmem:[#allocation10 + $0x24] sm:$0xf]
    %v1581 = vld [vmem:[#allocation10 + $0x38] sm:$0xff]
    %v1582 = vld [vmem:[#allocation10 + $0x40] sm:$0xf]
    %v1583 = vld [vmem:[#allocation10 + $0x54] sm:$0xff]
    %v1584 = vld [vmem:[#allocation10 + $0x5c] sm:$0xf]
    %v1585 = vld [vmem:[#allocation10 + $0x70] sm:$0xff]
    %v1586 = vld [vmem:[#allocation10 + $0x78] sm:$0xf]
    %v1587 = vld [vmem:[#allocation10 + $0x8c] sm:$0xff]
    %v1588 = vld [vmem:[#allocation10 + $0x94] sm:$0xf]
    %v1589 = vld [vmem:[#allocation10 + $0xa8] sm:$0xff]
    %v1590 = vld [vmem:[#allocation10 + $0xb0] sm:$0xf]
    %v1591 = vld [vmem:[#allocation10 + $0xc4] sm:$0xff]
    %v1592 = vld [vmem:[#allocation10 + $0xcc] sm:$0xf]
    %v1593 = vld [vmem:[#allocation10 + $0xe0] sm:$0xff]
    %v1594 = vld [vmem:[#allocation10 + $0xe8] sm:$0xf]
    %v1595 = vld [vmem:[#allocation10 + $0xfc] sm:$0xff]
    %v1596 = vld [vmem:[#allocation10 + $0x104] sm:$0xf]
    %v1597 = vld [vmem:[#allocation10 + $0x118] sm:$0xff]
    %v1598 = vld [vmem:[#allocation10 + $0x120] sm:$0xf]
    %v1599 = vld [vmem:[#allocation10 + $0x134] sm:$0xff]
    %v1600 = vld [vmem:[#allocation10 + $0x13c] sm:$0xf]
    %v1601 = vld [vmem:[#allocation10 + $0x150] sm:$0xff]
    %v1602 = vld [vmem:[#allocation10 + $0x158] sm:$0xf]
    %v1603 = vld [vmem:[#allocation10 + $0x16c] sm:$0xff]
    %v1604 = vld [vmem:[#allocation10 + $0x174] sm:$0xf]
    %v1605 = vld [vmem:[#allocation10 + $0x188] sm:$0xff]
    %v1606 = vld [vmem:[#allocation10 + $0x190] sm:$0xf]
    %v1607 = vld [vmem:[#allocation10 + $0x1a4] sm:$0xff]
    %v1608 = vld [vmem:[#allocation10 + $0x1ac] sm:$0xf]
    %v1609 = vlaneseq
    %v1610 = vshrl.u32 %v1609, 7
    %v1611 = vsub.s32 3, %v1610
    %v1612 = vrot.slane %v117, %v1611
    %v1613 = vlaneseq
    %v1614 = vshrl.u32 %v1613, 7
    %v1615 = vsub.s32 3, %v1614
    %v1616 = vrot.slane %v118, %v1615
    %v1617 = vlaneseq
    %v1618 = vshrl.u32 %v1617, 7
    %v1619 = vsub.s32 3, %v1618
    %v1620 = vrot.slane %v119, %v1619
    %v1653 = vunpack.c.l.b16 %v1577
    %v1654 = vunpack.c.h.b16 %v1577
    %v1655 = vunpack.c.l.b16 %v1578
    %v1656 = vunpack.c.l.b16 %v1579
    %v1657 = vunpack.c.h.b16 %v1579
    %v1658 = vunpack.c.l.b16 %v1580
    %v1659 = vunpack.c.l.b16 %v1581
    %v1660 = vunpack.c.h.b16 %v1581
    %v1661 = vunpack.c.l.b16 %v1582
    %v1662 = vunpack.c.l.b16 %v1583
    %v1663 = vunpack.c.h.b16 %v1583
    %v1664 = vunpack.c.l.b16 %v1584
    %v1665 = vunpack.c.l.b16 %v1585
    %v1666 = vunpack.c.h.b16 %v1585
    %v1667 = vunpack.c.l.b16 %v1586
    %v1668 = vunpack.c.l.b16 %v1587
    %v1669 = vunpack.c.h.b16 %v1587
    %v1670 = vunpack.c.l.b16 %v1588
    %v1671 = vunpack.c.l.b16 %v1589
    %v1672 = vunpack.c.h.b16 %v1589
    %v1673 = vunpack.c.l.b16 %v1590
    %v1674 = vunpack.c.l.b16 %v1591
    %v1675 = vunpack.c.h.b16 %v1591
    %v1676 = vunpack.c.l.b16 %v1592
    %v1677 = vunpack.c.l.b16 %v1593
    %v1678 = vunpack.c.h.b16 %v1593
    %v1679 = vunpack.c.l.b16 %v1594
    %v1680 = vunpack.c.l.b16 %v1595
    %v1681 = vunpack.c.h.b16 %v1595
    %v1682 = vunpack.c.l.b16 %v1596
    %v1683 = vunpack.c.l.b16 %v1597
    %v1684 = vunpack.c.h.b16 %v1597
    %v1685 = vunpack.c.l.b16 %v1598
    %v1686 = vunpack.c.l.b16 %v1599
    %v1687 = vunpack.c.h.b16 %v1599
    %v1688 = vunpack.c.l.b16 %v1600
    %v1689 = vunpack.c.l.b16 %v1601
    %v1690 = vunpack.c.h.b16 %v1601
    %v1691 = vunpack.c.l.b16 %v1602
    %v1692 = vunpack.c.l.b16 %v1603
    %v1693 = vunpack.c.h.b16 %v1603
    %v1694 = vunpack.c.l.b16 %v1604
    %v1695 = vunpack.c.l.b16 %v1605
    %v1696 = vunpack.c.h.b16 %v1605
    %v1697 = vunpack.c.l.b16 %v1606
    %v1698 = vunpack.c.l.b16 %v1607
    %v1699 = vunpack.c.h.b16 %v1607
    %v1700 = vunpack.c.l.b16 %v1608
    %v1701 = vpack.c.b16 %v1656, %v1653
    %v1702 = vpack.c.b16 %v1657, %v1654
    %v1703 = vpack.c.b16 %v1658, %v1655
    %v1704 = vpack.c.b16 %v1662, %v1659
    %v1705 = vpack.c.b16 %v1663, %v1660
    %v1706 = vpack.c.b16 %v1664, %v1661
    %v1707 = vpack.c.b16 %v1668, %v1665
    %v1708 = vpack.c.b16 %v1669, %v1666
    %v1709 = vpack.c.b16 %v1670, %v1667
    %v1710 = vpack.c.b16 %v1674, %v1671
    %v1711 = vpack.c.b16 %v1675, %v1672
    %v1712 = vpack.c.b16 %v1676, %v1673
    %v1713 = vpack.c.b16 %v1680, %v1677
    %v1714 = vpack.c.b16 %v1681, %v1678
    %v1715 = vpack.c.b16 %v1682, %v1679
    %v1716 = vpack.c.b16 %v1686, %v1683
    %v1717 = vpack.c.b16 %v1687, %v1684
    %v1718 = vpack.c.b16 %v1688, %v1685
    %v1719 = vpack.c.b16 %v1692, %v1689
    %v1720 = vpack.c.b16 %v1693, %v1690
    %v1721 = vpack.c.b16 %v1694, %v1691
    %v1722 = vpack.c.b16 %v1698, %v1695
    %v1723 = vpack.c.b16 %v1699, %v1696
    %v1724 = vpack.c.b16 %v1700, %v1697
    %1749 = vmatprep.subr.bf16.mxu0 %v1702
    %1750 = vmatpush1.bf16.msra.mxu0 %v1701
    %1751 = vmatprep.subr.bf16.mxu0 %v1705
    %1752 = vmatpush1.bf16.msra.mxu0 %v1704
    %1753 = vmatprep.subr.bf16.mxu0 %v1708
    %1754 = vmatpush1.bf16.msra.mxu0 %v1707
    %1755 = vmatprep.subr.bf16.mxu0 %v1711
    %1756 = vmatpush1.bf16.msra.mxu0 %v1710
    %1757 = vmatprep.subr.bf16.mxu0 %v1714
    %1758 = vmatpush1.bf16.msra.mxu0 %v1713
    %1759 = vmatprep.subr.bf16.mxu0 %v1717
    %1760 = vmatpush1.bf16.msra.mxu0 %v1716
    %1761 = vmatprep.subr.bf16.mxu0 %v1720
    %1762 = vmatpush1.bf16.msra.mxu0 %v1719
    %1763 = vmatprep.subr.bf16.mxu0 %v1723
    %1764 = vmatpush1.bf16.msra.mxu0 %v1722
    %1765 = vmatprep.subr.bf16.mxu0 0
    %1766 = vmatpush1.bf16.msra.mxu0 0
    %1767 = vmatprep.subr.bf16.mxu0 0
    %1768 = vmatpush1.bf16.msra.mxu0 0
    %1769 = vmatprep.subr.bf16.mxu0 0
    %1770 = vmatpush1.bf16.msra.mxu0 0
    %1771 = vmatprep.subr.bf16.mxu0 0
    %1772 = vmatpush1.bf16.msra.mxu0 0
    %1773 = vmatprep.subr.bf16.mxu0 0
    %1774 = vmatpush1.bf16.msra.mxu0 0
    %1775 = vmatprep.subr.bf16.mxu0 0
    %1776 = vmatpush1.bf16.msra.mxu0 0
    %1777 = vmatprep.subr.bf16.mxu0 0
    %1778 = vmatpush1.bf16.msra.mxu0 0
    %1779 = vmatprep.subr.bf16.mxu0 0
    %1780 = vmatpush1.bf16.msra.mxu0 0
    %1781 = vmatprep.mubr.bf16.mxu0 0
    %1782 = vmatmul.mubr.bf16.gmra.mrb[0].mxu0 %v1576
    %v1783 = vpop.f32.mrb[0].mxu0
    %v1784 = vadd.f32 %v1612, %v1783
    %v1785 = vpop.f32.mrb[0].mxu0
    %v1786 = vadd.f32 %v1616, %v1785
    %v1787 = vpop.f32.mrb[0].mxu0
    %v1788 = vadd.f32 %v1612, %v1787
    %v1789 = vpop.f32.mrb[0].mxu0
    %v1790 = vadd.f32 %v1616, %v1789
    %1791 = vdwg.mxu0
    %1792 = vmatprep.subr.bf16.mxu0 0
    %1793 = vmatpush1.bf16.msra.mxu0 %v1703
    %1794 = vmatprep.subr.bf16.mxu0 0
    %1795 = vmatpush1.bf16.msra.mxu0 %v1706
    %1796 = vmatprep.subr.bf16.mxu0 0
    %1797 = vmatpush1.bf16.msra.mxu0 %v1709
    %1798 = vmatprep.subr.bf16.mxu0 0
    %1799 = vmatpush1.bf16.msra.mxu0 %v1712
    %1800 = vmatprep.subr.bf16.mxu0 0
    %1801 = vmatpush1.bf16.msra.mxu0 %v1715
    %1802 = vmatprep.subr.bf16.mxu0 0
    %1803 = vmatpush1.bf16.msra.mxu0 %v1718
    %1804 = vmatprep.subr.bf16.mxu0 0
    %1805 = vmatpush1.bf16.msra.mxu0 %v1721
    %1806 = vmatprep.subr.bf16.mxu0 0
    %1807 = vmatpush1.bf16.msra.mxu0 %v1724
    %1808 = vmatprep.subr.bf16.mxu0 0
    %1809 = vmatpush1.bf16.msra.mxu0 0
    %1810 = vmatprep.subr.bf16.mxu0 0
    %1811 = vmatpush1.bf16.msra.mxu0 0
    %1812 = vmatprep.subr.bf16.mxu0 0
    %1813 = vmatpush1.bf16.msra.mxu0 0
    %1814 = vmatprep.subr.bf16.mxu0 0
    %1815 = vmatpush1.bf16.msra.mxu0 0
    %1816 = vmatprep.subr.bf16.mxu0 0
    %1817 = vmatpush1.bf16.msra.mxu0 0
    %1818 = vmatprep.subr.bf16.mxu0 0
    %1819 = vmatpush1.bf16.msra.mxu0 0
    %1820 = vmatprep.subr.bf16.mxu0 0
    %1821 = vmatpush1.bf16.msra.mxu0 0
    %1822 = vmatprep.subr.bf16.mxu0 0
    %1823 = vmatpush1.bf16.msra.mxu0 0
    %1824 = vmatprep.mubr.bf16.mxu0 0
    %1825 = vmatmul.mubr.bf16.gmra.mrb[0].mxu0 %v1576
    %v1826 = vpop.f32.mrb[0].mxu0
    %v1827 = vadd.f32 %v1620, %v1826
    %v1828 = vpop.f32.mrb[0].mxu0
    %v1829 = vpop.f32.mrb[0].mxu0
    %v1830 = vadd.f32 %v1620, %v1829
    %v1831 = vpop.f32.mrb[0].mxu0
    %1832 = vdwg.mxu0
    %v1833 = vld [vmem:[%s1] sm:$0x3]
    %v1834 = vsub.f32 %v1833, 1.0
    %v1835 = vmul.f32 %v1834, 1e+09
    %v1838 = vunpack.c.l.s4 1966171168
    %v1839 = vunpack.c.0.s8 %v1838
    %v1840 = vlaneseq
    %v1841 = vshrl.u32 %v1840, 7
    %v1842 = vsub.s32 %v1839, %v1841
    %v1843 = vrot.slane %v1835, %v1842
    %v1844 = vcombine.high %v1843, %v1843
    %v1846 = vunpack.c.l.s4 1966171168
    %v1847 = vunpack.c.0.s8 %v1846
    %v1848 = vlaneseq
    %v1849 = vshrl.u32 %v1848, 7
    %v1850 = vsub.s32 %v1847, %v1849
    %v1851 = vrot.slane %v1843, %v1850
    %v1853 = vunpack.c.l.s4 1966171168
    %v1854 = vunpack.c.0.s8 %v1853
    %v1855 = vlaneseq
    %v1856 = vshrl.u32 %v1855, 7
    %v1857 = vsub.s32 %v1854, %v1856
    %v1858 = vrot.slane %v1844, %v1857
    %v1859 = vpack.c.bf16 %v1784, %v1784
    %v1860 = vpack.c.bf16 %v1788, %v1788
    %v1861 = vpack.c.bf16 %v1786, %v1786
    %v1862 = vpack.c.bf16 %v1790, %v1790
    %v1863 = vpack.c.bf16 %v1827, %v1827
    %v1864 = vpack.c.bf16 %v1830, %v1830
    %v1866 = vsel %vm1209, %v1859, 0
    %v1869 = vsel %vm1209, %v1861, 0
    %1871 = vmatprep.subr.bf16.mxu0 0
    %1872 = vmatpush1.bf16.xpose.msra.mxu0 %v1869
    %1873 = vmatprep.subr.bf16.mxu0 0
    %1874 = vmatpush1.bf16.xpose.msra.mxu0 0
    %1875 = vmatprep.subr.bf16.mxu0 0
    %1876 = vmatpush1.bf16.xpose.msra.mxu0 0
    %1877 = vmatprep.subr.bf16.mxu0 0
    %1878 = vmatpush1.bf16.xpose.msra.mxu0 0
    %1879 = vmatprep.subr.bf16.mxu0 0
    %1880 = vmatpush1.bf16.xpose.msra.mxu0 0
    %1881 = vmatprep.subr.bf16.mxu0 0
    %1882 = vmatpush1.bf16.xpose.msra.mxu0 0
    %1883 = vmatprep.subr.bf16.mxu0 0
    %1884 = vmatpush1.bf16.xpose.msra.mxu0 0
    %1885 = vmatprep.subr.bf16.mxu0 0
    %1886 = vmatpush1.bf16.xpose.msra.mxu0 0
    %1887 = vmatprep.subr.bf16.mxu0 0
    %1888 = vmatpush1.bf16.xpose.msra.mxu0 0
    %1889 = vmatprep.subr.bf16.mxu0 0
    %1890 = vmatpush1.bf16.xpose.msra.mxu0 0
    %1891 = vmatprep.subr.bf16.mxu0 0
    %1892 = vmatpush1.bf16.xpose.msra.mxu0 0
    %1893 = vmatprep.subr.bf16.mxu0 0
    %1894 = vmatpush1.bf16.xpose.msra.mxu0 0
    %1895 = vmatprep.subr.bf16.mxu0 0
    %1896 = vmatpush1.bf16.xpose.msra.mxu0 0
    %1897 = vmatprep.subr.bf16.mxu0 0
    %1898 = vmatpush1.bf16.xpose.msra.mxu0 0
    %1899 = vmatprep.subr.bf16.mxu0 0
    %1900 = vmatpush1.bf16.xpose.msra.mxu0 0
    %1901 = vmatprep.subr.bf16.mxu0 0
    %1902 = vmatpush1.bf16.xpose.msra.mxu0 0
    %1903 = vmatprep.mubr.bf16.mxu0 0
    %1904 = vmatmul.mubr.bf16.gmra.mrb[0].mxu0 %v1866
    %v1905 = vpop.f32.mrb[0].mxu0
    %v1906 = vadd.f32 0.0, %v1905
    %v1907 = vpop.f32.mrb[0].mxu0
    %v1908 = vpop.f32.mrb[0].mxu0
    %v1909 = vpop.f32.mrb[0].mxu0
    %1910 = vdwg.mxu0
    %v1912 = vsel %vm1209, %v1860, 0
    %v1915 = vsel %vm1209, %v1862, 0
    %1917 = vmatprep.subr.bf16.mxu0 0
    %1918 = vmatpush1.bf16.xpose.msra.mxu0 %v1915
    %1919 = vmatprep.subr.bf16.mxu0 0
    %1920 = vmatpush1.bf16.xpose.msra.mxu0 0
    %1921 = vmatprep.subr.bf16.mxu0 0
    %1922 = vmatpush1.bf16.xpose.msra.mxu0 0
    %1923 = vmatprep.subr.bf16.mxu0 0
    %1924 = vmatpush1.bf16.xpose.msra.mxu0 0
    %1925 = vmatprep.subr.bf16.mxu0 0
    %1926 = vmatpush1.bf16.xpose.msra.mxu0 0
    %1927 = vmatprep.subr.bf16.mxu0 0
    %1928 = vmatpush1.bf16.xpose.msra.mxu0 0
    %1929 = vmatprep.subr.bf16.mxu0 0
    %1930 = vmatpush1.bf16.xpose.msra.mxu0 0
    %1931 = vmatprep.subr.bf16.mxu0 0
    %1932 = vmatpush1.bf16.xpose.msra.mxu0 0
    %1933 = vmatprep.subr.bf16.mxu0 0
    %1934 = vmatpush1.bf16.xpose.msra.mxu0 0
    %1935 = vmatprep.subr.bf16.mxu0 0
    %1936 = vmatpush1.bf16.xpose.msra.mxu0 0
    %1937 = vmatprep.subr.bf16.mxu0 0
    %1938 = vmatpush1.bf16.xpose.msra.mxu0 0
    %1939 = vmatprep.subr.bf16.mxu0 0
    %1940 = vmatpush1.bf16.xpose.msra.mxu0 0
    %1941 = vmatprep.subr.bf16.mxu0 0
    %1942 = vmatpush1.bf16.xpose.msra.mxu0 0
    %1943 = vmatprep.subr.bf16.mxu0 0
    %1944 = vmatpush1.bf16.xpose.msra.mxu0 0
    %1945 = vmatprep.subr.bf16.mxu0 0
    %1946 = vmatpush1.bf16.xpose.msra.mxu0 0
    %1947 = vmatprep.subr.bf16.mxu0 0
    %1948 = vmatpush1.bf16.xpose.msra.mxu0 0
    %1949 = vmatprep.mubr.bf16.mxu0 0
    %1950 = vmatmul.mubr.bf16.gmra.mrb[0].mxu0 %v1912
    %v1951 = vpop.f32.mrb[0].mxu0
    %v1952 = vadd.f32 0.0, %v1951
    %v1953 = vpop.f32.mrb[0].mxu0
    %v1954 = vpop.f32.mrb[0].mxu0
    %v1955 = vpop.f32.mrb[0].mxu0
    %1956 = vdwg.mxu0
    %v1957 = vmul.f32 %v1906, 0.17677669
    %v1958 = vmul.f32 %v1952, 0.17677669
    %v1959 = vlaneseq
    %v1960 = vshrl.u32 %v1959, 7
    %v1961 = vsub.s32 0, %v1960
    %v1962 = vrot.slane %v1851, %v1961
    %v1963 = vlaneseq
    %v1964 = vshrl.u32 %v1963, 7
    %v1965 = vsub.s32 0, %v1964
    %v1966 = vrot.slane %v1858, %v1965
    %v1969 = vadd.f32 %v1957, %v1962
    %v1970 = vadd.f32 %v1958, %v1966
    %vm1971 = vcmask 64512
    %v1972 = vsel %vm1971, %v1969, -inf
    %1973 = vmax.xlane.f32.xlu0 %v1972
    %v1974 = vpop.xlane.xlu0 %1973
    %v1975 = vsel %vm1971, %v1970, -inf
    %1976 = vmax.xlane.f32.xlu0 %v1975
    %v1977 = vpop.xlane.xlu0 %1976
    %v1978 = vsub.f32 %v1969, %v1974
    %v1979 = vsub.f32 %v1970, %v1977
    %v1980 = vmul.f32 %v1978, 1.442695
    %v1981 = vpow.pop %v1980
    %v1982 = vmul.f32 %v1979, 1.442695
    %v1983 = vpow.pop %v1982
    %v1984 = vsel %vm1971, %v1981, 0.0
    %1985 = vadd.xlane.f32.xlu0 %v1984
    %v1986 = vpop.xlane.xlu0 %1985
    %v1987 = vsel %vm1971, %v1983, 0.0
    %1988 = vadd.xlane.f32.xlu0 %v1987
    %v1989 = vpop.xlane.xlu0 %1988
    %v1990 = vrcp.pop %v1986
    %v1991 = vrcp.pop %v1989
    %v1992 = vmul.f32 %v1981, %v1990
    %v1993 = vmul.f32 %v1983, %v1991
    %v1994 = vpack.c.bf16 %v1992, %v1992
    %v1995 = vpack.c.bf16 %v1993, %v1993
    %v1997 = vsel %vm1971, %v1994, 0
    %v2000 = vsel %vm1306, %v1863, 0
    %2002 = vmatprep.subr.bf16.mxu0 0
    %2003 = vmatpush1.bf16.msra.mxu0 %v2000
    %2004 = vmatprep.subr.bf16.mxu0 0
    %2005 = vmatpush1.bf16.msra.mxu0 0
    %2006 = vmatprep.subr.bf16.mxu0 0
    %2007 = vmatpush1.bf16.msra.mxu0 0
    %2008 = vmatprep.subr.bf16.mxu0 0
    %2009 = vmatpush1.bf16.msra.mxu0 0
    %2010 = vmatprep.subr.bf16.mxu0 0
    %2011 = vmatpush1.bf16.msra.mxu0 0
    %2012 = vmatprep.subr.bf16.mxu0 0
    %2013 = vmatpush1.bf16.msra.mxu0 0
    %2014 = vmatprep.subr.bf16.mxu0 0
    %2015 = vmatpush1.bf16.msra.mxu0 0
    %2016 = vmatprep.subr.bf16.mxu0 0
    %2017 = vmatpush1.bf16.msra.mxu0 0
    %2018 = vmatprep.subr.bf16.mxu0 0
    %2019 = vmatpush1.bf16.msra.mxu0 0
    %2020 = vmatprep.subr.bf16.mxu0 0
    %2021 = vmatpush1.bf16.msra.mxu0 0
    %2022 = vmatprep.subr.bf16.mxu0 0
    %2023 = vmatpush1.bf16.msra.mxu0 0
    %2024 = vmatprep.subr.bf16.mxu0 0
    %2025 = vmatpush1.bf16.msra.mxu0 0
    %2026 = vmatprep.subr.bf16.mxu0 0
    %2027 = vmatpush1.bf16.msra.mxu0 0
    %2028 = vmatprep.subr.bf16.mxu0 0
    %2029 = vmatpush1.bf16.msra.mxu0 0
    %2030 = vmatprep.subr.bf16.mxu0 0
    %2031 = vmatpush1.bf16.msra.mxu0 0
    %2032 = vmatprep.subr.bf16.mxu0 0
    %2033 = vmatpush1.bf16.msra.mxu0 0
    %2034 = vmatprep.mubr.bf16.mxu0 0
    %2035 = vmatmul.mubr.bf16.gmra.mrb[0].mxu0 %v1997
    %v2036 = vpop.f32.mrb[0].mxu0
    %v2037 = vadd.f32 0.0, %v2036
    %v2038 = vpop.f32.mrb[0].mxu0
    %v2039 = vpop.f32.mrb[0].mxu0
    %v2040 = vpop.f32.mrb[0].mxu0
    %2041 = vdwg.mxu0
    %v2043 = vsel %vm1971, %v1995, 0
    %v2046 = vsel %vm1306, %v1864, 0
    %2048 = vmatprep.subr.bf16.mxu0 0
    %2049 = vmatpush1.bf16.msra.mxu0 %v2046
    %2050 = vmatprep.subr.bf16.mxu0 0
    %2051 = vmatpush1.bf16.msra.mxu0 0
    %2052 = vmatprep.subr.bf16.mxu0 0
    %2053 = vmatpush1.bf16.msra.mxu0 0
    %2054 = vmatprep.subr.bf16.mxu0 0
    %2055 = vmatpush1.bf16.msra.mxu0 0
    %2056 = vmatprep.subr.bf16.mxu0 0
    %2057 = vmatpush1.bf16.msra.mxu0 0
    %2058 = vmatprep.subr.bf16.mxu0 0
    %2059 = vmatpush1.bf16.msra.mxu0 0
    %2060 = vmatprep.subr.bf16.mxu0 0
    %2061 = vmatpush1.bf16.msra.mxu0 0
    %2062 = vmatprep.subr.bf16.mxu0 0
    %2063 = vmatpush1.bf16.msra.mxu0 0
    %2064 = vmatprep.subr.bf16.mxu0 0
    %2065 = vmatpush1.bf16.msra.mxu0 0
    %2066 = vmatprep.subr.bf16.mxu0 0
    %2067 = vmatpush1.bf16.msra.mxu0 0
    %2068 = vmatprep.subr.bf16.mxu0 0
    %2069 = vmatpush1.bf16.msra.mxu0 0
    %2070 = vmatprep.subr.bf16.mxu0 0
    %2071 = vmatpush1.bf16.msra.mxu0 0
    %2072 = vmatprep.subr.bf16.mxu0 0
    %2073 = vmatpush1.bf16.msra.mxu0 0
    %2074 = vmatprep.subr.bf16.mxu0 0
    %2075 = vmatpush1.bf16.msra.mxu0 0
    %2076 = vmatprep.subr.bf16.mxu0 0
    %2077 = vmatpush1.bf16.msra.mxu0 0
    %2078 = vmatprep.subr.bf16.mxu0 0
    %2079 = vmatpush1.bf16.msra.mxu0 0
    %2080 = vmatprep.mubr.bf16.mxu0 0
    %2081 = vmatmul.mubr.bf16.gmra.mrb[0].mxu0 %v2043
    %v2082 = vpop.f32.mrb[0].mxu0
    %v2083 = vadd.f32 0.0, %v2082
    %v2084 = vpop.f32.mrb[0].mxu0
    %v2085 = vpop.f32.mrb[0].mxu0
    %v2086 = vpop.f32.mrb[0].mxu0
    %2087 = vdwg.mxu0
    %2089 = vrot.lane.b32.xlu0 %v1859, 96
    %v2090 = vpop.permute.xlu0 %2089
    %2092 = vrot.lane.b32.xlu0 %v1861, 96
    %v2093 = vpop.permute.xlu0 %2092
    %v2095 = vsel %vm1209, %v2090, 0
    %v2098 = vsel %vm1209, %v2093, 0
    %2100 = vmatprep.subr.bf16.mxu0 0
    %2101 = vmatpush1.bf16.xpose.msra.mxu0 %v2098
    %2102 = vmatprep.subr.bf16.mxu0 0
    %2103 = vmatpush1.bf16.xpose.msra.mxu0 0
    %2104 = vmatprep.subr.bf16.mxu0 0
    %2105 = vmatpush1.bf16.xpose.msra.mxu0 0
    %2106 = vmatprep.subr.bf16.mxu0 0
    %2107 = vmatpush1.bf16.xpose.msra.mxu0 0
    %2108 = vmatprep.subr.bf16.mxu0 0
    %2109 = vmatpush1.bf16.xpose.msra.mxu0 0
    %2110 = vmatprep.subr.bf16.mxu0 0
    %2111 = vmatpush1.bf16.xpose.msra.mxu0 0
    %2112 = vmatprep.subr.bf16.mxu0 0
    %2113 = vmatpush1.bf16.xpose.msra.mxu0 0
    %2114 = vmatprep.subr.bf16.mxu0 0
    %2115 = vmatpush1.bf16.xpose.msra.mxu0 0
    %2116 = vmatprep.subr.bf16.mxu0 0
    %2117 = vmatpush1.bf16.xpose.msra.mxu0 0
    %2118 = vmatprep.subr.bf16.mxu0 0
    %2119 = vmatpush1.bf16.xpose.msra.mxu0 0
    %2120 = vmatprep.subr.bf16.mxu0 0
    %2121 = vmatpush1.bf16.xpose.msra.mxu0 0
    %2122 = vmatprep.subr.bf16.mxu0 0
    %2123 = vmatpush1.bf16.xpose.msra.mxu0 0
    %2124 = vmatprep.subr.bf16.mxu0 0
    %2125 = vmatpush1.bf16.xpose.msra.mxu0 0
    %2126 = vmatprep.subr.bf16.mxu0 0
    %2127 = vmatpush1.bf16.xpose.msra.mxu0 0
    %2128 = vmatprep.subr.bf16.mxu0 0
    %2129 = vmatpush1.bf16.xpose.msra.mxu0 0
    %2130 = vmatprep.subr.bf16.mxu0 0
    %2131 = vmatpush1.bf16.xpose.msra.mxu0 0
    %2132 = vmatprep.mubr.bf16.mxu0 0
    %2133 = vmatmul.mubr.bf16.gmra.mrb[0].mxu0 %v2095
    %v2134 = vpop.f32.mrb[0].mxu0
    %v2135 = vadd.f32 0.0, %v2134
    %v2136 = vpop.f32.mrb[0].mxu0
    %v2137 = vpop.f32.mrb[0].mxu0
    %v2138 = vpop.f32.mrb[0].mxu0
    %2139 = vdwg.mxu0
    %2141 = vrot.lane.b32.xlu0 %v1860, 96
    %v2142 = vpop.permute.xlu0 %2141
    %2144 = vrot.lane.b32.xlu0 %v1862, 96
    %v2145 = vpop.permute.xlu0 %2144
    %v2147 = vsel %vm1209, %v2142, 0
    %v2150 = vsel %vm1209, %v2145, 0
    %2152 = vmatprep.subr.bf16.mxu0 0
    %2153 = vmatpush1.bf16.xpose.msra.mxu0 %v2150
    %2154 = vmatprep.subr.bf16.mxu0 0
    %2155 = vmatpush1.bf16.xpose.msra.mxu0 0
    %2156 = vmatprep.subr.bf16.mxu0 0
    %2157 = vmatpush1.bf16.xpose.msra.mxu0 0
    %2158 = vmatprep.subr.bf16.mxu0 0
    %2159 = vmatpush1.bf16.xpose.msra.mxu0 0
    %2160 = vmatprep.subr.bf16.mxu0 0
    %2161 = vmatpush1.bf16.xpose.msra.mxu0 0
    %2162 = vmatprep.subr.bf16.mxu0 0
    %2163 = vmatpush1.bf16.xpose.msra.mxu0 0
    %2164 = vmatprep.subr.bf16.mxu0 0
    %2165 = vmatpush1.bf16.xpose.msra.mxu0 0
    %2166 = vmatprep.subr.bf16.mxu0 0
    %2167 = vmatpush1.bf16.xpose.msra.mxu0 0
    %2168 = vmatprep.subr.bf16.mxu0 0
    %2169 = vmatpush1.bf16.xpose.msra.mxu0 0
    %2170 = vmatprep.subr.bf16.mxu0 0
    %2171 = vmatpush1.bf16.xpose.msra.mxu0 0
    %2172 = vmatprep.subr.bf16.mxu0 0
    %2173 = vmatpush1.bf16.xpose.msra.mxu0 0
    %2174 = vmatprep.subr.bf16.mxu0 0
    %2175 = vmatpush1.bf16.xpose.msra.mxu0 0
    %2176 = vmatprep.subr.bf16.mxu0 0
    %2177 = vmatpush1.bf16.xpose.msra.mxu0 0
    %2178 = vmatprep.subr.bf16.mxu0 0
    %2179 = vmatpush1.bf16.xpose.msra.mxu0 0
    %2180 = vmatprep.subr.bf16.mxu0 0
    %2181 = vmatpush1.bf16.xpose.msra.mxu0 0
    %2182 = vmatprep.subr.bf16.mxu0 0
    %2183 = vmatpush1.bf16.xpose.msra.mxu0 0
    %2184 = vmatprep.mubr.bf16.mxu0 0
    %2185 = vmatmul.mubr.bf16.gmra.mrb[0].mxu0 %v2147
    %v2186 = vpop.f32.mrb[0].mxu0
    %v2187 = vadd.f32 0.0, %v2186
    %v2188 = vpop.f32.mrb[0].mxu0
    %v2189 = vpop.f32.mrb[0].mxu0
    %v2190 = vpop.f32.mrb[0].mxu0
    %2191 = vdwg.mxu0
    %v2192 = vmul.f32 %v2135, 0.17677669
    %v2193 = vmul.f32 %v2187, 0.17677669
    %v2194 = vadd.f32 %v2192, %v1962
    %v2195 = vadd.f32 %v2193, %v1966
    %v2196 = vsel %vm1971, %v2194, -inf
    %2197 = vmax.xlane.f32.xlu0 %v2196
    %v2198 = vpop.xlane.xlu0 %2197
    %v2199 = vsel %vm1971, %v2195, -inf
    %2200 = vmax.xlane.f32.xlu0 %v2199
    %v2201 = vpop.xlane.xlu0 %2200
    %v2202 = vsub.f32 %v2194, %v2198
    %v2203 = vsub.f32 %v2195, %v2201
    %v2204 = vmul.f32 %v2202, 1.442695
    %v2205 = vpow.pop %v2204
    %v2206 = vmul.f32 %v2203, 1.442695
    %v2207 = vpow.pop %v2206
    %v2208 = vsel %vm1971, %v2205, 0.0
    %2209 = vadd.xlane.f32.xlu0 %v2208
    %v2210 = vpop.xlane.xlu0 %2209
    %v2211 = vsel %vm1971, %v2207, 0.0
    %2212 = vadd.xlane.f32.xlu0 %v2211
    %v2213 = vpop.xlane.xlu0 %2212
    %v2214 = vrcp.pop %v2210
    %v2215 = vrcp.pop %v2213
    %v2216 = vmul.f32 %v2205, %v2214
    %v2217 = vmul.f32 %v2207, %v2215
    %v2218 = vpack.c.bf16 %v2216, %v2216
    %v2219 = vpack.c.bf16 %v2217, %v2217
    %2221 = vrot.lane.b32.xlu0 %v1863, 96
    %v2222 = vpop.permute.xlu0 %2221
    %v2224 = vsel %vm1971, %v2218, 0
    %v2227 = vsel %vm1306, %v2222, 0
    %2229 = vmatprep.subr.bf16.mxu0 0
    %2230 = vmatpush1.bf16.msra.mxu0 %v2227
    %2231 = vmatprep.subr.bf16.mxu0 0
    %2232 = vmatpush1.bf16.msra.mxu0 0
    %2233 = vmatprep.subr.bf16.mxu0 0
    %2234 = vmatpush1.bf16.msra.mxu0 0
    %2235 = vmatprep.subr.bf16.mxu0 0
    %2236 = vmatpush1.bf16.msra.mxu0 0
    %2237 = vmatprep.subr.bf16.mxu0 0
    %2238 = vmatpush1.bf16.msra.mxu0 0
    %2239 = vmatprep.subr.bf16.mxu0 0
    %2240 = vmatpush1.bf16.msra.mxu0 0
    %2241 = vmatprep.subr.bf16.mxu0 0
    %2242 = vmatpush1.bf16.msra.mxu0 0
    %2243 = vmatprep.subr.bf16.mxu0 0
    %2244 = vmatpush1.bf16.msra.mxu0 0
    %2245 = vmatprep.subr.bf16.mxu0 0
    %2246 = vmatpush1.bf16.msra.mxu0 0
    %2247 = vmatprep.subr.bf16.mxu0 0
    %2248 = vmatpush1.bf16.msra.mxu0 0
    %2249 = vmatprep.subr.bf16.mxu0 0
    %2250 = vmatpush1.bf16.msra.mxu0 0
    %2251 = vmatprep.subr.bf16.mxu0 0
    %2252 = vmatpush1.bf16.msra.mxu0 0
    %2253 = vmatprep.subr.bf16.mxu0 0
    %2254 = vmatpush1.bf16.msra.mxu0 0
    %2255 = vmatprep.subr.bf16.mxu0 0
    %2256 = vmatpush1.bf16.msra.mxu0 0
    %2257 = vmatprep.subr.bf16.mxu0 0
    %2258 = vmatpush1.bf16.msra.mxu0 0
    %2259 = vmatprep.subr.bf16.mxu0 0
    %2260 = vmatpush1.bf16.msra.mxu0 0
    %2261 = vmatprep.mubr.bf16.mxu0 0
    %2262 = vmatmul.mubr.bf16.gmra.mrb[0].mxu0 %v2224
    %v2263 = vpop.f32.mrb[0].mxu0
    %v2264 = vadd.f32 0.0, %v2263
    %v2265 = vpop.f32.mrb[0].mxu0
    %v2266 = vpop.f32.mrb[0].mxu0
    %v2267 = vpop.f32.mrb[0].mxu0
    %2268 = vdwg.mxu0
    %2270 = vrot.lane.b32.xlu0 %v1864, 96
    %v2271 = vpop.permute.xlu0 %2270
    %v2273 = vsel %vm1971, %v2219, 0
    %v2276 = vsel %vm1306, %v2271, 0
    %2278 = vmatprep.subr.bf16.mxu0 0
    %2279 = vmatpush1.bf16.msra.mxu0 %v2276
    %2280 = vmatprep.subr.bf16.mxu0 0
    %2281 = vmatpush1.bf16.msra.mxu0 0
    %2282 = vmatprep.subr.bf16.mxu0 0
    %2283 = vmatpush1.bf16.msra.mxu0 0
    %2284 = vmatprep.subr.bf16.mxu0 0
    %2285 = vmatpush1.bf16.msra.mxu0 0
    %2286 = vmatprep.subr.bf16.mxu0 0
    %2287 = vmatpush1.bf16.msra.mxu0 0
    %2288 = vmatprep.subr.bf16.mxu0 0
    %2289 = vmatpush1.bf16.msra.mxu0 0
    %2290 = vmatprep.subr.bf16.mxu0 0
    %2291 = vmatpush1.bf16.msra.mxu0 0
    %2292 = vmatprep.subr.bf16.mxu0 0
    %2293 = vmatpush1.bf16.msra.mxu0 0
    %2294 = vmatprep.subr.bf16.mxu0 0
    %2295 = vmatpush1.bf16.msra.mxu0 0
    %2296 = vmatprep.subr.bf16.mxu0 0
    %2297 = vmatpush1.bf16.msra.mxu0 0
    %2298 = vmatprep.subr.bf16.mxu0 0
    %2299 = vmatpush1.bf16.msra.mxu0 0
    %2300 = vmatprep.subr.bf16.mxu0 0
    %2301 = vmatpush1.bf16.msra.mxu0 0
    %2302 = vmatprep.subr.bf16.mxu0 0
    %2303 = vmatpush1.bf16.msra.mxu0 0
    %2304 = vmatprep.subr.bf16.mxu0 0
    %2305 = vmatpush1.bf16.msra.mxu0 0
    %2306 = vmatprep.subr.bf16.mxu0 0
    %2307 = vmatpush1.bf16.msra.mxu0 0
    %2308 = vmatprep.subr.bf16.mxu0 0
    %2309 = vmatpush1.bf16.msra.mxu0 0
    %2310 = vmatprep.mubr.bf16.mxu0 0
    %2311 = vmatmul.mubr.bf16.gmra.mrb[0].mxu0 %v2273
    %v2312 = vpop.f32.mrb[0].mxu0
    %v2313 = vadd.f32 0.0, %v2312
    %v2314 = vpop.f32.mrb[0].mxu0
    %v2315 = vpop.f32.mrb[0].mxu0
    %v2316 = vpop.f32.mrb[0].mxu0
    %2317 = vdwg.mxu0
    %2318 = vrot.lane.b32.xlu0 %v1859, 64
    %v2319 = vpop.permute.xlu0 %2318
    %2320 = vrot.lane.b32.xlu0 %v1861, 64
    %v2321 = vpop.permute.xlu0 %2320
    %v2323 = vsel %vm1209, %v2319, 0
    %v2326 = vsel %vm1209, %v2321, 0
    %2328 = vmatprep.subr.bf16.mxu0 0
    %2329 = vmatpush1.bf16.xpose.msra.mxu0 %v2326
    %2330 = vmatprep.subr.bf16.mxu0 0
    %2331 = vmatpush1.bf16.xpose.msra.mxu0 0
    %2332 = vmatprep.subr.bf16.mxu0 0
    %2333 = vmatpush1.bf16.xpose.msra.mxu0 0
    %2334 = vmatprep.subr.bf16.mxu0 0
    %2335 = vmatpush1.bf16.xpose.msra.mxu0 0
    %2336 = vmatprep.subr.bf16.mxu0 0
    %2337 = vmatpush1.bf16.xpose.msra.mxu0 0
    %2338 = vmatprep.subr.bf16.mxu0 0
    %2339 = vmatpush1.bf16.xpose.msra.mxu0 0
    %2340 = vmatprep.subr.bf16.mxu0 0
    %2341 = vmatpush1.bf16.xpose.msra.mxu0 0
    %2342 = vmatprep.subr.bf16.mxu0 0
    %2343 = vmatpush1.bf16.xpose.msra.mxu0 0
    %2344 = vmatprep.subr.bf16.mxu0 0
    %2345 = vmatpush1.bf16.xpose.msra.mxu0 0
    %2346 = vmatprep.subr.bf16.mxu0 0
    %2347 = vmatpush1.bf16.xpose.msra.mxu0 0
    %2348 = vmatprep.subr.bf16.mxu0 0
    %2349 = vmatpush1.bf16.xpose.msra.mxu0 0
    %2350 = vmatprep.subr.bf16.mxu0 0
    %2351 = vmatpush1.bf16.xpose.msra.mxu0 0
    %2352 = vmatprep.subr.bf16.mxu0 0
    %2353 = vmatpush1.bf16.xpose.msra.mxu0 0
    %2354 = vmatprep.subr.bf16.mxu0 0
    %2355 = vmatpush1.bf16.xpose.msra.mxu0 0
    %2356 = vmatprep.subr.bf16.mxu0 0
    %2357 = vmatpush1.bf16.xpose.msra.mxu0 0
    %2358 = vmatprep.subr.bf16.mxu0 0
    %2359 = vmatpush1.bf16.xpose.msra.mxu0 0
    %2360 = vmatprep.mubr.bf16.mxu0 0
    %2361 = vmatmul.mubr.bf16.gmra.mrb[0].mxu0 %v2323
    %v2362 = vpop.f32.mrb[0].mxu0
    %v2363 = vadd.f32 0.0, %v2362
    %v2364 = vpop.f32.mrb[0].mxu0
    %v2365 = vpop.f32.mrb[0].mxu0
    %v2366 = vpop.f32.mrb[0].mxu0
    %2367 = vdwg.mxu0
    %2368 = vrot.lane.b32.xlu0 %v1860, 64
    %v2369 = vpop.permute.xlu0 %2368
    %2370 = vrot.lane.b32.xlu0 %v1862, 64
    %v2371 = vpop.permute.xlu0 %2370
    %v2373 = vsel %vm1209, %v2369, 0
    %v2376 = vsel %vm1209, %v2371, 0
    %2378 = vmatprep.subr.bf16.mxu0 0
    %2379 = vmatpush1.bf16.xpose.msra.mxu0 %v2376
    %2380 = vmatprep.subr.bf16.mxu0 0
    %2381 = vmatpush1.bf16.xpose.msra.mxu0 0
    %2382 = vmatprep.subr.bf16.mxu0 0
    %2383 = vmatpush1.bf16.xpose.msra.mxu0 0
    %2384 = vmatprep.subr.bf16.mxu0 0
    %2385 = vmatpush1.bf16.xpose.msra.mxu0 0
    %2386 = vmatprep.subr.bf16.mxu0 0
    %2387 = vmatpush1.bf16.xpose.msra.mxu0 0
    %2388 = vmatprep.subr.bf16.mxu0 0
    %2389 = vmatpush1.bf16.xpose.msra.mxu0 0
    %2390 = vmatprep.subr.bf16.mxu0 0
    %2391 = vmatpush1.bf16.xpose.msra.mxu0 0
    %2392 = vmatprep.subr.bf16.mxu0 0
    %2393 = vmatpush1.bf16.xpose.msra.mxu0 0
    %2394 = vmatprep.subr.bf16.mxu0 0
    %2395 = vmatpush1.bf16.xpose.msra.mxu0 0
    %2396 = vmatprep.subr.bf16.mxu0 0
    %2397 = vmatpush1.bf16.xpose.msra.mxu0 0
    %2398 = vmatprep.subr.bf16.mxu0 0
    %2399 = vmatpush1.bf16.xpose.msra.mxu0 0
    %2400 = vmatprep.subr.bf16.mxu0 0
    %2401 = vmatpush1.bf16.xpose.msra.mxu0 0
    %2402 = vmatprep.subr.bf16.mxu0 0
    %2403 = vmatpush1.bf16.xpose.msra.mxu0 0
    %2404 = vmatprep.subr.bf16.mxu0 0
    %2405 = vmatpush1.bf16.xpose.msra.mxu0 0
    %2406 = vmatprep.subr.bf16.mxu0 0
    %2407 = vmatpush1.bf16.xpose.msra.mxu0 0
    %2408 = vmatprep.subr.bf16.mxu0 0
    %2409 = vmatpush1.bf16.xpose.msra.mxu0 0
    %2410 = vmatprep.mubr.bf16.mxu0 0
    %2411 = vmatmul.mubr.bf16.gmra.mrb[0].mxu0 %v2373
    %v2412 = vpop.f32.mrb[0].mxu0
    %v2413 = vadd.f32 0.0, %v2412
    %v2414 = vpop.f32.mrb[0].mxu0
    %v2415 = vpop.f32.mrb[0].mxu0
    %v2416 = vpop.f32.mrb[0].mxu0
    %2417 = vdwg.mxu0
    %v2418 = vmul.f32 %v2363, 0.17677669
    %v2419 = vmul.f32 %v2413, 0.17677669
    %v2420 = vadd.f32 %v2418, %v1962
    %v2421 = vadd.f32 %v2419, %v1966
    %v2422 = vsel %vm1971, %v2420, -inf
    %2423 = vmax.xlane.f32.xlu0 %v2422
    %v2424 = vpop.xlane.xlu0 %2423
    %v2425 = vsel %vm1971, %v2421, -inf
    %2426 = vmax.xlane.f32.xlu0 %v2425
    %v2427 = vpop.xlane.xlu0 %2426
    %v2428 = vsub.f32 %v2420, %v2424
    %v2429 = vsub.f32 %v2421, %v2427
    %v2430 = vmul.f32 %v2428, 1.442695
    %v2431 = vpow.pop %v2430
    %v2432 = vmul.f32 %v2429, 1.442695
    %v2433 = vpow.pop %v2432
    %v2434 = vsel %vm1971, %v2431, 0.0
    %2435 = vadd.xlane.f32.xlu0 %v2434
    %v2436 = vpop.xlane.xlu0 %2435
    %v2437 = vsel %vm1971, %v2433, 0.0
    %2438 = vadd.xlane.f32.xlu0 %v2437
    %v2439 = vpop.xlane.xlu0 %2438
    %v2440 = vrcp.pop %v2436
    %v2441 = vrcp.pop %v2439
    %v2442 = vmul.f32 %v2431, %v2440
    %v2443 = vmul.f32 %v2433, %v2441
    %v2444 = vpack.c.bf16 %v2442, %v2442
    %v2445 = vpack.c.bf16 %v2443, %v2443
    %2446 = vrot.lane.b32.xlu0 %v1863, 64
    %v2447 = vpop.permute.xlu0 %2446
    %v2449 = vsel %vm1971, %v2444, 0
    %v2452 = vsel %vm1306, %v2447, 0
    %2454 = vmatprep.subr.bf16.mxu0 0
    %2455 = vmatpush1.bf16.msra.mxu0 %v2452
    %2456 = vmatprep.subr.bf16.mxu0 0
    %2457 = vmatpush1.bf16.msra.mxu0 0
    %2458 = vmatprep.subr.bf16.mxu0 0
    %2459 = vmatpush1.bf16.msra.mxu0 0
    %2460 = vmatprep.subr.bf16.mxu0 0
    %2461 = vmatpush1.bf16.msra.mxu0 0
    %2462 = vmatprep.subr.bf16.mxu0 0
    %2463 = vmatpush1.bf16.msra.mxu0 0
    %2464 = vmatprep.subr.bf16.mxu0 0
    %2465 = vmatpush1.bf16.msra.mxu0 0
    %2466 = vmatprep.subr.bf16.mxu0 0
    %2467 = vmatpush1.bf16.msra.mxu0 0
    %2468 = vmatprep.subr.bf16.mxu0 0
    %2469 = vmatpush1.bf16.msra.mxu0 0
    %2470 = vmatprep.subr.bf16.mxu0 0
    %2471 = vmatpush1.bf16.msra.mxu0 0
    %2472 = vmatprep.subr.bf16.mxu0 0
    %2473 = vmatpush1.bf16.msra.mxu0 0
    %2474 = vmatprep.subr.bf16.mxu0 0
    %2475 = vmatpush1.bf16.msra.mxu0 0
    %2476 = vmatprep.subr.bf16.mxu0 0
    %2477 = vmatpush1.bf16.msra.mxu0 0
    %2478 = vmatprep.subr.bf16.mxu0 0
    %2479 = vmatpush1.bf16.msra.mxu0 0
    %2480 = vmatprep.subr.bf16.mxu0 0
    %2481 = vmatpush1.bf16.msra.mxu0 0
    %2482 = vmatprep.subr.bf16.mxu0 0
    %2483 = vmatpush1.bf16.msra.mxu0 0
    %2484 = vmatprep.subr.bf16.mxu0 0
    %2485 = vmatpush1.bf16.msra.mxu0 0
    %2486 = vmatprep.mubr.bf16.mxu0 0
    %2487 = vmatmul.mubr.bf16.gmra.mrb[0].mxu0 %v2449
    %v2488 = vpop.f32.mrb[0].mxu0
    %v2489 = vadd.f32 0.0, %v2488
    %v2490 = vpop.f32.mrb[0].mxu0
    %v2491 = vpop.f32.mrb[0].mxu0
    %v2492 = vpop.f32.mrb[0].mxu0
    %2493 = vdwg.mxu0
    %2494 = vrot.lane.b32.xlu0 %v1864, 64
    %v2495 = vpop.permute.xlu0 %2494
    %v2497 = vsel %vm1971, %v2445, 0
    %v2500 = vsel %vm1306, %v2495, 0
    %2502 = vmatprep.subr.bf16.mxu0 0
    %2503 = vmatpush1.bf16.msra.mxu0 %v2500
    %2504 = vmatprep.subr.bf16.mxu0 0
    %2505 = vmatpush1.bf16.msra.mxu0 0
    %2506 = vmatprep.subr.bf16.mxu0 0
    %2507 = vmatpush1.bf16.msra.mxu0 0
    %2508 = vmatprep.subr.bf16.mxu0 0
    %2509 = vmatpush1.bf16.msra.mxu0 0
    %2510 = vmatprep.subr.bf16.mxu0 0
    %2511 = vmatpush1.bf16.msra.mxu0 0
    %2512 = vmatprep.subr.bf16.mxu0 0
    %2513 = vmatpush1.bf16.msra.mxu0 0
    %2514 = vmatprep.subr.bf16.mxu0 0
    %2515 = vmatpush1.bf16.msra.mxu0 0
    %2516 = vmatprep.subr.bf16.mxu0 0
    %2517 = vmatpush1.bf16.msra.mxu0 0
    %2518 = vmatprep.subr.bf16.mxu0 0
    %2519 = vmatpush1.bf16.msra.mxu0 0
    %2520 = vmatprep.subr.bf16.mxu0 0
    %2521 = vmatpush1.bf16.msra.mxu0 0
    %2522 = vmatprep.subr.bf16.mxu0 0
    %2523 = vmatpush1.bf16.msra.mxu0 0
    %2524 = vmatprep.subr.bf16.mxu0 0
    %2525 = vmatpush1.bf16.msra.mxu0 0
    %2526 = vmatprep.subr.bf16.mxu0 0
    %2527 = vmatpush1.bf16.msra.mxu0 0
    %2528 = vmatprep.subr.bf16.mxu0 0
    %2529 = vmatpush1.bf16.msra.mxu0 0
    %2530 = vmatprep.subr.bf16.mxu0 0
    %2531 = vmatpush1.bf16.msra.mxu0 0
    %2532 = vmatprep.subr.bf16.mxu0 0
    %2533 = vmatpush1.bf16.msra.mxu0 0
    %2534 = vmatprep.mubr.bf16.mxu0 0
    %2535 = vmatmul.mubr.bf16.gmra.mrb[0].mxu0 %v2497
    %v2536 = vpop.f32.mrb[0].mxu0
    %v2537 = vadd.f32 0.0, %v2536
    %v2538 = vpop.f32.mrb[0].mxu0
    %v2539 = vpop.f32.mrb[0].mxu0
    %v2540 = vpop.f32.mrb[0].mxu0
    %2541 = vdwg.mxu0
    %2542 = vrot.lane.b32.xlu0 %v1859, 32
    %v2543 = vpop.permute.xlu0 %2542
    %2544 = vrot.lane.b32.xlu0 %v1861, 32
    %v2545 = vpop.permute.xlu0 %2544
    %v2547 = vsel %vm1209, %v2543, 0
    %v2550 = vsel %vm1209, %v2545, 0
    %2552 = vmatprep.subr.bf16.mxu0 0
    %2553 = vmatpush1.bf16.xpose.msra.mxu0 %v2550
    %2554 = vmatprep.subr.bf16.mxu0 0
    %2555 = vmatpush1.bf16.xpose.msra.mxu0 0
    %2556 = vmatprep.subr.bf16.mxu0 0
    %2557 = vmatpush1.bf16.xpose.msra.mxu0 0
    %2558 = vmatprep.subr.bf16.mxu0 0
    %2559 = vmatpush1.bf16.xpose.msra.mxu0 0
    %2560 = vmatprep.subr.bf16.mxu0 0
    %2561 = vmatpush1.bf16.xpose.msra.mxu0 0
    %2562 = vmatprep.subr.bf16.mxu0 0
    %2563 = vmatpush1.bf16.xpose.msra.mxu0 0
    %2564 = vmatprep.subr.bf16.mxu0 0
    %2565 = vmatpush1.bf16.xpose.msra.mxu0 0
    %2566 = vmatprep.subr.bf16.mxu0 0
    %2567 = vmatpush1.bf16.xpose.msra.mxu0 0
    %2568 = vmatprep.subr.bf16.mxu0 0
    %2569 = vmatpush1.bf16.xpose.msra.mxu0 0
    %2570 = vmatprep.subr.bf16.mxu0 0
    %2571 = vmatpush1.bf16.xpose.msra.mxu0 0
    %2572 = vmatprep.subr.bf16.mxu0 0
    %2573 = vmatpush1.bf16.xpose.msra.mxu0 0
    %2574 = vmatprep.subr.bf16.mxu0 0
    %2575 = vmatpush1.bf16.xpose.msra.mxu0 0
    %2576 = vmatprep.subr.bf16.mxu0 0
    %2577 = vmatpush1.bf16.xpose.msra.mxu0 0
    %2578 = vmatprep.subr.bf16.mxu0 0
    %2579 = vmatpush1.bf16.xpose.msra.mxu0 0
    %2580 = vmatprep.subr.bf16.mxu0 0
    %2581 = vmatpush1.bf16.xpose.msra.mxu0 0
    %2582 = vmatprep.subr.bf16.mxu0 0
    %2583 = vmatpush1.bf16.xpose.msra.mxu0 0
    %2584 = vmatprep.mubr.bf16.mxu0 0
    %2585 = vmatmul.mubr.bf16.gmra.mrb[0].mxu0 %v2547
    %v2586 = vpop.f32.mrb[0].mxu0
    %v2587 = vadd.f32 0.0, %v2586
    %v2588 = vpop.f32.mrb[0].mxu0
    %v2589 = vpop.f32.mrb[0].mxu0
    %v2590 = vpop.f32.mrb[0].mxu0
    %2591 = vdwg.mxu0
    %2592 = vrot.lane.b32.xlu0 %v1860, 32
    %v2593 = vpop.permute.xlu0 %2592
    %2594 = vrot.lane.b32.xlu0 %v1862, 32
    %v2595 = vpop.permute.xlu0 %2594
    %v2597 = vsel %vm1209, %v2593, 0
    %v2600 = vsel %vm1209, %v2595, 0
    %2602 = vmatprep.subr.bf16.mxu0 0
    %2603 = vmatpush1.bf16.xpose.msra.mxu0 %v2600
    %2604 = vmatprep.subr.bf16.mxu0 0
    %2605 = vmatpush1.bf16.xpose.msra.mxu0 0
    %2606 = vmatprep.subr.bf16.mxu0 0
    %2607 = vmatpush1.bf16.xpose.msra.mxu0 0
    %2608 = vmatprep.subr.bf16.mxu0 0
    %2609 = vmatpush1.bf16.xpose.msra.mxu0 0
    %2610 = vmatprep.subr.bf16.mxu0 0
    %2611 = vmatpush1.bf16.xpose.msra.mxu0 0
    %2612 = vmatprep.subr.bf16.mxu0 0
    %2613 = vmatpush1.bf16.xpose.msra.mxu0 0
    %2614 = vmatprep.subr.bf16.mxu0 0
    %2615 = vmatpush1.bf16.xpose.msra.mxu0 0
    %2616 = vmatprep.subr.bf16.mxu0 0
    %2617 = vmatpush1.bf16.xpose.msra.mxu0 0
    %2618 = vmatprep.subr.bf16.mxu0 0
    %2619 = vmatpush1.bf16.xpose.msra.mxu0 0
    %2620 = vmatprep.subr.bf16.mxu0 0
    %2621 = vmatpush1.bf16.xpose.msra.mxu0 0
    %2622 = vmatprep.subr.bf16.mxu0 0
    %2623 = vmatpush1.bf16.xpose.msra.mxu0 0
    %2624 = vmatprep.subr.bf16.mxu0 0
    %2625 = vmatpush1.bf16.xpose.msra.mxu0 0
    %2626 = vmatprep.subr.bf16.mxu0 0
    %2627 = vmatpush1.bf16.xpose.msra.mxu0 0
    %2628 = vmatprep.subr.bf16.mxu0 0
    %2629 = vmatpush1.bf16.xpose.msra.mxu0 0
    %2630 = vmatprep.subr.bf16.mxu0 0
    %2631 = vmatpush1.bf16.xpose.msra.mxu0 0
    %2632 = vmatprep.subr.bf16.mxu0 0
    %2633 = vmatpush1.bf16.xpose.msra.mxu0 0
    %2634 = vmatprep.mubr.bf16.mxu0 0
    %2635 = vmatmul.mubr.bf16.gmra.mrb[0].mxu0 %v2597
    %v2636 = vpop.f32.mrb[0].mxu0
    %v2637 = vadd.f32 0.0, %v2636
    %v2638 = vpop.f32.mrb[0].mxu0
    %v2639 = vpop.f32.mrb[0].mxu0
    %v2640 = vpop.f32.mrb[0].mxu0
    %2641 = vdwg.mxu0
    %v2642 = vmul.f32 %v2587, 0.17677669
    %v2643 = vmul.f32 %v2637, 0.17677669
    %v2644 = vadd.f32 %v2642, %v1962
    %v2645 = vadd.f32 %v2643, %v1966
    %v2646 = vsel %vm1971, %v2644, -inf
    %2647 = vmax.xlane.f32.xlu0 %v2646
    %v2648 = vpop.xlane.xlu0 %2647
    %v2649 = vsel %vm1971, %v2645, -inf
    %2650 = vmax.xlane.f32.xlu0 %v2649
    %v2651 = vpop.xlane.xlu0 %2650
    %v2652 = vsub.f32 %v2644, %v2648
    %v2653 = vsub.f32 %v2645, %v2651
    %v2654 = vmul.f32 %v2652, 1.442695
    %v2655 = vpow.pop %v2654
    %v2656 = vmul.f32 %v2653, 1.442695
    %v2657 = vpow.pop %v2656
    %v2658 = vsel %vm1971, %v2655, 0.0
    %2659 = vadd.xlane.f32.xlu0 %v2658
    %v2660 = vpop.xlane.xlu0 %2659
    %v2661 = vsel %vm1971, %v2657, 0.0
    %2662 = vadd.xlane.f32.xlu0 %v2661
    %v2663 = vpop.xlane.xlu0 %2662
    %v2664 = vrcp.pop %v2660
    %v2665 = vrcp.pop %v2663
    %v2666 = vmul.f32 %v2655, %v2664
    %v2667 = vmul.f32 %v2657, %v2665
    %v2668 = vpack.c.bf16 %v2666, %v2666
    %v2669 = vpack.c.bf16 %v2667, %v2667
    %2670 = vrot.lane.b32.xlu0 %v1863, 32
    %v2671 = vpop.permute.xlu0 %2670
    %v2673 = vsel %vm1971, %v2668, 0
    %v2676 = vsel %vm1306, %v2671, 0
    %2678 = vmatprep.subr.bf16.mxu0 0
    %2679 = vmatpush1.bf16.msra.mxu0 %v2676
    %2680 = vmatprep.subr.bf16.mxu0 0
    %2681 = vmatpush1.bf16.msra.mxu0 0
    %2682 = vmatprep.subr.bf16.mxu0 0
    %2683 = vmatpush1.bf16.msra.mxu0 0
    %2684 = vmatprep.subr.bf16.mxu0 0
    %2685 = vmatpush1.bf16.msra.mxu0 0
    %2686 = vmatprep.subr.bf16.mxu0 0
    %2687 = vmatpush1.bf16.msra.mxu0 0
    %2688 = vmatprep.subr.bf16.mxu0 0
    %2689 = vmatpush1.bf16.msra.mxu0 0
    %2690 = vmatprep.subr.bf16.mxu0 0
    %2691 = vmatpush1.bf16.msra.mxu0 0
    %2692 = vmatprep.subr.bf16.mxu0 0
    %2693 = vmatpush1.bf16.msra.mxu0 0
    %2694 = vmatprep.subr.bf16.mxu0 0
    %2695 = vmatpush1.bf16.msra.mxu0 0
    %2696 = vmatprep.subr.bf16.mxu0 0
    %2697 = vmatpush1.bf16.msra.mxu0 0
    %2698 = vmatprep.subr.bf16.mxu0 0
    %2699 = vmatpush1.bf16.msra.mxu0 0
    %2700 = vmatprep.subr.bf16.mxu0 0
    %2701 = vmatpush1.bf16.msra.mxu0 0
    %2702 = vmatprep.subr.bf16.mxu0 0
    %2703 = vmatpush1.bf16.msra.mxu0 0
    %2704 = vmatprep.subr.bf16.mxu0 0
    %2705 = vmatpush1.bf16.msra.mxu0 0
    %2706 = vmatprep.subr.bf16.mxu0 0
    %2707 = vmatpush1.bf16.msra.mxu0 0
    %2708 = vmatprep.subr.bf16.mxu0 0
    %2709 = vmatpush1.bf16.msra.mxu0 0
    %2710 = vmatprep.mubr.bf16.mxu0 0
    %2711 = vmatmul.mubr.bf16.gmra.mrb[0].mxu0 %v2673
    %v2712 = vpop.f32.mrb[0].mxu0
    %v2713 = vadd.f32 0.0, %v2712
    %v2714 = vpop.f32.mrb[0].mxu0
    %v2715 = vpop.f32.mrb[0].mxu0
    %v2716 = vpop.f32.mrb[0].mxu0
    %2717 = vdwg.mxu0
    %2718 = vrot.lane.b32.xlu0 %v1864, 32
    %v2719 = vpop.permute.xlu0 %2718
    %v2721 = vsel %vm1971, %v2669, 0
    %v2724 = vsel %vm1306, %v2719, 0
    %2726 = vmatprep.subr.bf16.mxu0 0
    %2727 = vmatpush1.bf16.msra.mxu0 %v2724
    %2728 = vmatprep.subr.bf16.mxu0 0
    %2729 = vmatpush1.bf16.msra.mxu0 0
    %2730 = vmatprep.subr.bf16.mxu0 0
    %2731 = vmatpush1.bf16.msra.mxu0 0
    %2732 = vmatprep.subr.bf16.mxu0 0
    %2733 = vmatpush1.bf16.msra.mxu0 0
    %2734 = vmatprep.subr.bf16.mxu0 0
    %2735 = vmatpush1.bf16.msra.mxu0 0
    %2736 = vmatprep.subr.bf16.mxu0 0
    %2737 = vmatpush1.bf16.msra.mxu0 0
    %2738 = vmatprep.subr.bf16.mxu0 0
    %2739 = vmatpush1.bf16.msra.mxu0 0
    %2740 = vmatprep.subr.bf16.mxu0 0
    %2741 = vmatpush1.bf16.msra.mxu0 0
    %2742 = vmatprep.subr.bf16.mxu0 0
    %2743 = vmatpush1.bf16.msra.mxu0 0
    %2744 = vmatprep.subr.bf16.mxu0 0
    %2745 = vmatpush1.bf16.msra.mxu0 0
    %2746 = vmatprep.subr.bf16.mxu0 0
    %2747 = vmatpush1.bf16.msra.mxu0 0
    %2748 = vmatprep.subr.bf16.mxu0 0
    %2749 = vmatpush1.bf16.msra.mxu0 0
    %2750 = vmatprep.subr.bf16.mxu0 0
    %2751 = vmatpush1.bf16.msra.mxu0 0
    %2752 = vmatprep.subr.bf16.mxu0 0
    %2753 = vmatpush1.bf16.msra.mxu0 0
    %2754 = vmatprep.subr.bf16.mxu0 0
    %2755 = vmatpush1.bf16.msra.mxu0 0
    %2756 = vmatprep.subr.bf16.mxu0 0
    %2757 = vmatpush1.bf16.msra.mxu0 0
    %2758 = vmatprep.mubr.bf16.mxu0 0
    %2759 = vmatmul.mubr.bf16.gmra.mrb[0].mxu0 %v2721
    %v2760 = vpop.f32.mrb[0].mxu0
    %v2761 = vadd.f32 0.0, %v2760
    %v2762 = vpop.f32.mrb[0].mxu0
    %v2763 = vpop.f32.mrb[0].mxu0
    %v2764 = vpop.f32.mrb[0].mxu0
    %2765 = vdwg.mxu0
    %2768 = vrot.lane.b32.xlu0 %v2264, 32
    %v2769 = vpop.permute.xlu0 %2768
    %2770 = vrot.lane.b32.xlu0 %v2313, 32
    %v2771 = vpop.permute.xlu0 %2770
    %2776 = vrot.lane.b32.xlu0 %v2489, 64
    %v2777 = vpop.permute.xlu0 %2776
    %2778 = vrot.lane.b32.xlu0 %v2537, 64
    %v2779 = vpop.permute.xlu0 %2778
    %2784 = vrot.lane.b32.xlu0 %v2713, 96
    %v2785 = vpop.permute.xlu0 %2784
    %2786 = vrot.lane.b32.xlu0 %v2761, 96
    %v2787 = vpop.permute.xlu0 %2786
    %v2790 = vsel %vm1209, %v2037, %v2769
    %v2791 = vsel %vm1209, %v2083, %v2771
    %v2792 = vsel %vm526, %v2790, %v2777
    %v2793 = vsel %vm526, %v2791, %v2779
    %vm2794 = vcmask 785408
    %v2795 = vsel %vm2794, %v2792, %v2785
    %v2796 = vsel %vm2794, %v2793, %v2787
    %v2797 = vpack.c.bf16 %v2796, %v2795
    %v2798 = vld [vmem:[#allocation10 + $0xc] sm:$0xf]
    %v2799 = vld [vmem:[#allocation10 + $0x28] sm:$0xf]
    %v2800 = vld [vmem:[#allocation10 + $0x44] sm:$0xf]
    %v2801 = vld [vmem:[#allocation10 + $0x60] sm:$0xf]
    %v2802 = vld [vmem:[#allocation10 + $0x7c] sm:$0xf]
    %v2803 = vld [vmem:[#allocation10 + $0x98] sm:$0xf]
    %v2804 = vld [vmem:[#allocation10 + $0xb4] sm:$0xf]
    %v2805 = vld [vmem:[#allocation10 + $0xd0] sm:$0xf]
    %v2806 = vld [vmem:[#allocation10 + $0xec] sm:$0xf]
    %v2807 = vld [vmem:[#allocation10 + $0x108] sm:$0xf]
    %v2808 = vld [vmem:[#allocation10 + $0x124] sm:$0xf]
    %v2809 = vld [vmem:[#allocation10 + $0x140] sm:$0xf]
    %v2810 = vld [vmem:[#allocation10 + $0x15c] sm:$0xf]
    %v2811 = vld [vmem:[#allocation10 + $0x178] sm:$0xf]
    %v2812 = vld [vmem:[#allocation10 + $0x194] sm:$0xf]
    %v2813 = vld [vmem:[#allocation10 + $0x1b0] sm:$0xf]
    %v2814 = vlaneseq
    %v2815 = vshrl.u32 %v2814, 7
    %v2816 = vsub.s32 4, %v2815
    %v2817 = vrot.slane %v117, %v2816
    %v2834 = vunpack.c.l.b16 %v2798
    %v2835 = vunpack.c.l.b16 %v2799
    %v2836 = vunpack.c.l.b16 %v2800
    %v2837 = vunpack.c.l.b16 %v2801
    %v2838 = vunpack.c.l.b16 %v2802
    %v2839 = vunpack.c.l.b16 %v2803
    %v2840 = vunpack.c.l.b16 %v2804
    %v2841 = vunpack.c.l.b16 %v2805
    %v2842 = vunpack.c.l.b16 %v2806
    %v2843 = vunpack.c.l.b16 %v2807
    %v2844 = vunpack.c.l.b16 %v2808
    %v2845 = vunpack.c.l.b16 %v2809
    %v2846 = vunpack.c.l.b16 %v2810
    %v2847 = vunpack.c.l.b16 %v2811
    %v2848 = vunpack.c.l.b16 %v2812
    %v2849 = vunpack.c.l.b16 %v2813
    %v2850 = vpack.c.b16 %v2835, %v2834
    %v2851 = vpack.c.b16 %v2837, %v2836
    %v2852 = vpack.c.b16 %v2839, %v2838
    %v2853 = vpack.c.b16 %v2841, %v2840
    %v2854 = vpack.c.b16 %v2843, %v2842
    %v2855 = vpack.c.b16 %v2845, %v2844
    %v2856 = vpack.c.b16 %v2847, %v2846
    %v2857 = vpack.c.b16 %v2849, %v2848
    %2866 = vmatprep.subr.bf16.mxu0 0
    %2867 = vmatpush1.bf16.msra.mxu0 %v2850
    %2868 = vmatprep.subr.bf16.mxu0 0
    %2869 = vmatpush1.bf16.msra.mxu0 %v2851
    %2870 = vmatprep.subr.bf16.mxu0 0
    %2871 = vmatpush1.bf16.msra.mxu0 %v2852
    %2872 = vmatprep.subr.bf16.mxu0 0
    %2873 = vmatpush1.bf16.msra.mxu0 %v2853
    %2874 = vmatprep.subr.bf16.mxu0 0
    %2875 = vmatpush1.bf16.msra.mxu0 %v2854
    %2876 = vmatprep.subr.bf16.mxu0 0
    %2877 = vmatpush1.bf16.msra.mxu0 %v2855
    %2878 = vmatprep.subr.bf16.mxu0 0
    %2879 = vmatpush1.bf16.msra.mxu0 %v2856
    %2880 = vmatprep.subr.bf16.mxu0 0
    %2881 = vmatpush1.bf16.msra.mxu0 %v2857
    %2882 = vmatprep.subr.bf16.mxu0 0
    %2883 = vmatpush1.bf16.msra.mxu0 0
    %2884 = vmatprep.subr.bf16.mxu0 0
    %2885 = vmatpush1.bf16.msra.mxu0 0
    %2886 = vmatprep.subr.bf16.mxu0 0
    %2887 = vmatpush1.bf16.msra.mxu0 0
    %2888 = vmatprep.subr.bf16.mxu0 0
    %2889 = vmatpush1.bf16.msra.mxu0 0
    %2890 = vmatprep.subr.bf16.mxu0 0
    %2891 = vmatpush1.bf16.msra.mxu0 0
    %2892 = vmatprep.subr.bf16.mxu0 0
    %2893 = vmatpush1.bf16.msra.mxu0 0
    %2894 = vmatprep.subr.bf16.mxu0 0
    %2895 = vmatpush1.bf16.msra.mxu0 0
    %2896 = vmatprep.subr.bf16.mxu0 0
    %2897 = vmatpush1.bf16.msra.mxu0 0
    %2898 = vmatprep.mubr.bf16.mxu0 0
    %2899 = vmatmul.mubr.bf16.gmra.mrb[0].mxu0 %v2797
    %v2900 = vpop.f32.mrb[0].mxu0
    %v2901 = vadd.f32 %v2817, %v2900
    %v2902 = vpop.f32.mrb[0].mxu0
    %v2903 = vpop.f32.mrb[0].mxu0
    %v2904 = vadd.f32 %v2817, %v2903
    %v2905 = vpop.f32.mrb[0].mxu0
    %2906 = vdwg.mxu0
    %v2907 = vadd.f32 %v1570, %v2901
    %v2908 = vadd.f32 %v1573, %v2904
    %2909 = vadd.xlane.f32.xlu0 %v2907
    %v2910 = vpop.xlane.xlu0 %2909
    %2911 = vadd.xlane.f32.xlu0 %v2908
    %v2912 = vpop.xlane.xlu0 %2911
    %v2913 = vrcp.pop 128.0
    %v2914 = vmul.f32 %v2910, %v2913
    %v2915 = vmul.f32 %v2912, %v2913
    %v2916 = vsub.f32 %v2907, %v2914
    %v2917 = vsub.f32 %v2908, %v2915
    %v2918 = vmul.f32 %v2916, %v2916
    %v2919 = vmul.f32 %v2917, %v2917
    %2920 = vadd.xlane.f32.xlu0 %v2918
    %v2921 = vpop.xlane.xlu0 %2920
    %2922 = vadd.xlane.f32.xlu0 %v2919
    %v2923 = vpop.xlane.xlu0 %2922
    %v2924 = vmul.f32 %v2921, %v2913
    %v2925 = vmul.f32 %v2923, %v2913
    %v2926 = vadd.f32 %v2924, 1e-12
    %v2927 = vadd.f32 %v2925, 1e-12
    %v2928 = vrsqrt.pop %v2926
    %v2929 = vrsqrt.pop %v2927
    %v2930 = vmul.f32 %v2916, %v2928
    %v2931 = vmul.f32 %v2917, %v2929
    %v2932 = vlaneseq
    %v2933 = vshrl.u32 %v2932, 7
    %v2934 = vsub.s32 5, %v2933
    %v2935 = vrot.slane %v117, %v2934
    %v2936 = vmul.f32 %v2930, %v2935
    %v2937 = vmul.f32 %v2931, %v2935
    %v2938 = vlaneseq
    %v2939 = vshrl.u32 %v2938, 7
    %v2940 = vsub.s32 6, %v2939
    %v2941 = vrot.slane %v117, %v2940
    %v2942 = vadd.f32 %v2936, %v2941
    %v2943 = vadd.f32 %v2937, %v2941
    %v2944 = vpack.c.bf16 %v2943, %v2942
    %v2945 = vld [vmem:[#allocation10 + $0x10] sm:$0xff]
    %v2946 = vld [vmem:[#allocation10 + $0x2c] sm:$0xff]
    %v2947 = vld [vmem:[#allocation10 + $0x48] sm:$0xff]
    %v2948 = vld [vmem:[#allocation10 + $0x64] sm:$0xff]
    %v2949 = vld [vmem:[#allocation10 + $0x80] sm:$0xff]
    %v2950 = vld [vmem:[#allocation10 + $0x9c] sm:$0xff]
    %v2951 = vld [vmem:[#allocation10 + $0xb8] sm:$0xff]
    %v2952 = vld [vmem:[#allocation10 + $0xd4] sm:$0xff]
    %v2953 = vld [vmem:[#allocation10 + $0xf0] sm:$0xff]
    %v2954 = vld [vmem:[#allocation10 + $0x10c] sm:$0xff]
    %v2955 = vld [vmem:[#allocation10 + $0x128] sm:$0xff]
    %v2956 = vld [vmem:[#allocation10 + $0x144] sm:$0xff]
    %v2957 = vld [vmem:[#allocation10 + $0x160] sm:$0xff]
    %v2958 = vld [vmem:[#allocation10 + $0x17c] sm:$0xff]
    %v2959 = vld [vmem:[#allocation10 + $0x198] sm:$0xff]
    %v2960 = vld [vmem:[#allocation10 + $0x1b4] sm:$0xff]
    %v2961 = vlaneseq
    %v2962 = vshrl.u32 %v2961, 7
    %v2963 = vsub.s32 7, %v2962
    %v2964 = vrot.slane %v117, %v2963
    %v2965 = vlaneseq
    %v2966 = vshrl.u32 %v2965, 7
    %v2967 = vsub.s32 7, %v2966
    %v2968 = vrot.slane %v118, %v2967
    %v2985 = vunpack.c.l.b16 %v2945
    %v2986 = vunpack.c.h.b16 %v2945
    %v2987 = vunpack.c.l.b16 %v2946
    %v2988 = vunpack.c.h.b16 %v2946
    %v2989 = vunpack.c.l.b16 %v2947
    %v2990 = vunpack.c.h.b16 %v2947
    %v2991 = vunpack.c.l.b16 %v2948
    %v2992 = vunpack.c.h.b16 %v2948
    %v2993 = vunpack.c.l.b16 %v2949
    %v2994 = vunpack.c.h.b16 %v2949
    %v2995 = vunpack.c.l.b16 %v2950
    %v2996 = vunpack.c.h.b16 %v2950
    %v2997 = vunpack.c.l.b16 %v2951
    %v2998 = vunpack.c.h.b16 %v2951
    %v2999 = vunpack.c.l.b16 %v2952
    %v3000 = vunpack.c.h.b16 %v2952
    %v3001 = vunpack.c.l.b16 %v2953
    %v3002 = vunpack.c.h.b16 %v2953
    %v3003 = vunpack.c.l.b16 %v2954
    %v3004 = vunpack.c.h.b16 %v2954
    %v3005 = vunpack.c.l.b16 %v2955
    %v3006 = vunpack.c.h.b16 %v2955
    %v3007 = vunpack.c.l.b16 %v2956
    %v3008 = vunpack.c.h.b16 %v2956
    %v3009 = vunpack.c.l.b16 %v2957
    %v3010 = vunpack.c.h.b16 %v2957
    %v3011 = vunpack.c.l.b16 %v2958
    %v3012 = vunpack.c.h.b16 %v2958
    %v3013 = vunpack.c.l.b16 %v2959
    %v3014 = vunpack.c.h.b16 %v2959
    %v3015 = vunpack.c.l.b16 %v2960
    %v3016 = vunpack.c.h.b16 %v2960
    %v3017 = vpack.c.b16 %v2987, %v2985
    %v3018 = vpack.c.b16 %v2988, %v2986
    %v3019 = vpack.c.b16 %v2991, %v2989
    %v3020 = vpack.c.b16 %v2992, %v2990
    %v3021 = vpack.c.b16 %v2995, %v2993
    %v3022 = vpack.c.b16 %v2996, %v2994
    %v3023 = vpack.c.b16 %v2999, %v2997
    %v3024 = vpack.c.b16 %v3000, %v2998
    %v3025 = vpack.c.b16 %v3003, %v3001
    %v3026 = vpack.c.b16 %v3004, %v3002
    %v3027 = vpack.c.b16 %v3007, %v3005
    %v3028 = vpack.c.b16 %v3008, %v3006
    %v3029 = vpack.c.b16 %v3011, %v3009
    %v3030 = vpack.c.b16 %v3012, %v3010
    %v3031 = vpack.c.b16 %v3015, %v3013
    %v3032 = vpack.c.b16 %v3016, %v3014
    %3049 = vmatprep.subr.bf16.mxu0 %v3018
    %3050 = vmatpush1.bf16.msra.mxu0 %v3017
    %3051 = vmatprep.subr.bf16.mxu0 %v3020
    %3052 = vmatpush1.bf16.msra.mxu0 %v3019
    %3053 = vmatprep.subr.bf16.mxu0 %v3022
    %3054 = vmatpush1.bf16.msra.mxu0 %v3021
    %3055 = vmatprep.subr.bf16.mxu0 %v3024
    %3056 = vmatpush1.bf16.msra.mxu0 %v3023
    %3057 = vmatprep.subr.bf16.mxu0 %v3026
    %3058 = vmatpush1.bf16.msra.mxu0 %v3025
    %3059 = vmatprep.subr.bf16.mxu0 %v3028
    %3060 = vmatpush1.bf16.msra.mxu0 %v3027
    %3061 = vmatprep.subr.bf16.mxu0 %v3030
    %3062 = vmatpush1.bf16.msra.mxu0 %v3029
    %3063 = vmatprep.subr.bf16.mxu0 %v3032
    %3064 = vmatpush1.bf16.msra.mxu0 %v3031
    %3065 = vmatprep.subr.bf16.mxu0 0
    %3066 = vmatpush1.bf16.msra.mxu0 0
    %3067 = vmatprep.subr.bf16.mxu0 0
    %3068 = vmatpush1.bf16.msra.mxu0 0
    %3069 = vmatprep.subr.bf16.mxu0 0
    %3070 = vmatpush1.bf16.msra.mxu0 0
    %3071 = vmatprep.subr.bf16.mxu0 0
    %3072 = vmatpush1.bf16.msra.mxu0 0
    %3073 = vmatprep.subr.bf16.mxu0 0
    %3074 = vmatpush1.bf16.msra.mxu0 0
    %3075 = vmatprep.subr.bf16.mxu0 0
    %3076 = vmatpush1.bf16.msra.mxu0 0
    %3077 = vmatprep.subr.bf16.mxu0 0
    %3078 = vmatpush1.bf16.msra.mxu0 0
    %3079 = vmatprep.subr.bf16.mxu0 0
    %3080 = vmatpush1.bf16.msra.mxu0 0
    %3081 = vmatprep.mubr.bf16.mxu0 0
    %3082 = vmatmul.mubr.bf16.gmra.mrb[0].mxu0 %v2944
    %v3083 = vpop.f32.mrb[0].mxu0
    %v3084 = vadd.f32 %v2964, %v3083
    %v3085 = vpop.f32.mrb[0].mxu0
    %v3086 = vadd.f32 %v2968, %v3085
    %v3087 = vpop.f32.mrb[0].mxu0
    %v3088 = vadd.f32 %v2964, %v3087
    %v3089 = vpop.f32.mrb[0].mxu0
    %v3090 = vadd.f32 %v2968, %v3089
    %3091 = vdwg.mxu0
    %v3092 = vmul.f32 %v3084, 0.5
    %v3093 = vmul.f32 %v3086, 0.5
    %v3094 = vmul.f32 %v3088, 0.5
    %v3095 = vmul.f32 %v3090, 0.5
    %v3096 = vmul.f32 %v3084, 0.044715
    %v3097 = vmul.f32 %v3086, 0.044715
    %v3098 = vmul.f32 %v3088, 0.044715
    %v3099 = vmul.f32 %v3090, 0.044715
    %v3100 = vmul.f32 %v3096, %v3084
    %v3101 = vmul.f32 %v3097, %v3086
    %v3102 = vmul.f32 %v3098, %v3088
    %v3103 = vmul.f32 %v3099, %v3090
    %v3104 = vmul.f32 %v3100, %v3084
    %v3105 = vmul.f32 %v3101, %v3086
    %v3106 = vmul.f32 %v3102, %v3088
    %v3107 = vmul.f32 %v3103, %v3090
    %v3108 = vadd.f32 %v3084, %v3104
    %v3109 = vadd.f32 %v3086, %v3105
    %v3110 = vadd.f32 %v3088, %v3106
    %v3111 = vadd.f32 %v3090, %v3107
    %v3112 = vmul.f32 %v3108, 0.7978846
    %v3113 = vmul.f32 %v3109, 0.7978846
    %v3114 = vmul.f32 %v3110, 0.7978846
    %v3115 = vmul.f32 %v3111, 0.7978846
    %v3116 = vtanh.pop %v3112
    %v3117 = vtanh.pop %v3113
    %v3118 = vtanh.pop %v3114
    %v3119 = vtanh.pop %v3115
    %v3120 = vadd.f32 %v3116, 1.0
    %v3121 = vadd.f32 %v3117, 1.0
    %v3122 = vadd.f32 %v3118, 1.0
    %v3123 = vadd.f32 %v3119, 1.0
    %v3124 = vmul.f32 %v3092, %v3120
    %v3125 = vmul.f32 %v3093, %v3121
    %v3126 = vmul.f32 %v3094, %v3122
    %v3127 = vmul.f32 %v3095, %v3123
    %v3128 = vpack.c.bf16 %v3126, %v3124
    %v3129 = vpack.c.bf16 %v3127, %v3125
    %v3130 = vld [vmem:[#allocation11] sm:$0xf]
    %v3131 = vld [vmem:[#allocation11 + $0x4] sm:$0xf]
    %v3132 = vld [vmem:[#allocation11 + $0x8] sm:$0xf]
    %v3133 = vld [vmem:[#allocation11 + $0xc] sm:$0xf]
    %v3134 = vld [vmem:[#allocation11 + $0x10] sm:$0xf]
    %v3135 = vld [vmem:[#allocation11 + $0x14] sm:$0xf]
    %v3136 = vld [vmem:[#allocation11 + $0x18] sm:$0xf]
    %v3137 = vld [vmem:[#allocation11 + $0x1c] sm:$0xf]
    %v3138 = vld [vmem:[#allocation11 + $0x20] sm:$0xf]
    %v3139 = vld [vmem:[#allocation11 + $0x24] sm:$0xf]
    %v3140 = vld [vmem:[#allocation11 + $0x28] sm:$0xf]
    %v3141 = vld [vmem:[#allocation11 + $0x2c] sm:$0xf]
    %v3142 = vld [vmem:[#allocation11 + $0x30] sm:$0xf]
    %v3143 = vld [vmem:[#allocation11 + $0x34] sm:$0xf]
    %v3144 = vld [vmem:[#allocation11 + $0x38] sm:$0xf]
    %v3145 = vld [vmem:[#allocation11 + $0x3c] sm:$0xf]
    %v3146 = vld [vmem:[#allocation11 + $0x40] sm:$0xf]
    %v3147 = vld [vmem:[#allocation11 + $0x44] sm:$0xf]
    %v3148 = vld [vmem:[#allocation11 + $0x48] sm:$0xf]
    %v3149 = vld [vmem:[#allocation11 + $0x4c] sm:$0xf]
    %v3150 = vld [vmem:[#allocation11 + $0x50] sm:$0xf]
    %v3151 = vld [vmem:[#allocation11 + $0x54] sm:$0xf]
    %v3152 = vld [vmem:[#allocation11 + $0x58] sm:$0xf]
    %v3153 = vld [vmem:[#allocation11 + $0x5c] sm:$0xf]
    %v3154 = vld [vmem:[#allocation11 + $0x60] sm:$0xf]
    %v3155 = vld [vmem:[#allocation11 + $0x64] sm:$0xf]
    %v3156 = vld [vmem:[#allocation11 + $0x68] sm:$0xf]
    %v3157 = vld [vmem:[#allocation11 + $0x6c] sm:$0xf]
    %v3158 = vld [vmem:[#allocation11 + $0x70] sm:$0xf]
    %v3159 = vld [vmem:[#allocation11 + $0x74] sm:$0xf]
    %v3160 = vld [vmem:[#allocation11 + $0x78] sm:$0xf]
    %v3161 = vld [vmem:[#allocation11 + $0x7c] sm:$0xf]
    %v3162 = vlaneseq
    %v3163 = vshrl.u32 %v3162, 7
    %v3164 = vsub.s32 0, %v3163
    %v3165 = vrot.slane %v120, %v3164
    %v3198 = vunpack.c.l.b16 %v3130
    %v3199 = vunpack.c.l.b16 %v3131
    %v3200 = vunpack.c.l.b16 %v3132
    %v3201 = vunpack.c.l.b16 %v3133
    %v3202 = vunpack.c.l.b16 %v3134
    %v3203 = vunpack.c.l.b16 %v3135
    %v3204 = vunpack.c.l.b16 %v3136
    %v3205 = vunpack.c.l.b16 %v3137
    %v3206 = vunpack.c.l.b16 %v3138
    %v3207 = vunpack.c.l.b16 %v3139
    %v3208 = vunpack.c.l.b16 %v3140
    %v3209 = vunpack.c.l.b16 %v3141
    %v3210 = vunpack.c.l.b16 %v3142
    %v3211 = vunpack.c.l.b16 %v3143
    %v3212 = vunpack.c.l.b16 %v3144
    %v3213 = vunpack.c.l.b16 %v3145
    %v3214 = vunpack.c.l.b16 %v3146
    %v3215 = vunpack.c.l.b16 %v3147
    %v3216 = vunpack.c.l.b16 %v3148
    %v3217 = vunpack.c.l.b16 %v3149
    %v3218 = vunpack.c.l.b16 %v3150
    %v3219 = vunpack.c.l.b16 %v3151
    %v3220 = vunpack.c.l.b16 %v3152
    %v3221 = vunpack.c.l.b16 %v3153
    %v3222 = vunpack.c.l.b16 %v3154
    %v3223 = vunpack.c.l.b16 %v3155
    %v3224 = vunpack.c.l.b16 %v3156
    %v3225 = vunpack.c.l.b16 %v3157
    %v3226 = vunpack.c.l.b16 %v3158
    %v3227 = vunpack.c.l.b16 %v3159
    %v3228 = vunpack.c.l.b16 %v3160
    %v3229 = vunpack.c.l.b16 %v3161
    %v3230 = vpack.c.b16 %v3199, %v3198
    %v3231 = vpack.c.b16 %v3201, %v3200
    %v3232 = vpack.c.b16 %v3203, %v3202
    %v3233 = vpack.c.b16 %v3205, %v3204
    %v3234 = vpack.c.b16 %v3207, %v3206
    %v3235 = vpack.c.b16 %v3209, %v3208
    %v3236 = vpack.c.b16 %v3211, %v3210
    %v3237 = vpack.c.b16 %v3213, %v3212
    %v3238 = vpack.c.b16 %v3215, %v3214
    %v3239 = vpack.c.b16 %v3217, %v3216
    %v3240 = vpack.c.b16 %v3219, %v3218
    %v3241 = vpack.c.b16 %v3221, %v3220
    %v3242 = vpack.c.b16 %v3223, %v3222
    %v3243 = vpack.c.b16 %v3225, %v3224
    %v3244 = vpack.c.b16 %v3227, %v3226
    %v3245 = vpack.c.b16 %v3229, %v3228
    %3262 = vmatprep.subr.bf16.mxu0 0
    %3263 = vmatpush1.bf16.msra.mxu0 %v3230
    %3264 = vmatprep.subr.bf16.mxu0 0
    %3265 = vmatpush1.bf16.msra.mxu0 %v3231
    %3266 = vmatprep.subr.bf16.mxu0 0
    %3267 = vmatpush1.bf16.msra.mxu0 %v3232
    %3268 = vmatprep.subr.bf16.mxu0 0
    %3269 = vmatpush1.bf16.msra.mxu0 %v3233
    %3270 = vmatprep.subr.bf16.mxu0 0
    %3271 = vmatpush1.bf16.msra.mxu0 %v3234
    %3272 = vmatprep.subr.bf16.mxu0 0
    %3273 = vmatpush1.bf16.msra.mxu0 %v3235
    %3274 = vmatprep.subr.bf16.mxu0 0
    %3275 = vmatpush1.bf16.msra.mxu0 %v3236
    %3276 = vmatprep.subr.bf16.mxu0 0
    %3277 = vmatpush1.bf16.msra.mxu0 %v3237
    %3278 = vmatprep.subr.bf16.mxu0 0
    %3279 = vmatpush1.bf16.msra.mxu0 %v3238
    %3280 = vmatprep.subr.bf16.mxu0 0
    %3281 = vmatpush1.bf16.msra.mxu0 %v3239
    %3282 = vmatprep.subr.bf16.mxu0 0
    %3283 = vmatpush1.bf16.msra.mxu0 %v3240
    %3284 = vmatprep.subr.bf16.mxu0 0
    %3285 = vmatpush1.bf16.msra.mxu0 %v3241
    %3286 = vmatprep.subr.bf16.mxu0 0
    %3287 = vmatpush1.bf16.msra.mxu0 %v3242
    %3288 = vmatprep.subr.bf16.mxu0 0
    %3289 = vmatpush1.bf16.msra.mxu0 %v3243
    %3290 = vmatprep.subr.bf16.mxu0 0
    %3291 = vmatpush1.bf16.msra.mxu0 %v3244
    %3292 = vmatprep.subr.bf16.mxu0 0
    %3293 = vmatpush1.bf16.msra.mxu0 %v3245
    %3294 = vmatprep.mubr.bf16.mxu0 %v3129
    %3295 = vmatmul.mubr.bf16.gmra.mrb[0].mxu0 %v3128
    %v3296 = vpop.f32.mrb[0].mxu0
    %v3297 = vadd.f32 %v3165, %v3296
    %v3298 = vpop.f32.mrb[0].mxu0
    %v3299 = vpop.f32.mrb[0].mxu0
    %v3300 = vadd.f32 %v3165, %v3299
    %v3301 = vpop.f32.mrb[0].mxu0
    %3302 = vdwg.mxu0
    %v3303 = vadd.f32 %v2942, %v3297
    %v3304 = vadd.f32 %v2943, %v3300
    %3305 = vadd.xlane.f32.xlu0 %v3303
    %v3306 = vpop.xlane.xlu0 %3305
    %3307 = vadd.xlane.f32.xlu0 %v3304
    %v3308 = vpop.xlane.xlu0 %3307
    %v3309 = vmul.f32 %v3306, %v2913
    %v3310 = vmul.f32 %v3308, %v2913
    %v3311 = vsub.f32 %v3303, %v3309
    %v3312 = vsub.f32 %v3304, %v3310
    %v3313 = vmul.f32 %v3311, %v3311
    %v3314 = vmul.f32 %v3312, %v3312
    %3315 = vadd.xlane.f32.xlu0 %v3313
    %v3316 = vpop.xlane.xlu0 %3315
    %3317 = vadd.xlane.f32.xlu0 %v3314
    %v3318 = vpop.xlane.xlu0 %3317
    %v3319 = vmul.f32 %v3316, %v2913
    %v3320 = vmul.f32 %v3318, %v2913
    %v3321 = vadd.f32 %v3319, 1e-12
    %v3322 = vadd.f32 %v3320, 1e-12
    %v3323 = vrsqrt.pop %v3321
    %v3324 = vrsqrt.pop %v3322
    %v3325 = vmul.f32 %v3311, %v3323
    %v3326 = vmul.f32 %v3312, %v3324
    %v3327 = vlaneseq
    %v3328 = vshrl.u32 %v3327, 7
    %v3329 = vsub.s32 1, %v3328
    %v3330 = vrot.slane %v120, %v3329
    %v3331 = vmul.f32 %v3325, %v3330
    %v3332 = vmul.f32 %v3326, %v3330
    %v3333 = vlaneseq
    %v3334 = vshrl.u32 %v3333, 7
    %v3335 = vsub.s32 2, %v3334
    %v3336 = vrot.slane %v120, %v3335
    %v3337 = vadd.f32 %v3331, %v3336
    %v3338 = vadd.f32 %v3332, %v3336
    %3339 = vst [vmem:[#allocation16] sm:$0xff] %v3337
    %3340 = vst [vmem:[#allocation16 + $0x8] sm:$0xff] %v3338
    %v3341 = vpack.c.bf16 %v3338, %v3337
    %v3342 = vld [vmem:[#allocation10 + $0x18] sm:$0xf]
    %v3343 = vld [vmem:[#allocation10 + $0x34] sm:$0xf]
    %v3344 = vld [vmem:[#allocation10 + $0x50] sm:$0xf]
    %v3345 = vld [vmem:[#allocation10 + $0x6c] sm:$0xf]
    %v3346 = vld [vmem:[#allocation10 + $0x88] sm:$0xf]
    %v3347 = vld [vmem:[#allocation10 + $0xa4] sm:$0xf]
    %v3348 = vld [vmem:[#allocation10 + $0xc0] sm:$0xf]
    %v3349 = vld [vmem:[#allocation10 + $0xdc] sm:$0xf]
    %v3350 = vld [vmem:[#allocation10 + $0xf8] sm:$0xf]
    %v3351 = vld [vmem:[#allocation10 + $0x114] sm:$0xf]
    %v3352 = vld [vmem:[#allocation10 + $0x130] sm:$0xf]
    %v3353 = vld [vmem:[#allocation10 + $0x14c] sm:$0xf]
    %v3354 = vld [vmem:[#allocation10 + $0x168] sm:$0xf]
    %v3355 = vld [vmem:[#allocation10 + $0x184] sm:$0xf]
    %v3356 = vld [vmem:[#allocation10 + $0x1a0] sm:$0xf]
    %v3357 = vld [vmem:[#allocation10 + $0x1bc] sm:$0xf]
    %v3358 = vlaneseq
    %v3359 = vshrl.u32 %v3358, 7
    %v3360 = vsub.s32 3, %v3359
    %v3361 = vrot.slane %v120, %v3360
    %v3378 = vunpack.c.l.b16 %v3342
    %v3379 = vunpack.c.l.b16 %v3343
    %v3380 = vunpack.c.l.b16 %v3344
    %v3381 = vunpack.c.l.b16 %v3345
    %v3382 = vunpack.c.l.b16 %v3346
    %v3383 = vunpack.c.l.b16 %v3347
    %v3384 = vunpack.c.l.b16 %v3348
    %v3385 = vunpack.c.l.b16 %v3349
    %v3386 = vunpack.c.l.b16 %v3350
    %v3387 = vunpack.c.l.b16 %v3351
    %v3388 = vunpack.c.l.b16 %v3352
    %v3389 = vunpack.c.l.b16 %v3353
    %v3390 = vunpack.c.l.b16 %v3354
    %v3391 = vunpack.c.l.b16 %v3355
    %v3392 = vunpack.c.l.b16 %v3356
    %v3393 = vunpack.c.l.b16 %v3357
    %v3394 = vpack.c.b16 %v3379, %v3378
    %v3395 = vpack.c.b16 %v3381, %v3380
    %v3396 = vpack.c.b16 %v3383, %v3382
    %v3397 = vpack.c.b16 %v3385, %v3384
    %v3398 = vpack.c.b16 %v3387, %v3386
    %v3399 = vpack.c.b16 %v3389, %v3388
    %v3400 = vpack.c.b16 %v3391, %v3390
    %v3401 = vpack.c.b16 %v3393, %v3392
    %3410 = vmatprep.subr.bf16.mxu0 0
    %3411 = vmatpush1.bf16.msra.mxu0 %v3394
    %3412 = vmatprep.subr.bf16.mxu0 0
    %3413 = vmatpush1.bf16.msra.mxu0 %v3395
    %3414 = vmatprep.subr.bf16.mxu0 0
    %3415 = vmatpush1.bf16.msra.mxu0 %v3396
    %3416 = vmatprep.subr.bf16.mxu0 0
    %3417 = vmatpush1.bf16.msra.mxu0 %v3397
    %3418 = vmatprep.subr.bf16.mxu0 0
    %3419 = vmatpush1.bf16.msra.mxu0 %v3398
    %3420 = vmatprep.subr.bf16.mxu0 0
    %3421 = vmatpush1.bf16.msra.mxu0 %v3399
    %3422 = vmatprep.subr.bf16.mxu0 0
    %3423 = vmatpush1.bf16.msra.mxu0 %v3400
    %3424 = vmatprep.subr.bf16.mxu0 0
    %3425 = vmatpush1.bf16.msra.mxu0 %v3401
    %3426 = vmatprep.subr.bf16.mxu0 0
    %3427 = vmatpush1.bf16.msra.mxu0 0
    %3428 = vmatprep.subr.bf16.mxu0 0
    %3429 = vmatpush1.bf16.msra.mxu0 0
    %3430 = vmatprep.subr.bf16.mxu0 0
    %3431 = vmatpush1.bf16.msra.mxu0 0
    %3432 = vmatprep.subr.bf16.mxu0 0
    %3433 = vmatpush1.bf16.msra.mxu0 0
    %3434 = vmatprep.subr.bf16.mxu0 0
    %3435 = vmatpush1.bf16.msra.mxu0 0
    %3436 = vmatprep.subr.bf16.mxu0 0
    %3437 = vmatpush1.bf16.msra.mxu0 0
    %3438 = vmatprep.subr.bf16.mxu0 0
    %3439 = vmatpush1.bf16.msra.mxu0 0
    %3440 = vmatprep.subr.bf16.mxu0 0
    %3441 = vmatpush1.bf16.msra.mxu0 0
    %3442 = vmatprep.mubr.bf16.mxu0 0
    %3443 = vmatmul.mubr.bf16.gmra.mrb[0].mxu0 %v3341
    %v3444 = vpop.f32.mrb[0].mxu0
    %v3445 = vadd.f32 %v3361, %v3444
    %v3446 = vpop.f32.mrb[0].mxu0
    %v3447 = vpop.f32.mrb[0].mxu0
    %v3448 = vadd.f32 %v3361, %v3447
    %v3449 = vpop.f32.mrb[0].mxu0
    %3450 = vdwg.mxu0
    %3451 = vst [vmem:[#allocation14] sm:$0xff] %v3445
    %3452 = vst [vmem:[#allocation14 + $0x8] sm:$0xff] %v3448
    // Predicated region
    $region58: #{sancd_forward.1} parent=1 // pred_check
      _
    $region59: #{sancd_forward.1} parent=1 // pred_check_branch
      %3454 = sbr.rel (0) target = $region61
    $region60: #{sancd_forward.1} parent=1 // pred_region
      %s3456 = ssub.s32 256, 256
      %3457 = vsyncadd [#allocation4], %s3456
      %s3458 = sshll.u32 [#allocation13], 4
      %s3459 = int_to_ptr.vmem [resolvable:$true] %s3458
      %3464 = dma.vmem_to_hbm [thread:$0]  %s3459, 256, %s8, [#allocation4], 128, 128, 8
    $region61: #{sancd_forward.1} parent=1 // pred_fallthru
      _
    // Predicated region
    $region62: #{sancd_forward.1} parent=1 // pred_check
      _
    $region63: #{sancd_forward.1} parent=1 // pred_check_branch
      %3466 = sbr.rel (0) target = $region65
    $region64: #{sancd_forward.1} parent=1 // pred_region
      %s3468 = ssub.s32 256, 256
      %3469 = vsyncadd [#allocation15], %s3468
      %s3470 = sshll.u32 [#allocation14], 4
      %s3471 = int_to_ptr.vmem [resolvable:$true] %s3470
      %3476 = dma.vmem_to_hbm [thread:$0]  %s3471, 256, %s9, [#allocation15], 128, 128, 8
    $region65: #{sancd_forward.1} parent=1 // pred_fallthru
      _
    // Predicated region
    $region66: #{sancd_forward.1} parent=1 // pred_check
      _
    $region67: #{sancd_forward.1} parent=1 // pred_check_branch
      %3478 = sbr.rel (0) target = $region69
    $region68: #{sancd_forward.1} parent=1 // pred_region
      %s3480 = ssub.s32 256, 256
      %3481 = vsyncadd [#allocation15], %s3480
      %s3482 = sshll.u32 [#allocation16], 4
      %s3483 = int_to_ptr.vmem [resolvable:$true] %s3482
      %3488 = dma.vmem_to_hbm [thread:$0]  %s3483, 256, %s10, [#allocation15], 128, 128, 8
    $region69: #{sancd_forward.1} parent=1 // pred_fallthru
      _
    // Predicated region
    $region70: #{sancd_forward.1} parent=1 // pred_check
      _
    $region71: #{sancd_forward.1} parent=1 // pred_check_branch
      %3490 = sbr.rel (0) target = $region73
    $region72: #{sancd_forward.1} parent=1 // pred_region
      %3491 = dma.done [#allocation4], 256
    $region73: #{sancd_forward.1} parent=1 // pred_fallthru
      _
    // Predicated region
    $region74: #{sancd_forward.1} parent=1 // pred_check
      _
    $region75: #{sancd_forward.1} parent=1 // pred_check_branch
      %3493 = sbr.rel (0) target = $region77
    $region76: #{sancd_forward.1} parent=1 // pred_region
      %3494 = dma.done [#allocation15], 256
    $region77: #{sancd_forward.1} parent=1 // pred_fallthru
      _
    // Predicated region
    $region78: #{sancd_forward.1} parent=1 // pred_check
      _
    $region79: #{sancd_forward.1} parent=1 // pred_check_branch
      %3496 = sbr.rel (0) target = $region81
    $region80: #{sancd_forward.1} parent=1 // pred_region
      %3497 = dma.done [#allocation15], 256
    $region81: #{sancd_forward.1} parent=1 // pred_fallthru
      _
    %3498 = vsyncpa [#allocation3], 1
    %3499 = vsyncpa [#allocation6], 1
    %3500 = vsyncpa [#allocation9], 1
    %3501 = vsyncpa [#allocation12], 1
    %3502 = vsyncpa [#allocation4], 1
    %3503 = vsyncpa [#allocation15], 1

</llo_original>
